<compile_context>
chip_gen: v5e
topology: v5e:2x2
jax: 0.10.0
libtpu: 0.0.40
codegen_flags: <defaults>
</compile_context>

<pallas_src>
import functools

import jax
import jax.numpy as jnp
from jax.experimental import pallas as pl
from jax.experimental.pallas import tpu as pltpu


_N_TILE_MAX = 2048   # max point rows per grid step (chunked conv3 keeps the
                     # live f32 slab at n_tile x 256 x 4 B = 2 MB at 2048)
_C_CHUNK = 256       # conv3 output-channel chunk (multiple of 128 lanes)


def _round_up(x, m):
    return ((x + m - 1) // m) * m


def _tnet_kernel(x_ref, w1_ref, t1_ref, w2_ref, t2_ref, w3_ref, t3_ref,
                 wf1_ref, t4_ref, wf2_ref, t5_ref, wf3_ref, t6_ref,
                 out_ref, acc_ref, *, n_points):
    """conv1..conv3 on one N tile + running max; fused fc head at the end."""
    n = pl.program_id(1)
    last = pl.num_programs(1) - 1
    n_tile = x_ref.shape[1]

    @pl.when(n == 0)
    def _init():
        acc_ref[...] = jnp.full(acc_ref.shape, -jnp.inf, dtype=acc_ref.dtype)

    x = x_ref[0].astype(jnp.float32)                         # (n_tile, k)

    # conv1 + bn1 + relu: K = k is tiny (3/4) -> k unrolled rank-1 VPU updates.
    w1 = w1_ref[...].astype(jnp.float32)                     # (k, 64)
    h = jnp.zeros((n_tile, w1.shape[1]), jnp.float32)
    for j in range(w1.shape[0]):                             # static, tiny
        h = h + x[:, j:j + 1] * w1[j:j + 1, :]
    h = jnp.maximum(h + t1_ref[...], 0.0).astype(jnp.bfloat16)

    # conv2 + bn2 + relu -> (n_tile, 128) bf16
    h = jnp.dot(h, w2_ref[...], preferred_element_type=jnp.float32)
    h = jnp.maximum(h + t2_ref[...], 0.0).astype(jnp.bfloat16)

    # conv3 + running column-max, chunked over output channels so the live
    # f32 intermediate is only (n_tile, _C_CHUNK).
    def conv3_max(valid_mask):
        for c in range(w3_ref.shape[1] // _C_CHUNK):
            sl = slice(c * _C_CHUNK, (c + 1) * _C_CHUNK)
            hc = jnp.dot(h, w3_ref[:, sl], preferred_element_type=jnp.float32)
            if valid_mask is not None:
                hc = jnp.where(valid_mask, hc, -jnp.inf)
            acc_ref[:, sl] = jnp.maximum(
                acc_ref[:, sl], jnp.max(hc, axis=0, keepdims=True))

    if n_points % n_tile != 0:
        # Only the last tile contains padded rows: gate the -inf masking so
        # full tiles take an unmasked fast path.
        @pl.when(n != last)
        def _full_tile():
            conv3_max(None)

        @pl.when(n == last)
        def _partial_tile():
            row = n * n_tile + jax.lax.broadcasted_iota(
                jnp.int32, (n_tile, 1), 0)
            conv3_max(row < n_points)
    else:
        conv3_max(None)

    # Fused fc1/fc2/fc3 head (+ folded BN, bias, identity), once per b.
    # (bn3 shift t3 is added after the max in f32, then cast to bf16 -- same
    # as the reference path.)
    @pl.when(n == last)
    def _finalize():
        g = (acc_ref[...] + t3_ref[...]).astype(jnp.bfloat16)       # (1,1024)
        f = jnp.dot(g, wf1_ref[...], preferred_element_type=jnp.float32)
        f = jnp.maximum(f + t4_ref[...], 0.0).astype(jnp.bfloat16)
        f = jnp.dot(f, wf2_ref[...], preferred_element_type=jnp.float32)
        f = jnp.maximum(f + t5_ref[...], 0.0).astype(jnp.bfloat16)
        out_ref[0] = (jnp.dot(f, wf3_ref[...],
                              preferred_element_type=jnp.float32)
                      + t6_ref[...])


def _const(shape):
    """BlockSpec covering the whole array, constant across the 2-D grid."""
    zeros = (0,) * len(shape)
    return pl.BlockSpec(shape, lambda b, n: zeros)


@functools.partial(jax.jit, static_argnames=("k",))
def tnet_forward(x_bkn, params, k):
    """x_bkn: (B, k, N) float32 (PyTorch NCW layout).  Returns (B, k, k)."""
    B, k_in, N = x_bkn.shape
    assert k_in == k
    kk = k * k
    (w1, t1, w2, t2, w3, t3, wf1, t4, wf2, t5, wf3, t6) = params

    # Balanced point tiling: roughly equal tiles, multiple of 16 (bf16
    # sublane packing), capped at _N_TILE_MAX.
    n_splits = pl.cdiv(N, _N_TILE_MAX)
    n_tile = _round_up(pl.cdiv(N, n_splits), 16)
    n_steps = pl.cdiv(N, n_tile)
    n_pad = n_steps * n_tile

    # Channels on the lane axis, points tiled along sublanes.  Pad N to a
    # whole number of tiles (padded rows are masked to -inf inside the kernel).
    x = jnp.transpose(x_bkn, (0, 2, 1)).astype(jnp.bfloat16)        # (B, N, k)
    if n_pad != N:
        x = jnp.pad(x, ((0, 0), (0, n_pad - N), (0, 0)))

    flops = 2 * B * (n_pad * (k * 64 + 64 * 128 + 128 * 1024)
                     + 1024 * 512 + 512 * 256 + 256 * kk)
    bytes_accessed = (B * n_pad * k * 2
                      + 2 * (w1.size + w2.size + w3.size
                             + wf1.size + wf2.size + wf3.size)
                      + 4 * (t1.size + t2.size + t3.size
                             + t4.size + t5.size + t6.size)
                      + B * kk * 4)

    out = pl.pallas_call(
        functools.partial(_tnet_kernel, n_points=N),
        out_shape=jax.ShapeDtypeStruct((B, 1, kk), jnp.float32),
        grid=(B, n_steps),
        in_specs=[
            pl.BlockSpec((1, n_tile, k), lambda b, n: (b, n, 0)),
            _const(w1.shape), _const(t1.shape),
            _const(w2.shape), _const(t2.shape),
            _const(w3.shape), _const(t3.shape),
            _const(wf1.shape), _const(t4.shape),
            _const(wf2.shape), _const(t5.shape),
            _const(wf3.shape), _const(t6.shape),
        ],
        out_specs=pl.BlockSpec((1, 1, kk), lambda b, n: (b, 0, 0)),
        scratch_shapes=[pltpu.VMEM((1, 1024), jnp.float32)],
        compiler_params=pltpu.CompilerParams(
            dimension_semantics=("parallel", "arbitrary"),
            vmem_limit_bytes=64 * 1024 * 1024),
        cost_estimate=pl.CostEstimate(flops=flops, transcendentals=0,
                                      bytes_accessed=bytes_accessed),
    )(x, w1, t1, w2, t2, w3, t3, wf1, t4, wf2, t5, wf3, t6)

    return out.reshape(B, k, k)


def make_params(key, k):
    """Synthetic weights matching the PyTorch module, BN pre-folded (eval)."""
    keys = iter(jax.random.split(key, 40))

    def nrm(shape, scale=0.05):
        return scale * jax.random.normal(next(keys), shape, dtype=jnp.float32)

    def bn(c):
        gamma = 1.0 + 0.1 * jax.random.normal(next(keys), (c,), jnp.float32)
        beta = 0.1 * jax.random.normal(next(keys), (c,), jnp.float32)
        mean = 0.05 * jax.random.normal(next(keys), (c,), jnp.float32)
        var = 0.5 + jax.random.uniform(next(keys), (c,), jnp.float32)
        return gamma, beta, mean, var

    def fold(w, b, stats, eps=1e-5):
        # Fold eval-mode BN scale into the weight columns (f32, before the
        # bf16 cast to avoid double rounding); bias+BN shift -> per-chan shift.
        gamma, beta, mean, var = stats
        scale = gamma * jax.lax.rsqrt(var + eps)
        w_f = (w * scale[None, :]).astype(jnp.bfloat16)
        t = ((b - mean) * scale + beta)[None, :].astype(jnp.float32)
        return w_f, t

    w1, t1 = fold(nrm((k, 64)), nrm((64,)), bn(64))          # conv1 + bn1
    w2, t2 = fold(nrm((64, 128)), nrm((128,)), bn(128))      # conv2 + bn2
    w3, t3 = fold(nrm((128, 1024)), nrm((1024,)), bn(1024))  # conv3 + bn3
    wf1, t4 = fold(nrm((1024, 512)), nrm((512,)), bn(512))   # fc1 + bn4
    wf2, t5 = fold(nrm((512, 256)), nrm((256,)), bn(256))    # fc2 + bn5
    wf3 = nrm((256, k * k)).astype(jnp.bfloat16)              # fc3
    t6 = (nrm((k * k,)) + jnp.eye(k, dtype=jnp.float32).reshape(-1))[None, :]

    return (w1, t1, w2, t2, w3, t3, wf1, t4, wf2, t5, wf3, t6)


def tnet_reference(x_bkn, params, k):
    """Pure-JAX reference with identical folded-parameter / bf16 math."""
    (w1, t1, w2, t2, w3, t3, wf1, t4, wf2, t5, wf3, t6) = params
    x = jnp.transpose(x_bkn, (0, 2, 1)).astype(jnp.bfloat16)        # (B, N, k)
    h = jnp.einsum("bnc,cd->bnd", x, w1, preferred_element_type=jnp.float32)
    h = jnp.maximum(h + t1, 0.0).astype(jnp.bfloat16)
    h = jnp.einsum("bnc,cd->bnd", h, w2, preferred_element_type=jnp.float32)
    h = jnp.maximum(h + t2, 0.0).astype(jnp.bfloat16)
    h = jnp.einsum("bnc,cd->bnd", h, w3, preferred_element_type=jnp.float32)
    g = (jnp.max(h, axis=1) + t3).astype(jnp.bfloat16)              # (B, 1024)
    f = jnp.dot(g, wf1, preferred_element_type=jnp.float32)
    f = jnp.maximum(f + t4, 0.0).astype(jnp.bfloat16)
    f = jnp.dot(f, wf2, preferred_element_type=jnp.float32)
    f = jnp.maximum(f + t5, 0.0).astype(jnp.bfloat16)
    out = jnp.dot(f, wf3, preferred_element_type=jnp.float32) + t6
    return out.reshape(-1, k, k)


if __name__ == "__main__":
    key = jax.random.PRNGKey(0)
    kx1, kx2, kp1, kp2 = jax.random.split(key, 4)

    # Small config: batch=2, k=4 coordinate channels, 16 points (NCW layout).
    B, k, N = 2, 4, 16
    x = jax.random.normal(kx1, (B, k, N), dtype=jnp.float32)
    params = make_params(kp1, k)
    out = jax.block_until_ready(tnet_forward(x, params, k))
    ref = tnet_reference(x, params, k)
    assert out.shape == (B, k, k)
    assert jnp.allclose(out, ref, atol=1e-2, rtol=1e-2), "mismatch (small cfg)"

    # Second config exercising the tiled point axis: 2 balanced N steps with a
    # padded/masked last tile (N=2500 -> 2 x 1264), k=3.
    B2, k2, N2 = 2, 3, 2500
    x2 = jax.random.normal(kx2, (B2, k2, N2), dtype=jnp.float32)
    params2 = make_params(kp2, k2)
    out2 = jax.block_until_ready(tnet_forward(x2, params2, k2))
    ref2 = tnet_reference(x2, params2, k2)
    assert out2.shape == (B2, k2, k2)
    assert jnp.allclose(out2, ref2, atol=1e-2, rtol=1e-2), "mismatch (tiled cfg)"

    print("KERNEL_OK")
</pallas_src>

<mosaic_0001>
module attributes {stable_mosaic.version = 11 : i64} {
  func.func @_tnet_kernel(%arg0: i32, %arg1: i32, %arg2: memref<1x16x4xbf16, #tpu.memory_space<vmem>>, %arg3: memref<4x64xbf16, #tpu.memory_space<vmem>>, %arg4: memref<1x64xf32, #tpu.memory_space<vmem>>, %arg5: memref<64x128xbf16, #tpu.memory_space<vmem>>, %arg6: memref<1x128xf32, #tpu.memory_space<vmem>>, %arg7: memref<128x1024xbf16, #tpu.memory_space<vmem>>, %arg8: memref<1x1024xf32, #tpu.memory_space<vmem>>, %arg9: memref<1024x512xbf16, #tpu.memory_space<vmem>>, %arg10: memref<1x512xf32, #tpu.memory_space<vmem>>, %arg11: memref<512x256xbf16, #tpu.memory_space<vmem>>, %arg12: memref<1x256xf32, #tpu.memory_space<vmem>>, %arg13: memref<256x16xbf16, #tpu.memory_space<vmem>>, %arg14: memref<1x16xf32, #tpu.memory_space<vmem>>, %arg15: memref<1x1x16xf32, #tpu.memory_space<vmem>>, %arg16: memref<1x1024xf32, #tpu.memory_space<vmem>>) attributes {dimension_semantics = [#tpu.dimension_semantics<parallel>, #tpu.dimension_semantics<arbitrary>], iteration_bounds = array<i64: 2, 1>, scalar_prefetch = 0 : i64, scratch_operands = 1 : i64, tpu.core_type = #tpu.core_type<tc>, window_params = [{transform_indices = @transform_0, window_bounds = array<i64: 1, 16, 4>}, {pipeline_mode = #tpu.pipeline_mode<synchronous>, transform_indices = @transform_1, window_bounds = array<i64: 4, 64>}, {pipeline_mode = #tpu.pipeline_mode<synchronous>, transform_indices = @transform_2, window_bounds = array<i64: 1, 64>}, {pipeline_mode = #tpu.pipeline_mode<synchronous>, transform_indices = @transform_3, window_bounds = array<i64: 64, 128>}, {pipeline_mode = #tpu.pipeline_mode<synchronous>, transform_indices = @transform_4, window_bounds = array<i64: 1, 128>}, {pipeline_mode = #tpu.pipeline_mode<synchronous>, transform_indices = @transform_5, window_bounds = array<i64: 128, 1024>}, {pipeline_mode = #tpu.pipeline_mode<synchronous>, transform_indices = @transform_6, window_bounds = array<i64: 1, 1024>}, {pipeline_mode = #tpu.pipeline_mode<synchronous>, transform_indices = @transform_7, window_bounds = array<i64: 1024, 512>}, {pipeline_mode = #tpu.pipeline_mode<synchronous>, transform_indices = @transform_8, window_bounds = array<i64: 1, 512>}, {pipeline_mode = #tpu.pipeline_mode<synchronous>, transform_indices = @transform_9, window_bounds = array<i64: 512, 256>}, {pipeline_mode = #tpu.pipeline_mode<synchronous>, transform_indices = @transform_10, window_bounds = array<i64: 1, 256>}, {pipeline_mode = #tpu.pipeline_mode<synchronous>, transform_indices = @transform_11, window_bounds = array<i64: 256, 16>}, {pipeline_mode = #tpu.pipeline_mode<synchronous>, transform_indices = @transform_12, window_bounds = array<i64: 1, 16>}, {transform_indices = @transform_13, window_bounds = array<i64: 1, 1, 16>}]} {
    %c0_i32 = arith.constant 0 : i32
    %0 = arith.cmpi eq, %arg1, %c0_i32 : i32
    %1 = arith.extui %0 : i1 to i32
    %c0_i32_0 = arith.constant 0 : i32
    %2 = arith.cmpi ne, %1, %c0_i32_0 : i32
    scf.if %2 {
      %cst_45 = arith.constant 0xFF800000 : f32
      %78 = vector.broadcast %cst_45 : f32 to vector<1x1024xf32>
      %c0_46 = arith.constant 0 : index
      %c0_47 = arith.constant 0 : index
      %79 = vector.load %arg16[%c0_46, %c0_47] : memref<1x1024xf32, #tpu.memory_space<vmem>>, vector<1x1024xf32>
      tpu.vector_store %arg16[%c0_46, %c0_47], %78 {strides = array<i32>} : memref<1x1024xf32, #tpu.memory_space<vmem>>, vector<1x1024xf32>,
    } else {
    }
    %c0 = arith.constant 0 : index
    %c0_1 = arith.constant 0 : index
    %c0_2 = arith.constant 0 : index
    %3 = vector.load %arg2[%c0, %c0_1, %c0_2] : memref<1x16x4xbf16, #tpu.memory_space<vmem>>, vector<1x16x4xbf16>
    %4 = vector.shape_cast %3 : vector<1x16x4xbf16> to vector<16x4xbf16>
    %5 = arith.extf %4 : vector<16x4xbf16> to vector<16x4xf32>
    %c0_3 = arith.constant 0 : index
    %c0_4 = arith.constant 0 : index
    %6 = vector.load %arg3[%c0_3, %c0_4] : memref<4x64xbf16, #tpu.memory_space<vmem>>, vector<4x64xbf16>
    %7 = arith.extf %6 : vector<4x64xbf16> to vector<4x64xf32>
    %cst = arith.constant 0.000000e+00 : f32
    %8 = vector.broadcast %cst : f32 to vector<16x64xf32>
    %9 = vector.extract_strided_slice %5 {offsets = [0, 0], sizes = [16, 1], strides = [1, 1]} : vector<16x4xf32> to vector<16x1xf32>
    %10 = vector.extract_strided_slice %7 {offsets = [0, 0], sizes = [1, 64], strides = [1, 1]} : vector<4x64xf32> to vector<1x64xf32>
    %11 = vector.broadcast %9 : vector<16x1xf32> to vector<16x64xf32>
    %12 = vector.broadcast %10 : vector<1x64xf32> to vector<16x64xf32>
    %13 = arith.mulf %11, %12 : vector<16x64xf32>
    %14 = arith.addf %8, %13 : vector<16x64xf32>
    %15 = vector.extract_strided_slice %5 {offsets = [0, 1], sizes = [16, 1], strides = [1, 1]} : vector<16x4xf32> to vector<16x1xf32>
    %16 = vector.extract_strided_slice %7 {offsets = [1, 0], sizes = [1, 64], strides = [1, 1]} : vector<4x64xf32> to vector<1x64xf32>
    %17 = vector.broadcast %15 : vector<16x1xf32> to vector<16x64xf32>
    %18 = vector.broadcast %16 : vector<1x64xf32> to vector<16x64xf32>
    %19 = arith.mulf %17, %18 : vector<16x64xf32>
    %20 = arith.addf %14, %19 : vector<16x64xf32>
    %21 = vector.extract_strided_slice %5 {offsets = [0, 2], sizes = [16, 1], strides = [1, 1]} : vector<16x4xf32> to vector<16x1xf32>
    %22 = vector.extract_strided_slice %7 {offsets = [2, 0], sizes = [1, 64], strides = [1, 1]} : vector<4x64xf32> to vector<1x64xf32>
    %23 = vector.broadcast %21 : vector<16x1xf32> to vector<16x64xf32>
    %24 = vector.broadcast %22 : vector<1x64xf32> to vector<16x64xf32>
    %25 = arith.mulf %23, %24 : vector<16x64xf32>
    %26 = arith.addf %20, %25 : vector<16x64xf32>
    %27 = vector.extract_strided_slice %5 {offsets = [0, 3], sizes = [16, 1], strides = [1, 1]} : vector<16x4xf32> to vector<16x1xf32>
    %28 = vector.extract_strided_slice %7 {offsets = [3, 0], sizes = [1, 64], strides = [1, 1]} : vector<4x64xf32> to vector<1x64xf32>
    %29 = vector.broadcast %27 : vector<16x1xf32> to vector<16x64xf32>
    %30 = vector.broadcast %28 : vector<1x64xf32> to vector<16x64xf32>
    %31 = arith.mulf %29, %30 : vector<16x64xf32>
    %32 = arith.addf %26, %31 : vector<16x64xf32>
    %c0_5 = arith.constant 0 : index
    %c0_6 = arith.constant 0 : index
    %33 = vector.load %arg4[%c0_5, %c0_6] : memref<1x64xf32, #tpu.memory_space<vmem>>, vector<1x64xf32>
    %34 = vector.broadcast %33 : vector<1x64xf32> to vector<16x64xf32>
    %35 = arith.addf %32, %34 : vector<16x64xf32>
    %cst_7 = arith.constant 0.000000e+00 : f32
    %36 = vector.broadcast %cst_7 : f32 to vector<16x64xf32>
    %37 = arith.maximumf %35, %36 : vector<16x64xf32>
    %38 = arith.truncf %37 : vector<16x64xf32> to vector<16x64xbf16>
    %c0_8 = arith.constant 0 : index
    %c0_9 = arith.constant 0 : index
    %39 = vector.load %arg5[%c0_8, %c0_9] : memref<64x128xbf16, #tpu.memory_space<vmem>>, vector<64x128xbf16>
    %cst_10 = arith.constant dense<0.000000e+00> : vector<16x128xf32>
    %40 = tpu.matmul %38, %39, %cst_10 {dimension_numbers = #tpu.dot_dimension_numbers<[1], [0], [0], [1], [0, 0, 1, 1], [], []>} : vector<16x64xbf16>, vector<64x128xbf16>, vector<16x128xf32> -> vector<16x128xf32>
    %c0_11 = arith.constant 0 : index
    %c0_12 = arith.constant 0 : index
    %41 = vector.load %arg6[%c0_11, %c0_12] : memref<1x128xf32, #tpu.memory_space<vmem>>, vector<1x128xf32>
    %42 = vector.broadcast %41 : vector<1x128xf32> to vector<16x128xf32>
    %43 = arith.addf %40, %42 : vector<16x128xf32>
    %cst_13 = arith.constant 0.000000e+00 : f32
    %44 = vector.broadcast %cst_13 : f32 to vector<16x128xf32>
    %45 = arith.maximumf %43, %44 : vector<16x128xf32>
    %46 = arith.truncf %45 : vector<16x128xf32> to vector<16x128xbf16>
    %c0_14 = arith.constant 0 : index
    %c0_15 = arith.constant 0 : index
    %47 = vector.load %arg7[%c0_14, %c0_15] : memref<128x1024xbf16, #tpu.memory_space<vmem>>, vector<128x256xbf16>
    %cst_16 = arith.constant dense<0.000000e+00> : vector<16x256xf32>
    %48 = tpu.matmul %46, %47, %cst_16 {dimension_numbers = #tpu.dot_dimension_numbers<[1], [0], [0], [1], [0, 0, 1, 1], [], []>} : vector<16x128xbf16>, vector<128x256xbf16>, vector<16x256xf32> -> vector<16x256xf32>
    %c0_17 = arith.constant 0 : index
    %c0_18 = arith.constant 0 : index
    %49 = vector.load %arg16[%c0_17, %c0_18] : memref<1x1024xf32, #tpu.memory_space<vmem>>, vector<1x256xf32>
    %cst_19 = arith.constant dense<0xFF800000> : vector<256xf32>
    %50 = vector.multi_reduction <maximumf>, %48, %cst_19 [0] : vector<16x256xf32> to vector<256xf32>
    %51 = vector.shape_cast %50 : vector<256xf32> to vector<1x256xf32>
    %52 = arith.maximumf %49, %51 : vector<1x256xf32>
    %c0_20 = arith.constant 0 : index
    %c0_21 = arith.constant 0 : index
    %53 = vector.load %arg16[%c0_20, %c0_21] : memref<1x1024xf32, #tpu.memory_space<vmem>>, vector<1x256xf32>
    tpu.vector_store %arg16[%c0_20, %c0_21], %52 {strides = array<i32>} : memref<1x1024xf32, #tpu.memory_space<vmem>>, vector<1x256xf32>,
    %c0_22 = arith.constant 0 : index
    %c256 = arith.constant 256 : index
    %54 = vector.load %arg7[%c0_22, %c256] : memref<128x1024xbf16, #tpu.memory_space<vmem>>, vector<128x256xbf16>
    %cst_23 = arith.constant dense<0.000000e+00> : vector<16x256xf32>
    %55 = tpu.matmul %46, %54, %cst_23 {dimension_numbers = #tpu.dot_dimension_numbers<[1], [0], [0], [1], [0, 0, 1, 1], [], []>} : vector<16x128xbf16>, vector<128x256xbf16>, vector<16x256xf32> -> vector<16x256xf32>
    %c0_24 = arith.constant 0 : index
    %c256_25 = arith.constant 256 : index
    %56 = vector.load %arg16[%c0_24, %c256_25] : memref<1x1024xf32, #tpu.memory_space<vmem>>, vector<1x256xf32>
    %cst_26 = arith.constant dense<0xFF800000> : vector<256xf32>
    %57 = vector.multi_reduction <maximumf>, %55, %cst_26 [0] : vector<16x256xf32> to vector<256xf32>
    %58 = vector.shape_cast %57 : vector<256xf32> to vector<1x256xf32>
    %59 = arith.maximumf %56, %58 : vector<1x256xf32>
    %c0_27 = arith.constant 0 : index
    %c256_28 = arith.constant 256 : index
    %60 = vector.load %arg16[%c0_27, %c256_28] : memref<1x1024xf32, #tpu.memory_space<vmem>>, vector<1x256xf32>
    tpu.vector_store %arg16[%c0_27, %c256_28], %59 {strides = array<i32>} : memref<1x1024xf32, #tpu.memory_space<vmem>>, vector<1x256xf32>,
    %c0_29 = arith.constant 0 : index
    %c512 = arith.constant 512 : index
    %61 = vector.load %arg7[%c0_29, %c512] : memref<128x1024xbf16, #tpu.memory_space<vmem>>, vector<128x256xbf16>
    %cst_30 = arith.constant dense<0.000000e+00> : vector<16x256xf32>
    %62 = tpu.matmul %46, %61, %cst_30 {dimension_numbers = #tpu.dot_dimension_numbers<[1], [0], [0], [1], [0, 0, 1, 1], [], []>} : vector<16x128xbf16>, vector<128x256xbf16>, vector<16x256xf32> -> vector<16x256xf32>
    %c0_31 = arith.constant 0 : index
    %c512_32 = arith.constant 512 : index
    %63 = vector.load %arg16[%c0_31, %c512_32] : memref<1x1024xf32, #tpu.memory_space<vmem>>, vector<1x256xf32>
    %cst_33 = arith.constant dense<0xFF800000> : vector<256xf32>
    %64 = vector.multi_reduction <maximumf>, %62, %cst_33 [0] : vector<16x256xf32> to vector<256xf32>
    %65 = vector.shape_cast %64 : vector<256xf32> to vector<1x256xf32>
    %66 = arith.maximumf %63, %65 : vector<1x256xf32>
    %c0_34 = arith.constant 0 : index
    %c512_35 = arith.constant 512 : index
    %67 = vector.load %arg16[%c0_34, %c512_35] : memref<1x1024xf32, #tpu.memory_space<vmem>>, vector<1x256xf32>
    tpu.vector_store %arg16[%c0_34, %c512_35], %66 {strides = array<i32>} : memref<1x1024xf32, #tpu.memory_space<vmem>>, vector<1x256xf32>,
    %c0_36 = arith.constant 0 : index
    %c768 = arith.constant 768 : index
    %68 = vector.load %arg7[%c0_36, %c768] : memref<128x1024xbf16, #tpu.memory_space<vmem>>, vector<128x256xbf16>
    %cst_37 = arith.constant dense<0.000000e+00> : vector<16x256xf32>
    %69 = tpu.matmul %46, %68, %cst_37 {dimension_numbers = #tpu.dot_dimension_numbers<[1], [0], [0], [1], [0, 0, 1, 1], [], []>} : vector<16x128xbf16>, vector<128x256xbf16>, vector<16x256xf32> -> vector<16x256xf32>
    %c0_38 = arith.constant 0 : index
    %c768_39 = arith.constant 768 : index
    %70 = vector.load %arg16[%c0_38, %c768_39] : memref<1x1024xf32, #tpu.memory_space<vmem>>, vector<1x256xf32>
    %cst_40 = arith.constant dense<0xFF800000> : vector<256xf32>
    %71 = vector.multi_reduction <maximumf>, %69, %cst_40 [0] : vector<16x256xf32> to vector<256xf32>
    %72 = vector.shape_cast %71 : vector<256xf32> to vector<1x256xf32>
    %73 = arith.maximumf %70, %72 : vector<1x256xf32>
    %c0_41 = arith.constant 0 : index
    %c768_42 = arith.constant 768 : index
    %74 = vector.load %arg16[%c0_41, %c768_42] : memref<1x1024xf32, #tpu.memory_space<vmem>>, vector<1x256xf32>
    tpu.vector_store %arg16[%c0_41, %c768_42], %73 {strides = array<i32>} : memref<1x1024xf32, #tpu.memory_space<vmem>>, vector<1x256xf32>,
    %c0_i32_43 = arith.constant 0 : i32
    %75 = arith.cmpi eq, %arg1, %c0_i32_43 : i32
    %76 = arith.extui %75 : i1 to i32
    %c0_i32_44 = arith.constant 0 : i32
    %77 = arith.cmpi ne, %76, %c0_i32_44 : i32
    scf.if %77 {
      %c0_45 = arith.constant 0 : index
      %c0_46 = arith.constant 0 : index
      %78 = vector.load %arg16[%c0_45, %c0_46] : memref<1x1024xf32, #tpu.memory_space<vmem>>, vector<1x1024xf32>
      %c0_47 = arith.constant 0 : index
      %c0_48 = arith.constant 0 : index
      %79 = vector.load %arg8[%c0_47, %c0_48] : memref<1x1024xf32, #tpu.memory_space<vmem>>, vector<1x1024xf32>
      %80 = arith.addf %78, %79 : vector<1x1024xf32>
      %81 = arith.truncf %80 : vector<1x1024xf32> to vector<1x1024xbf16>
      %c0_49 = arith.constant 0 : index
      %c0_50 = arith.constant 0 : index
      %82 = vector.load %arg9[%c0_49, %c0_50] : memref<1024x512xbf16, #tpu.memory_space<vmem>>, vector<1024x512xbf16>
      %cst_51 = arith.constant dense<0.000000e+00> : vector<1x512xf32>
      %83 = tpu.matmul %81, %82, %cst_51 {dimension_numbers = #tpu.dot_dimension_numbers<[1], [0], [0], [1], [0, 0, 1, 1], [], []>} : vector<1x1024xbf16>, vector<1024x512xbf16>, vector<1x512xf32> -> vector<1x512xf32>
      %c0_52 = arith.constant 0 : index
      %c0_53 = arith.constant 0 : index
      %84 = vector.load %arg10[%c0_52, %c0_53] : memref<1x512xf32, #tpu.memory_space<vmem>>, vector<1x512xf32>
      %85 = arith.addf %83, %84 : vector<1x512xf32>
      %cst_54 = arith.constant 0.000000e+00 : f32
      %86 = vector.broadcast %cst_54 : f32 to vector<1x512xf32>
      %87 = arith.maximumf %85, %86 : vector<1x512xf32>
      %88 = arith.truncf %87 : vector<1x512xf32> to vector<1x512xbf16>
      %c0_55 = arith.constant 0 : index
      %c0_56 = arith.constant 0 : index
      %89 = vector.load %arg11[%c0_55, %c0_56] : memref<512x256xbf16, #tpu.memory_space<vmem>>, vector<512x256xbf16>
      %cst_57 = arith.constant dense<0.000000e+00> : vector<1x256xf32>
      %90 = tpu.matmul %88, %89, %cst_57 {dimension_numbers = #tpu.dot_dimension_numbers<[1], [0], [0], [1], [0, 0, 1, 1], [], []>} : vector<1x512xbf16>, vector<512x256xbf16>, vector<1x256xf32> -> vector<1x256xf32>
      %c0_58 = arith.constant 0 : index
      %c0_59 = arith.constant 0 : index
      %91 = vector.load %arg12[%c0_58, %c0_59] : memref<1x256xf32, #tpu.memory_space<vmem>>, vector<1x256xf32>
      %92 = arith.addf %90, %91 : vector<1x256xf32>
      %cst_60 = arith.constant 0.000000e+00 : f32
      %93 = vector.broadcast %cst_60 : f32 to vector<1x256xf32>
      %94 = arith.maximumf %92, %93 : vector<1x256xf32>
      %95 = arith.truncf %94 : vector<1x256xf32> to vector<1x256xbf16>
      %c0_61 = arith.constant 0 : index
      %c0_62 = arith.constant 0 : index
      %96 = vector.load %arg13[%c0_61, %c0_62] : memref<256x16xbf16, #tpu.memory_space<vmem>>, vector<256x16xbf16>
      %cst_63 = arith.constant dense<0.000000e+00> : vector<1x16xf32>
      %97 = tpu.matmul %95, %96, %cst_63 {dimension_numbers = #tpu.dot_dimension_numbers<[1], [0], [0], [1], [0, 0, 1, 1], [], []>} : vector<1x256xbf16>, vector<256x16xbf16>, vector<1x16xf32> -> vector<1x16xf32>
      %c0_64 = arith.constant 0 : index
      %c0_65 = arith.constant 0 : index
      %98 = vector.load %arg14[%c0_64, %c0_65] : memref<1x16xf32, #tpu.memory_space<vmem>>, vector<1x16xf32>
      %99 = arith.addf %97, %98 : vector<1x16xf32>
      %c0_66 = arith.constant 0 : index
      %c0_67 = arith.constant 0 : index
      %c0_68 = arith.constant 0 : index
      %100 = vector.load %arg15[%c0_66, %c0_67, %c0_68] : memref<1x1x16xf32, #tpu.memory_space<vmem>>, vector<1x1x16xf32>
      %101 = vector.shape_cast %100 : vector<1x1x16xf32> to vector<1x16xf32>
      %102 = vector.shape_cast %99 : vector<1x16xf32> to vector<1x1x16xf32>
      tpu.vector_store %arg15[%c0_66, %c0_67, %c0_68], %102 {strides = array<i32>} : memref<1x1x16xf32, #tpu.memory_space<vmem>>, vector<1x1x16xf32>,
    } else {
    }
    return
  }
  func.func @transform_0(%arg0: i32, %arg1: i32) -> (i32, i32, i32) {
    %c0_i32 = arith.constant 0 : i32
    %c0_i32_0 = arith.constant 0 : i32
    return %arg0, %arg1, %c0_i32 : i32, i32, i32
  }
  func.func @transform_1(%arg0: i32, %arg1: i32) -> (i32, i32) {
    %c0_i32 = arith.constant 0 : i32
    %c0_i32_0 = arith.constant 0 : i32
    %c0_i32_1 = arith.constant 0 : i32
    return %c0_i32, %c0_i32_0 : i32, i32
  }
  func.func @transform_2(%arg0: i32, %arg1: i32) -> (i32, i32) {
    %c0_i32 = arith.constant 0 : i32
    %c0_i32_0 = arith.constant 0 : i32
    %c0_i32_1 = arith.constant 0 : i32
    return %c0_i32, %c0_i32_0 : i32, i32
  }
  func.func @transform_3(%arg0: i32, %arg1: i32) -> (i32, i32) {
    %c0_i32 = arith.constant 0 : i32
    %c0_i32_0 = arith.constant 0 : i32
    %c0_i32_1 = arith.constant 0 : i32
    return %c0_i32, %c0_i32_0 : i32, i32
  }
  func.func @transform_4(%arg0: i32, %arg1: i32) -> (i32, i32) {
    %c0_i32 = arith.constant 0 : i32
    %c0_i32_0 = arith.constant 0 : i32
    %c0_i32_1 = arith.constant 0 : i32
    return %c0_i32, %c0_i32_0 : i32, i32
  }
  func.func @transform_5(%arg0: i32, %arg1: i32) -> (i32, i32) {
    %c0_i32 = arith.constant 0 : i32
    %c0_i32_0 = arith.constant 0 : i32
    %c0_i32_1 = arith.constant 0 : i32
    return %c0_i32, %c0_i32_0 : i32, i32
  }
  func.func @transform_6(%arg0: i32, %arg1: i32) -> (i32, i32) {
    %c0_i32 = arith.constant 0 : i32
    %c0_i32_0 = arith.constant 0 : i32
    %c0_i32_1 = arith.constant 0 : i32
    return %c0_i32, %c0_i32_0 : i32, i32
  }
  func.func @transform_7(%arg0: i32, %arg1: i32) -> (i32, i32) {
    %c0_i32 = arith.constant 0 : i32
    %c0_i32_0 = arith.constant 0 : i32
    %c0_i32_1 = arith.constant 0 : i32
    return %c0_i32, %c0_i32_0 : i32, i32
  }
  func.func @transform_8(%arg0: i32, %arg1: i32) -> (i32, i32) {
    %c0_i32 = arith.constant 0 : i32
    %c0_i32_0 = arith.constant 0 : i32
    %c0_i32_1 = arith.constant 0 : i32
    return %c0_i32, %c0_i32_0 : i32, i32
  }
  func.func @transform_9(%arg0: i32, %arg1: i32) -> (i32, i32) {
    %c0_i32 = arith.constant 0 : i32
    %c0_i32_0 = arith.constant 0 : i32
    %c0_i32_1 = arith.constant 0 : i32
    return %c0_i32, %c0_i32_0 : i32, i32
  }
  func.func @transform_10(%arg0: i32, %arg1: i32) -> (i32, i32) {
    %c0_i32 = arith.constant 0 : i32
    %c0_i32_0 = arith.constant 0 : i32
    %c0_i32_1 = arith.constant 0 : i32
    return %c0_i32, %c0_i32_0 : i32, i32
  }
  func.func @transform_11(%arg0: i32, %arg1: i32) -> (i32, i32) {
    %c0_i32 = arith.constant 0 : i32
    %c0_i32_0 = arith.constant 0 : i32
    %c0_i32_1 = arith.constant 0 : i32
    return %c0_i32, %c0_i32_0 : i32, i32
  }
  func.func @transform_12(%arg0: i32, %arg1: i32) -> (i32, i32) {
    %c0_i32 = arith.constant 0 : i32
    %c0_i32_0 = arith.constant 0 : i32
    %c0_i32_1 = arith.constant 0 : i32
    return %c0_i32, %c0_i32_0 : i32, i32
  }
  func.func @transform_13(%arg0: i32, %arg1: i32) -> (i32, i32, i32) {
    %c0_i32 = arith.constant 0 : i32
    %c0_i32_0 = arith.constant 0 : i32
    %c0_i32_1 = arith.constant 0 : i32
    return %arg0, %c0_i32, %c0_i32_0 : i32, i32, i32
  }
}

</mosaic_0001>

<llo_original>
// kernel: tnet_forward.1
$region0: #{tnet_forward.1}
  #allocation0 [shape = 'u32[]', space=smem, size = 0x4, offset = 0x4, fixed_abs, tag = 'smem constant byte address 0x4 - core index']
  #allocation1 [shape = 'u32[72,128]{1,0:T(1,128)}', space=vmem, size = 0x9000, scoped, tag = 'internal scratch']
  #allocation2 [shape = 'f32[1,1024]{1,0:T(1,128)}', space=vmem, size = 0x1000, scoped, tag = 'scratch operand']
  %s0 = inlined_call_operand.vmem [shape: bf16[2,16,4], index: 0, kind: input, shape index: {}]
  %s1 = inlined_call_operand.vmem [shape: bf16[4,64], index: 1, kind: input, shape index: {}]
  %s2 = inlined_call_operand.vmem [shape: f32[1,64], index: 2, kind: input, shape index: {}]
  %s3 = inlined_call_operand.vmem [shape: bf16[64,128], index: 3, kind: input, shape index: {}]
  %s4 = inlined_call_operand.vmem [shape: f32[1,128], index: 4, kind: input, shape index: {}]
  %s5 = inlined_call_operand.hbm [shape: bf16[128,1024], index: 5, kind: input, shape index: {}]
  %s6 = inlined_call_operand.vmem [shape: f32[1,1024], index: 6, kind: input, shape index: {}]
  %s7 = inlined_call_operand.hbm [shape: bf16[1024,512], index: 7, kind: input, shape index: {}]
  %s8 = inlined_call_operand.vmem [shape: f32[1,512], index: 8, kind: input, shape index: {}]
  %s9 = inlined_call_operand.hbm [shape: bf16[512,256], index: 9, kind: input, shape index: {}]
  %s10 = inlined_call_operand.vmem [shape: f32[1,256], index: 10, kind: input, shape index: {}]
  %s11 = inlined_call_operand.vmem [shape: bf16[256,16], index: 11, kind: input, shape index: {}]
  %s12 = inlined_call_operand.vmem [shape: f32[1,16], index: 12, kind: input, shape index: {}]
  %s13 = inlined_call_operand.vmem [shape: f32[2,1,16], index: 13, kind: output, shape index: {}]
  %s14 = sld [smem:[#allocation0]]
  $region105: #{tnet_forward.1} parent=0
    _
  %s16 = ssub.s32 1, %s14
  %s17 = scalar_select 0, %s16, %s14
  $region1: #{tnet_forward.1} parent=0
    #allocation3 [shape = 'u8[262144]{0}', space=vmem, size = 0x40000, scoped, tag = 'input window, operand 5, single buffered']
    #allocation4 [shape = 's32[2]{0}', space=sflag, size = 0x8, scoped, tag = 'scoped memory for tnet_forward.1']
    #allocation5 [shape = 'u8[1048576]{0}', space=vmem, size = 0x100000, scoped, tag = 'input window, operand 7, single buffered']
    #allocation6 [shape = 's32[1]{0}', space=sflag, size = 0x4, scoped, tag = 'scoped memory for tnet_forward.1']
    #allocation7 [shape = 'u8[262144]{0}', space=vmem, size = 0x40000, scoped, tag = 'input window, operand 9, single buffered']
    %18 = vsyncpa [#allocation4], 0
    %19 = vsyncpa [#allocation6], 0
    loop: start=0, step=1, limit=4
    $region2: #{tnet_forward.1} parent=1 // loop_pre_header
      _
    $region3: #{tnet_forward.1} parent=1 // loop_header
      %s21 = sphi 0, %s25
      %p22 = scmp.ge.s32.totalorder %s21, 4
      %s28 = sphi 0, %s40
      %s29 = sphi 0, %s36
      %s30 = sphi 0, %s28
      %s31 = sphi 0, %s29
      %s32 = sphi 0, %s30
      %s33 = sphi 0, %s31
      %s45 = sphi 0, %s47
      %s48 = sphi 0, %s45
      %s49 = sphi 0, %s48
      %s65 = sphi 0, %s49
      %s69 = sphi 0, %s69
      %s71 = sphi 0, %s69
      %s72 = sphi 0, %s71
      %s86 = sphi 0, %s72
      %s90 = sphi 0, %s90
      %s92 = sphi 0, %s90
      %s93 = sphi 0, %s92
      %s107 = sphi 0, %s93
      %s111 = sphi 0, %s111
      %s113 = sphi 0, %s111
      %s114 = sphi 0, %s113
      %s128 = sphi 0, %s114
      %s132 = sphi 0, %s132
      %s134 = sphi 0, %s132
      %s135 = sphi 0, %s134
      %s149 = sphi 0, %s135
      %s153 = sphi 0, %s153
      %s155 = sphi 0, %s153
      %s156 = sphi 0, %s155
      %s170 = sphi 0, %s156
      %s174 = sphi 0, %s174
      %s176 = sphi 0, %s174
      %s177 = sphi 0, %s176
      %s191 = sphi 0, %s177
      %s195 = sphi 0, %s195
      %s197 = sphi 0, %s195
      %s198 = sphi 0, %s197
      %s212 = sphi 0, %s198
      %s216 = sphi 0, %s216
      %s218 = sphi 0, %s216
      %s219 = sphi 0, %s218
      %s233 = sphi 0, %s219
      %s237 = sphi 0, %s237
      %s239 = sphi 0, %s237
      %s240 = sphi 0, %s239
      %s254 = sphi 0, %s240
      %s258 = sphi 0, %s258
      %s260 = sphi 0, %s258
      %s261 = sphi 0, %s260
      %s275 = sphi 0, %s261
      %s279 = sphi 0, %s279
      %s281 = sphi 0, %s279
      %s282 = sphi 0, %s281
      %s296 = sphi 0, %s282
      %s300 = sphi 0, %s300
      %s302 = sphi 0, %s300
      %s303 = sphi 0, %s302
      %s317 = sphi 0, %s303
      %s323 = sphi 0, %s325
      %s326 = sphi 0, %s323
      %s327 = sphi 0, %s326
      %s343 = sphi 0, %s327
    $region4: #{tnet_forward.1} parent=1 // loop_header_branch
      %24 = sbr.rel (%p22) target = $region8
    $region5: #{tnet_forward.1} parent=1 // loop_body
      %s26 = ssub.s32 %s21, 1
      %s27 = ssub.s32 %s21, 2
      %s34 = sadd.s32 1, %s29
      %p35 = scmp.ge.s32.totalorder %s34, 1
      %s36 = scalar_select %p35, 0, %s34
      %s37 = sadd.s32 1, %s28
      %s38 = scalar_select %p35, %s37, %s28
      %p39 = scmp.ge.s32.totalorder %s38, 2
      %s40 = scalar_select %p39, 0, %s38
      %s41 = ssub.s32 %s28, %s40
      %s42 = ssub.s32 %s29, %s36
      %s43 = sor.u32 %s41, %s42
      %p44 = scmp.eq.s32.totalorder %s43, 0
      %s46 = sadd.s32 %s45, 1
      %s47 = scalar_select %p44, %s45, %s46
      %p50 = pneg %p44
      %p51 = scmp.eq.s32.totalorder %s21, 1
      %p52 = por %p50, %p51
      %p53 = scmp.ne.s32.totalorder %s45, %s48
      %p54 = scmp.eq.s32.totalorder %s21, 0
      %p55 = por %p53, %p54
      %p56 = scmp.ne.s32.totalorder %s45, %s48
      %p57 = scmp.eq.s32.totalorder %s26, 1
      %p58 = por %p56, %p57
      %p59 = scmp.ne.s32.totalorder %s48, %s49
      %p60 = scmp.eq.s32.totalorder %s26, 0
      %p61 = por %p59, %p60
      %p62 = scmp.ne.s32.totalorder %s48, %s49
      %p63 = scmp.eq.s32.totalorder %s27, 1
      %p64 = por %p62, %p63
      %p66 = scmp.ne.s32.totalorder %s49, %s65
      %p67 = scmp.eq.s32.totalorder %s27, 0
      %p68 = por %p66, %p67
      %s70 = sadd.s32 %s69, 1
      %p73 = scmp.eq.s32.totalorder %s21, 1
      %p74 = scmp.ne.s32.totalorder %s69, %s71
      %p75 = scmp.eq.s32.totalorder %s21, 0
      %p76 = por %p74, %p75
      %p77 = scmp.ne.s32.totalorder %s69, %s71
      %p78 = scmp.eq.s32.totalorder %s26, 1
      %p79 = por %p77, %p78
      %p80 = scmp.ne.s32.totalorder %s71, %s72
      %p81 = scmp.eq.s32.totalorder %s26, 0
      %p82 = por %p80, %p81
      %p83 = scmp.ne.s32.totalorder %s71, %s72
      %p84 = scmp.eq.s32.totalorder %s27, 1
      %p85 = por %p83, %p84
      %p87 = scmp.ne.s32.totalorder %s72, %s86
      %p88 = scmp.eq.s32.totalorder %s27, 0
      %p89 = por %p87, %p88
      %s91 = sadd.s32 %s90, 1
      %p94 = scmp.eq.s32.totalorder %s21, 1
      %p95 = scmp.ne.s32.totalorder %s90, %s92
      %p96 = scmp.eq.s32.totalorder %s21, 0
      %p97 = por %p95, %p96
      %p98 = scmp.ne.s32.totalorder %s90, %s92
      %p99 = scmp.eq.s32.totalorder %s26, 1
      %p100 = por %p98, %p99
      %p101 = scmp.ne.s32.totalorder %s92, %s93
      %p102 = scmp.eq.s32.totalorder %s26, 0
      %p103 = por %p101, %p102
      %p104 = scmp.ne.s32.totalorder %s92, %s93
      %p105 = scmp.eq.s32.totalorder %s27, 1
      %p106 = por %p104, %p105
      %p108 = scmp.ne.s32.totalorder %s93, %s107
      %p109 = scmp.eq.s32.totalorder %s27, 0
      %p110 = por %p108, %p109
      %s112 = sadd.s32 %s111, 1
      %p115 = scmp.eq.s32.totalorder %s21, 1
      %p116 = scmp.ne.s32.totalorder %s111, %s113
      %p117 = scmp.eq.s32.totalorder %s21, 0
      %p118 = por %p116, %p117
      %p119 = scmp.ne.s32.totalorder %s111, %s113
      %p120 = scmp.eq.s32.totalorder %s26, 1
      %p121 = por %p119, %p120
      %p122 = scmp.ne.s32.totalorder %s113, %s114
      %p123 = scmp.eq.s32.totalorder %s26, 0
      %p124 = por %p122, %p123
      %p125 = scmp.ne.s32.totalorder %s113, %s114
      %p126 = scmp.eq.s32.totalorder %s27, 1
      %p127 = por %p125, %p126
      %p129 = scmp.ne.s32.totalorder %s114, %s128
      %p130 = scmp.eq.s32.totalorder %s27, 0
      %p131 = por %p129, %p130
      %s133 = sadd.s32 %s132, 1
      %p136 = scmp.eq.s32.totalorder %s21, 1
      %p137 = scmp.ne.s32.totalorder %s132, %s134
      %p138 = scmp.eq.s32.totalorder %s21, 0
      %p139 = por %p137, %p138
      %p140 = scmp.ne.s32.totalorder %s132, %s134
      %p141 = scmp.eq.s32.totalorder %s26, 1
      %p142 = por %p140, %p141
      %p143 = scmp.ne.s32.totalorder %s134, %s135
      %p144 = scmp.eq.s32.totalorder %s26, 0
      %p145 = por %p143, %p144
      %p146 = scmp.ne.s32.totalorder %s134, %s135
      %p147 = scmp.eq.s32.totalorder %s27, 1
      %p148 = por %p146, %p147
      %p150 = scmp.ne.s32.totalorder %s135, %s149
      %p151 = scmp.eq.s32.totalorder %s27, 0
      %p152 = por %p150, %p151
      %s154 = sadd.s32 %s153, 1
      %p157 = scmp.eq.s32.totalorder %s21, 1
      %p158 = scmp.ne.s32.totalorder %s153, %s155
      %p159 = scmp.eq.s32.totalorder %s21, 0
      %p160 = por %p158, %p159
      %p161 = scmp.ne.s32.totalorder %s153, %s155
      %p162 = scmp.eq.s32.totalorder %s26, 1
      %p163 = por %p161, %p162
      %p164 = scmp.ne.s32.totalorder %s155, %s156
      %p165 = scmp.eq.s32.totalorder %s26, 0
      %p166 = por %p164, %p165
      %p167 = scmp.ne.s32.totalorder %s155, %s156
      %p168 = scmp.eq.s32.totalorder %s27, 1
      %p169 = por %p167, %p168
      %p171 = scmp.ne.s32.totalorder %s156, %s170
      %p172 = scmp.eq.s32.totalorder %s27, 0
      %p173 = por %p171, %p172
      %s175 = sadd.s32 %s174, 1
      %p178 = scmp.eq.s32.totalorder %s21, 1
      %p179 = scmp.ne.s32.totalorder %s174, %s176
      %p180 = scmp.eq.s32.totalorder %s21, 0
      %p181 = por %p179, %p180
      %p182 = scmp.ne.s32.totalorder %s174, %s176
      %p183 = scmp.eq.s32.totalorder %s26, 1
      %p184 = por %p182, %p183
      %p185 = scmp.ne.s32.totalorder %s176, %s177
      %p186 = scmp.eq.s32.totalorder %s26, 0
      %p187 = por %p185, %p186
      %p188 = scmp.ne.s32.totalorder %s176, %s177
      %p189 = scmp.eq.s32.totalorder %s27, 1
      %p190 = por %p188, %p189
      %p192 = scmp.ne.s32.totalorder %s177, %s191
      %p193 = scmp.eq.s32.totalorder %s27, 0
      %p194 = por %p192, %p193
      %s196 = sadd.s32 %s195, 1
      %p199 = scmp.eq.s32.totalorder %s21, 1
      %p200 = scmp.ne.s32.totalorder %s195, %s197
      %p201 = scmp.eq.s32.totalorder %s21, 0
      %p202 = por %p200, %p201
      %p203 = scmp.ne.s32.totalorder %s195, %s197
      %p204 = scmp.eq.s32.totalorder %s26, 1
      %p205 = por %p203, %p204
      %p206 = scmp.ne.s32.totalorder %s197, %s198
      %p207 = scmp.eq.s32.totalorder %s26, 0
      %p208 = por %p206, %p207
      %p209 = scmp.ne.s32.totalorder %s197, %s198
      %p210 = scmp.eq.s32.totalorder %s27, 1
      %p211 = por %p209, %p210
      %p213 = scmp.ne.s32.totalorder %s198, %s212
      %p214 = scmp.eq.s32.totalorder %s27, 0
      %p215 = por %p213, %p214
      %s217 = sadd.s32 %s216, 1
      %p220 = scmp.eq.s32.totalorder %s21, 1
      %p221 = scmp.ne.s32.totalorder %s216, %s218
      %p222 = scmp.eq.s32.totalorder %s21, 0
      %p223 = por %p221, %p222
      %p224 = scmp.ne.s32.totalorder %s216, %s218
      %p225 = scmp.eq.s32.totalorder %s26, 1
      %p226 = por %p224, %p225
      %p227 = scmp.ne.s32.totalorder %s218, %s219
      %p228 = scmp.eq.s32.totalorder %s26, 0
      %p229 = por %p227, %p228
      %p230 = scmp.ne.s32.totalorder %s218, %s219
      %p231 = scmp.eq.s32.totalorder %s27, 1
      %p232 = por %p230, %p231
      %p234 = scmp.ne.s32.totalorder %s219, %s233
      %p235 = scmp.eq.s32.totalorder %s27, 0
      %p236 = por %p234, %p235
      %s238 = sadd.s32 %s237, 1
      %p241 = scmp.eq.s32.totalorder %s21, 1
      %p242 = scmp.ne.s32.totalorder %s237, %s239
      %p243 = scmp.eq.s32.totalorder %s21, 0
      %p244 = por %p242, %p243
      %p245 = scmp.ne.s32.totalorder %s237, %s239
      %p246 = scmp.eq.s32.totalorder %s26, 1
      %p247 = por %p245, %p246
      %p248 = scmp.ne.s32.totalorder %s239, %s240
      %p249 = scmp.eq.s32.totalorder %s26, 0
      %p250 = por %p248, %p249
      %p251 = scmp.ne.s32.totalorder %s239, %s240
      %p252 = scmp.eq.s32.totalorder %s27, 1
      %p253 = por %p251, %p252
      %p255 = scmp.ne.s32.totalorder %s240, %s254
      %p256 = scmp.eq.s32.totalorder %s27, 0
      %p257 = por %p255, %p256
      %s259 = sadd.s32 %s258, 1
      %p262 = scmp.eq.s32.totalorder %s21, 1
      %p263 = scmp.ne.s32.totalorder %s258, %s260
      %p264 = scmp.eq.s32.totalorder %s21, 0
      %p265 = por %p263, %p264
      %p266 = scmp.ne.s32.totalorder %s258, %s260
      %p267 = scmp.eq.s32.totalorder %s26, 1
      %p268 = por %p266, %p267
      %p269 = scmp.ne.s32.totalorder %s260, %s261
      %p270 = scmp.eq.s32.totalorder %s26, 0
      %p271 = por %p269, %p270
      %p272 = scmp.ne.s32.totalorder %s260, %s261
      %p273 = scmp.eq.s32.totalorder %s27, 1
      %p274 = por %p272, %p273
      %p276 = scmp.ne.s32.totalorder %s261, %s275
      %p277 = scmp.eq.s32.totalorder %s27, 0
      %p278 = por %p276, %p277
      %s280 = sadd.s32 %s279, 1
      %p283 = scmp.eq.s32.totalorder %s21, 1
      %p284 = scmp.ne.s32.totalorder %s279, %s281
      %p285 = scmp.eq.s32.totalorder %s21, 0
      %p286 = por %p284, %p285
      %p287 = scmp.ne.s32.totalorder %s279, %s281
      %p288 = scmp.eq.s32.totalorder %s26, 1
      %p289 = por %p287, %p288
      %p290 = scmp.ne.s32.totalorder %s281, %s282
      %p291 = scmp.eq.s32.totalorder %s26, 0
      %p292 = por %p290, %p291
      %p293 = scmp.ne.s32.totalorder %s281, %s282
      %p294 = scmp.eq.s32.totalorder %s27, 1
      %p295 = por %p293, %p294
      %p297 = scmp.ne.s32.totalorder %s282, %s296
      %p298 = scmp.eq.s32.totalorder %s27, 0
      %p299 = por %p297, %p298
      %s301 = sadd.s32 %s300, 1
      %p304 = scmp.eq.s32.totalorder %s21, 1
      %p305 = scmp.ne.s32.totalorder %s300, %s302
      %p306 = scmp.eq.s32.totalorder %s21, 0
      %p307 = por %p305, %p306
      %p308 = scmp.ne.s32.totalorder %s300, %s302
      %p309 = scmp.eq.s32.totalorder %s26, 1
      %p310 = por %p308, %p309
      %p311 = scmp.ne.s32.totalorder %s302, %s303
      %p312 = scmp.eq.s32.totalorder %s26, 0
      %p313 = por %p311, %p312
      %p314 = scmp.ne.s32.totalorder %s302, %s303
      %p315 = scmp.eq.s32.totalorder %s27, 1
      %p316 = por %p314, %p315
      %p318 = scmp.ne.s32.totalorder %s303, %s317
      %p319 = scmp.eq.s32.totalorder %s27, 0
      %p320 = por %p318, %p319
      %s321 = ssub.s32 %s28, %s40
      %p322 = scmp.eq.s32.totalorder %s321, 0
      %s324 = sadd.s32 %s323, 1
      %s325 = scalar_select %p322, %s323, %s324
      %p328 = pneg %p322
      %p329 = scmp.eq.s32.totalorder %s21, 1
      %p330 = por %p328, %p329
      %p331 = scmp.ne.s32.totalorder %s323, %s326
      %p332 = scmp.eq.s32.totalorder %s21, 0
      %p333 = por %p331, %p332
      %p334 = scmp.ne.s32.totalorder %s323, %s326
      %p335 = scmp.eq.s32.totalorder %s26, 1
      %p336 = por %p334, %p335
      %p337 = scmp.ne.s32.totalorder %s326, %s327
      %p338 = scmp.eq.s32.totalorder %s26, 0
      %p339 = por %p337, %p338
      %p340 = scmp.ne.s32.totalorder %s326, %s327
      %p341 = scmp.eq.s32.totalorder %s27, 1
      %p342 = por %p340, %p341
      %p344 = scmp.ne.s32.totalorder %s327, %s343
      %p345 = scmp.eq.s32.totalorder %s27, 0
      %p346 = por %p344, %p345
      %p347 = scmp.le.s32.totalorder 1, %s21
      %p348 = scmp.lt.s32.totalorder %s21, 3
      %p349 = pnand %p347, %p348
      %p350 = pneg %p349
      // Predicated region
      $region9: #{tnet_forward.1} parent=5 // pred_check
        _
      $region10: #{tnet_forward.1} parent=5 // pred_check_branch
        %352 = sbr.rel (%p349) target = $region12
      $region11: #{tnet_forward.1} parent=5 // pred_region
        %s353 = ssub.s32 %s21, 1
        // Predicated region
        $region13: #{tnet_forward.1} parent=11 // pred_check
          %p354 = pneg %p82
        $region14: #{tnet_forward.1} parent=11 // pred_check_branch
          %356 = sbr.rel (%p354) target = $region16
        $region15: #{tnet_forward.1} parent=11 // pred_region
          _
        $region16: #{tnet_forward.1} parent=11 // pred_fallthru
          _
        // Predicated region
        $region17: #{tnet_forward.1} parent=11 // pred_check
          %p357 = pneg %p103
        $region18: #{tnet_forward.1} parent=11 // pred_check_branch
          %359 = sbr.rel (%p357) target = $region20
        $region19: #{tnet_forward.1} parent=11 // pred_region
          _
        $region20: #{tnet_forward.1} parent=11 // pred_fallthru
          _
        // Predicated region
        $region21: #{tnet_forward.1} parent=11 // pred_check
          %p360 = pneg %p124
        $region22: #{tnet_forward.1} parent=11 // pred_check_branch
          %362 = sbr.rel (%p360) target = $region24
        $region23: #{tnet_forward.1} parent=11 // pred_region
          _
        $region24: #{tnet_forward.1} parent=11 // pred_fallthru
          _
        // Predicated region
        $region25: #{tnet_forward.1} parent=11 // pred_check
          %p363 = pneg %p145
        $region26: #{tnet_forward.1} parent=11 // pred_check_branch
          %365 = sbr.rel (%p363) target = $region28
        $region27: #{tnet_forward.1} parent=11 // pred_region
          _
        $region28: #{tnet_forward.1} parent=11 // pred_fallthru
          _
        // Predicated region
        $region29: #{tnet_forward.1} parent=11 // pred_check
          %p366 = pneg %p166
        $region30: #{tnet_forward.1} parent=11 // pred_check_branch
          %368 = sbr.rel (%p366) target = $region32
        $region31: #{tnet_forward.1} parent=11 // pred_region
          %370 = vsyncadd [#allocation4], 0
          %s371 = sshll.u32 %s5, 4
          %s372 = int_to_ptr.hbm [resolvable:$true] %s371
          %s373 = sshll.u32 [#allocation3], 4
          %s374 = int_to_ptr.vmem [resolvable:$true] %s373
          %379 = dma.hbm_to_vmem [thread:$0]  %s372, 8192, %s374, [#allocation4], 512, 512, 32
        $region32: #{tnet_forward.1} parent=11 // pred_fallthru
          _
        // Predicated region
        $region33: #{tnet_forward.1} parent=11 // pred_check
          %p380 = pneg %p187
        $region34: #{tnet_forward.1} parent=11 // pred_check_branch
          %382 = sbr.rel (%p380) target = $region36
        $region35: #{tnet_forward.1} parent=11 // pred_region
          _
        $region36: #{tnet_forward.1} parent=11 // pred_fallthru
          _
        // Predicated region
        $region37: #{tnet_forward.1} parent=11 // pred_check
          %p383 = pneg %p208
        $region38: #{tnet_forward.1} parent=11 // pred_check_branch
          %385 = sbr.rel (%p383) target = $region40
        $region39: #{tnet_forward.1} parent=11 // pred_region
          %387 = vsyncadd [#allocation6], 0
          %s388 = sshll.u32 %s7, 4
          %s389 = int_to_ptr.hbm [resolvable:$true] %s388
          %s390 = sshll.u32 [#allocation5], 4
          %s391 = int_to_ptr.vmem [resolvable:$true] %s390
          %396 = dma.hbm_to_vmem [thread:$0]  %s389, 32768, %s391, [#allocation6], 256, 256, 16
        $region40: #{tnet_forward.1} parent=11 // pred_fallthru
          _
        // Predicated region
        $region41: #{tnet_forward.1} parent=11 // pred_check
          %p397 = pneg %p229
        $region42: #{tnet_forward.1} parent=11 // pred_check_branch
          %399 = sbr.rel (%p397) target = $region44
        $region43: #{tnet_forward.1} parent=11 // pred_region
          _
        $region44: #{tnet_forward.1} parent=11 // pred_fallthru
          _
        // Predicated region
        $region45: #{tnet_forward.1} parent=11 // pred_check
          %p400 = pneg %p250
        $region46: #{tnet_forward.1} parent=11 // pred_check_branch
          %402 = sbr.rel (%p400) target = $region48
        $region47: #{tnet_forward.1} parent=11 // pred_region
          %404 = vsyncadd [#allocation6], 0
          %s405 = sshll.u32 %s9, 4
          %s406 = int_to_ptr.hbm [resolvable:$true] %s405
          %s407 = sshll.u32 [#allocation7], 4
          %s408 = int_to_ptr.vmem [resolvable:$true] %s407
          %413 = dma.hbm_to_vmem [thread:$0]  %s406, 8192, %s408, [#allocation6], 128, 128, 8
        $region48: #{tnet_forward.1} parent=11 // pred_fallthru
          _
        // Predicated region
        $region49: #{tnet_forward.1} parent=11 // pred_check
          %p414 = pneg %p271
        $region50: #{tnet_forward.1} parent=11 // pred_check_branch
          %416 = sbr.rel (%p414) target = $region52
        $region51: #{tnet_forward.1} parent=11 // pred_region
          _
        $region52: #{tnet_forward.1} parent=11 // pred_fallthru
          _
        // Predicated region
        $region53: #{tnet_forward.1} parent=11 // pred_check
          %p417 = pneg %p292
        $region54: #{tnet_forward.1} parent=11 // pred_check_branch
          %419 = sbr.rel (%p417) target = $region56
        $region55: #{tnet_forward.1} parent=11 // pred_region
          _
        $region56: #{tnet_forward.1} parent=11 // pred_fallthru
          _
        // Predicated region
        $region57: #{tnet_forward.1} parent=11 // pred_check
          %p420 = pneg %p313
        $region58: #{tnet_forward.1} parent=11 // pred_check_branch
          %422 = sbr.rel (%p420) target = $region60
        $region59: #{tnet_forward.1} parent=11 // pred_region
          _
        $region60: #{tnet_forward.1} parent=11 // pred_fallthru
          _
      $region12: #{tnet_forward.1} parent=5 // pred_fallthru
        _
      %p423 = scmp.lt.s32.totalorder %s21, 2
      // Predicated region
      $region61: #{tnet_forward.1} parent=5 // pred_check
        %p424 = pneg %p423
      $region62: #{tnet_forward.1} parent=5 // pred_check_branch
        %426 = sbr.rel (%p424) target = $region64
      $region63: #{tnet_forward.1} parent=5 // pred_region
        // Predicated region
        $region65: #{tnet_forward.1} parent=63 // pred_check
          %p427 = pneg %p55
        $region66: #{tnet_forward.1} parent=63 // pred_check_branch
          %429 = sbr.rel (%p427) target = $region68
        $region67: #{tnet_forward.1} parent=63 // pred_region
          %s430 = smul.u32 2, %s29
          %p431 = scmp.lt.s32.totalorder %s28, 1
          %s432 = scalar_select %p431, %s28, 1
          %p433 = scmp.lt.s32.totalorder %s430, 1
          %s434 = scalar_select %p433, %s430, 1
          %s435 = smul.addr %s432, 2
          %s436 = sadd.s32 %s434, %s435
          %s437 = smul.addr %s436, 4
          %s438 = scalar_lea.vmem %s0, %s437
          %s439 = smul.u32 2, %s29
        $region68: #{tnet_forward.1} parent=63 // pred_fallthru
          _
      $region64: #{tnet_forward.1} parent=5 // pred_fallthru
        _
      %p440 = scmp.le.s32.totalorder 1, %s21
      %p441 = scmp.lt.s32.totalorder %s21, 3
      %p442 = pnand %p440, %p441
      %p443 = pneg %p442
      // Predicated region
      $region69: #{tnet_forward.1} parent=5 // pred_check
        _
      $region70: #{tnet_forward.1} parent=5 // pred_check_branch
        %445 = sbr.rel (%p442) target = $region72
      $region71: #{tnet_forward.1} parent=5 // pred_region
        %s446 = ssub.s32 %s21, 1
        // Predicated region
        $region73: #{tnet_forward.1} parent=71 // pred_check
          %p447 = pneg %p166
        $region74: #{tnet_forward.1} parent=71 // pred_check_branch
          %449 = sbr.rel (%p447) target = $region76
        $region75: #{tnet_forward.1} parent=71 // pred_region
          %451 = dma.done [#allocation4], 8192
        $region76: #{tnet_forward.1} parent=71 // pred_fallthru
          _
        // Predicated region
        $region77: #{tnet_forward.1} parent=71 // pred_check
          %p452 = pneg %p208
        $region78: #{tnet_forward.1} parent=71 // pred_check_branch
          %454 = sbr.rel (%p452) target = $region80
        $region79: #{tnet_forward.1} parent=71 // pred_region
          %456 = dma.done [#allocation6], 32768
        $region80: #{tnet_forward.1} parent=71 // pred_fallthru
          _
        // Predicated region
        $region81: #{tnet_forward.1} parent=71 // pred_check
          %p457 = pneg %p250
        $region82: #{tnet_forward.1} parent=71 // pred_check_branch
          %459 = sbr.rel (%p457) target = $region84
        $region83: #{tnet_forward.1} parent=71 // pred_region
          %461 = dma.done [#allocation6], 8192
        $region84: #{tnet_forward.1} parent=71 // pred_fallthru
          _
        %s462 = smul.u32 2, %s31
        %p463 = scmp.lt.s32.totalorder %s30, 1
        %s464 = scalar_select %p463, %s30, 1
        %p465 = scmp.lt.s32.totalorder %s462, 1
        %s466 = scalar_select %p465, %s462, 1
        %s467 = smul.addr %s464, 2
        %s468 = sadd.s32 %s466, %s467
        %s469 = smul.addr %s468, 4
        %s470 = scalar_lea.vmem %s0, %s469
        %p471 = pneg %p61
        %p472 = pneg %p58
        %p473 = pneg %p82
        %p474 = pneg %p79
        %p475 = pneg %p103
        %p476 = pneg %p100
        %p477 = pneg %p124
        %p478 = pneg %p121
        %p479 = pneg %p145
        %p480 = pneg %p142
        %p481 = pneg %p166
        %p482 = pneg %p163
        %p483 = pneg %p187
        %p484 = pneg %p184
        %p485 = pneg %p208
        %p486 = pneg %p205
        %p487 = pneg %p229
        %p488 = pneg %p226
        %p489 = pneg %p250
        %p490 = pneg %p247
        %p491 = pneg %p271
        %p492 = pneg %p268
        %p493 = pneg %p292
        %p494 = pneg %p289
        %p495 = pneg %p313
        %p496 = pneg %p310
        %p497 = pneg %p339
        %p498 = pneg %p336
        %p499 = scmp.lt.s32.totalorder %s30, 1
        %s500 = scalar_select %p499, %s30, 1
        %s501 = scalar_lea.vmem %s13, %s500
        %s502 = smul.u32 2, %s31
        %p503 = scmp.lt.s32.totalorder %s30, 1
        %s504 = scalar_select %p503, %s30, 1
        %p505 = scmp.lt.s32.totalorder %s502, 1
        %s506 = scalar_select %p505, %s502, 1
        %s507 = smul.addr %s504, 2
        %s508 = sadd.s32 %s506, %s507
        %s509 = smul.addr %s508, 4
        %s510 = scalar_lea.vmem %s0, %s509
        %s511 = smul.u32 2, %s31
        %p512 = scmp.lt.s32.totalorder %s30, 1
        %s513 = scalar_select %p512, %s30, 1
        %s514 = scalar_lea.vmem %s13, %s513
        %p516 = scmp.eq.s32.totalorder %s31, 0
        // Predicated region
        $region85: #{tnet_forward.1} parent=71 // pred_check
          %p517 = pneg %p516
        $region86: #{tnet_forward.1} parent=71 // pred_check_branch
          %519 = sbr.rel (%p517) target = $region88
        $region87: #{tnet_forward.1} parent=71 // pred_region
          %520 = vst [vmem:[#allocation2] sm:$0xff] -inf
        $region88: #{tnet_forward.1} parent=71 // pred_fallthru
          _
        %v521 = vld [vmem:[%s510] sm:$0xf]
        %v522 = vld [vmem:[%s510 + $0x4] sm:$0xf]
        %v523 = vunpack.c.l.bf16 %v521
        %v524 = vunpack.c.l.bf16 %v522
        %v525 = vld [vmem:[%s1] sm:$0x3]
        %v526 = vunpack.c.l.bf16 %v525
        %528 = vset.pattern.permute.xlu0 0
        %529 = vperm.xlu0 %528, %v523
        %v530 = vpop.permute.xlu0 %529
        %533 = vset.pattern.permute.xlu0 0
        %534 = vperm.xlu0 %533, %v524
        %v535 = vpop.permute.xlu0 %534
        %v537 = vperm.slane %v526, 0
        %v538 = vmul.f32 %v530, %v537
        %v539 = vmul.f32 %v535, %v537
        %v540 = vadd.f32 %v538, 0.0
        %v541 = vadd.f32 %v539, 0.0
        %542 = vset.pattern.permute.xlu0 1
        %543 = vperm.xlu0 %542, %v523
        %v544 = vpop.permute.xlu0 %543
        %546 = vset.pattern.permute.xlu0 1
        %547 = vperm.xlu0 %546, %v524
        %v548 = vpop.permute.xlu0 %547
        %v550 = vperm.slane %v526, 1
        %v551 = vmul.f32 %v544, %v550
        %v552 = vmul.f32 %v548, %v550
        %v553 = vadd.f32 %v540, %v551
        %v554 = vadd.f32 %v541, %v552
        %555 = vset.pattern.permute.xlu0 2
        %556 = vperm.xlu0 %555, %v523
        %v557 = vpop.permute.xlu0 %556
        %559 = vset.pattern.permute.xlu0 2
        %560 = vperm.xlu0 %559, %v524
        %v561 = vpop.permute.xlu0 %560
        %v563 = vperm.slane %v526, 2
        %v564 = vmul.f32 %v557, %v563
        %v565 = vmul.f32 %v561, %v563
        %v566 = vadd.f32 %v553, %v564
        %v567 = vadd.f32 %v554, %v565
        %568 = vset.pattern.permute.xlu0 3
        %569 = vperm.xlu0 %568, %v523
        %v570 = vpop.permute.xlu0 %569
        %572 = vset.pattern.permute.xlu0 3
        %573 = vperm.xlu0 %572, %v524
        %v574 = vpop.permute.xlu0 %573
        %v576 = vperm.slane %v526, 3
        %v577 = vmul.f32 %v570, %v576
        %v578 = vmul.f32 %v574, %v576
        %v579 = vadd.f32 %v566, %v577
        %v580 = vadd.f32 %v567, %v578
        %v581 = vld [vmem:[%s2] sm:$0x1]
        %v583 = vperm.slane %v581, 0
        %v585 = vadd.f32 %v579, %v583
        %v586 = vadd.f32 %v580, %v583
        %v587 = vmax.f32 %v585, 0.0
        %v588 = vmax.f32 %v586, 0.0
        %v589 = vpack.c.bf16 %v588, %v587
        %v590 = vld [vmem:[%s3] sm:$0xf]
        %v591 = vld [vmem:[%s3 + $0x4] sm:$0xf]
        %v592 = vld [vmem:[%s3 + $0x8] sm:$0xf]
        %v593 = vld [vmem:[%s3 + $0xc] sm:$0xf]
        %v594 = vld [vmem:[%s3 + $0x10] sm:$0xf]
        %v595 = vld [vmem:[%s3 + $0x14] sm:$0xf]
        %v596 = vld [vmem:[%s3 + $0x18] sm:$0xf]
        %v597 = vld [vmem:[%s3 + $0x1c] sm:$0xf]
        %v598 = vld [vmem:[%s4] sm:$0x1]
        %v600 = vperm.slane %v598, 0
        %v610 = vunpack.c.l.b16 %v590
        %v611 = vunpack.c.l.b16 %v591
        %v612 = vunpack.c.l.b16 %v592
        %v613 = vunpack.c.l.b16 %v593
        %v614 = vunpack.c.l.b16 %v594
        %v615 = vunpack.c.l.b16 %v595
        %v616 = vunpack.c.l.b16 %v596
        %v617 = vunpack.c.l.b16 %v597
        %v618 = vpack.c.b16 %v611, %v610
        %v619 = vpack.c.b16 %v613, %v612
        %v620 = vpack.c.b16 %v615, %v614
        %v621 = vpack.c.b16 %v617, %v616
        %vm626 = vcmask 523264
        %v628 = vsel %vm626, %v589, 0
        %630 = vmatpush.bf16.msra.mxu0 0
        %631 = vmatpush.bf16.msra.mxu0 0
        %632 = vmatpush.bf16.msra.mxu0 0
        %633 = vmatpush.bf16.msra.mxu0 0
        %634 = vmatpush.bf16.msra.mxu0 %v621
        %635 = vmatpush.bf16.msra.mxu0 %v620
        %636 = vmatpush.bf16.msra.mxu0 %v619
        %637 = vmatpush.bf16.msra.mxu0 %v618
        %638 = vmatmul.bf16.gmra.mxu0 %v628
        %v639 = vpop.f32.mrf.mxu0
        %v640 = vadd.f32 %v600, %v639
        %v641 = vpop.f32.mrf.mxu0
        %v642 = vadd.f32 %v600, %v641
        %643 = vdwg.mxu0
        %v644 = vmax.f32 %v640, 0.0
        %v645 = vmax.f32 %v642, 0.0
        %v646 = vpack.c.bf16 %v645, %v644
        %v647 = vld [vmem:[#allocation3] sm:$0xff]
        %v648 = vld [vmem:[#allocation3 + $0x20] sm:$0xff]
        %v649 = vld [vmem:[#allocation3 + $0x40] sm:$0xff]
        %v650 = vld [vmem:[#allocation3 + $0x60] sm:$0xff]
        %v651 = vld [vmem:[#allocation3 + $0x80] sm:$0xff]
        %v652 = vld [vmem:[#allocation3 + $0xa0] sm:$0xff]
        %v653 = vld [vmem:[#allocation3 + $0xc0] sm:$0xff]
        %v654 = vld [vmem:[#allocation3 + $0xe0] sm:$0xff]
        %v655 = vld [vmem:[#allocation3 + $0x100] sm:$0xff]
        %v656 = vld [vmem:[#allocation3 + $0x120] sm:$0xff]
        %v657 = vld [vmem:[#allocation3 + $0x140] sm:$0xff]
        %v658 = vld [vmem:[#allocation3 + $0x160] sm:$0xff]
        %v659 = vld [vmem:[#allocation3 + $0x180] sm:$0xff]
        %v660 = vld [vmem:[#allocation3 + $0x1a0] sm:$0xff]
        %v661 = vld [vmem:[#allocation3 + $0x1c0] sm:$0xff]
        %v662 = vld [vmem:[#allocation3 + $0x1e0] sm:$0xff]
        %v679 = vunpack.c.l.b16 %v647
        %v680 = vunpack.c.h.b16 %v647
        %v681 = vunpack.c.l.b16 %v648
        %v682 = vunpack.c.h.b16 %v648
        %v683 = vunpack.c.l.b16 %v649
        %v684 = vunpack.c.h.b16 %v649
        %v685 = vunpack.c.l.b16 %v650
        %v686 = vunpack.c.h.b16 %v650
        %v687 = vunpack.c.l.b16 %v651
        %v688 = vunpack.c.h.b16 %v651
        %v689 = vunpack.c.l.b16 %v652
        %v690 = vunpack.c.h.b16 %v652
        %v691 = vunpack.c.l.b16 %v653
        %v692 = vunpack.c.h.b16 %v653
        %v693 = vunpack.c.l.b16 %v654
        %v694 = vunpack.c.h.b16 %v654
        %v695 = vunpack.c.l.b16 %v655
        %v696 = vunpack.c.h.b16 %v655
        %v697 = vunpack.c.l.b16 %v656
        %v698 = vunpack.c.h.b16 %v656
        %v699 = vunpack.c.l.b16 %v657
        %v700 = vunpack.c.h.b16 %v657
        %v701 = vunpack.c.l.b16 %v658
        %v702 = vunpack.c.h.b16 %v658
        %v703 = vunpack.c.l.b16 %v659
        %v704 = vunpack.c.h.b16 %v659
        %v705 = vunpack.c.l.b16 %v660
        %v706 = vunpack.c.h.b16 %v660
        %v707 = vunpack.c.l.b16 %v661
        %v708 = vunpack.c.h.b16 %v661
        %v709 = vunpack.c.l.b16 %v662
        %v710 = vunpack.c.h.b16 %v662
        %v711 = vpack.c.b16 %v681, %v679
        %v712 = vpack.c.b16 %v682, %v680
        %v713 = vpack.c.b16 %v685, %v683
        %v714 = vpack.c.b16 %v686, %v684
        %v715 = vpack.c.b16 %v689, %v687
        %v716 = vpack.c.b16 %v690, %v688
        %v717 = vpack.c.b16 %v693, %v691
        %v718 = vpack.c.b16 %v694, %v692
        %v719 = vpack.c.b16 %v697, %v695
        %v720 = vpack.c.b16 %v698, %v696
        %v721 = vpack.c.b16 %v701, %v699
        %v722 = vpack.c.b16 %v702, %v700
        %v723 = vpack.c.b16 %v705, %v703
        %v724 = vpack.c.b16 %v706, %v704
        %v725 = vpack.c.b16 %v709, %v707
        %v726 = vpack.c.b16 %v710, %v708
        %743 = vmatpush.bf16.msra.mxu0 %v725
        %744 = vmatpush.bf16.msra.mxu0 %v723
        %745 = vmatpush.bf16.msra.mxu0 %v721
        %746 = vmatpush.bf16.msra.mxu0 %v719
        %747 = vmatpush.bf16.msra.mxu0 %v717
        %748 = vmatpush.bf16.msra.mxu0 %v715
        %749 = vmatpush.bf16.msra.mxu0 %v713
        %750 = vmatpush.bf16.msra.mxu0 %v711
        %751 = vmatmul.bf16.gmra.mxu0 %v646
        %v752 = vpop.f32.mrf.mxu0
        %v753 = vadd.f32 0.0, %v752
        %v754 = vpop.f32.mrf.mxu0
        %v755 = vadd.f32 0.0, %v754
        %756 = vdwg.mxu0
        %757 = vmatpush.bf16.msra.mxu0 %v726
        %758 = vmatpush.bf16.msra.mxu0 %v724
        %759 = vmatpush.bf16.msra.mxu0 %v722
        %760 = vmatpush.bf16.msra.mxu0 %v720
        %761 = vmatpush.bf16.msra.mxu0 %v718
        %762 = vmatpush.bf16.msra.mxu0 %v716
        %763 = vmatpush.bf16.msra.mxu0 %v714
        %764 = vmatpush.bf16.msra.mxu0 %v712
        %765 = vmatmul.bf16.gmra.mxu0 %v646
        %v766 = vpop.f32.mrf.mxu0
        %v767 = vadd.f32 0.0, %v766
        %v768 = vpop.f32.mrf.mxu0
        %v769 = vadd.f32 0.0, %v768
        %770 = vdwg.mxu0
        %v771 = vld [vmem:[#allocation2] sm:$0x3]
        %v772 = vmax.f32 %v753, %v755
        %v773 = vrot.slane %v772, 4
        %v774 = vmax.f32 %v772, %v773
        %v775 = vrot.slane %v774, 2
        %v776 = vmax.f32 %v774, %v775
        %v777 = vrot.slane %v776, 1
        %v778 = vmax.f32 %v776, %v777
        %v779 = vmax.f32 %v767, %v769
        %v780 = vrot.slane %v779, 4
        %v781 = vmax.f32 %v779, %v780
        %v782 = vrot.slane %v781, 2
        %v783 = vmax.f32 %v781, %v782
        %v784 = vrot.slane %v783, 1
        %v785 = vmax.f32 %v783, %v784
        %v788 = vrot.slane %v785, 7
        %vm789 = vcmask 1040384
        %v790 = vsel %vm789, %v778, %v788
        %v792 = vmax.f32 %v771, %v790
        %v793 = vlaneseq
        %vm794 = vcmp.ge.s32.totalorder %v793, 0
        %vm795 = vcmp.lt.s32.totalorder %v793, 256
        %vm796 = vmand %vm794, %vm795
        %797 = vst.msk [vmem:[#allocation2] sm:$0x3] %vm796, %v792
        %v798 = vld [vmem:[#allocation3 + $0x8] sm:$0xff]
        %v799 = vld [vmem:[#allocation3 + $0x28] sm:$0xff]
        %v800 = vld [vmem:[#allocation3 + $0x48] sm:$0xff]
        %v801 = vld [vmem:[#allocation3 + $0x68] sm:$0xff]
        %v802 = vld [vmem:[#allocation3 + $0x88] sm:$0xff]
        %v803 = vld [vmem:[#allocation3 + $0xa8] sm:$0xff]
        %v804 = vld [vmem:[#allocation3 + $0xc8] sm:$0xff]
        %v805 = vld [vmem:[#allocation3 + $0xe8] sm:$0xff]
        %v806 = vld [vmem:[#allocation3 + $0x108] sm:$0xff]
        %v807 = vld [vmem:[#allocation3 + $0x128] sm:$0xff]
        %v808 = vld [vmem:[#allocation3 + $0x148] sm:$0xff]
        %v809 = vld [vmem:[#allocation3 + $0x168] sm:$0xff]
        %v810 = vld [vmem:[#allocation3 + $0x188] sm:$0xff]
        %v811 = vld [vmem:[#allocation3 + $0x1a8] sm:$0xff]
        %v812 = vld [vmem:[#allocation3 + $0x1c8] sm:$0xff]
        %v813 = vld [vmem:[#allocation3 + $0x1e8] sm:$0xff]
        %v830 = vunpack.c.l.b16 %v798
        %v831 = vunpack.c.h.b16 %v798
        %v832 = vunpack.c.l.b16 %v799
        %v833 = vunpack.c.h.b16 %v799
        %v834 = vunpack.c.l.b16 %v800
        %v835 = vunpack.c.h.b16 %v800
        %v836 = vunpack.c.l.b16 %v801
        %v837 = vunpack.c.h.b16 %v801
        %v838 = vunpack.c.l.b16 %v802
        %v839 = vunpack.c.h.b16 %v802
        %v840 = vunpack.c.l.b16 %v803
        %v841 = vunpack.c.h.b16 %v803
        %v842 = vunpack.c.l.b16 %v804
        %v843 = vunpack.c.h.b16 %v804
        %v844 = vunpack.c.l.b16 %v805
        %v845 = vunpack.c.h.b16 %v805
        %v846 = vunpack.c.l.b16 %v806
        %v847 = vunpack.c.h.b16 %v806
        %v848 = vunpack.c.l.b16 %v807
        %v849 = vunpack.c.h.b16 %v807
        %v850 = vunpack.c.l.b16 %v808
        %v851 = vunpack.c.h.b16 %v808
        %v852 = vunpack.c.l.b16 %v809
        %v853 = vunpack.c.h.b16 %v809
        %v854 = vunpack.c.l.b16 %v810
        %v855 = vunpack.c.h.b16 %v810
        %v856 = vunpack.c.l.b16 %v811
        %v857 = vunpack.c.h.b16 %v811
        %v858 = vunpack.c.l.b16 %v812
        %v859 = vunpack.c.h.b16 %v812
        %v860 = vunpack.c.l.b16 %v813
        %v861 = vunpack.c.h.b16 %v813
        %v862 = vpack.c.b16 %v832, %v830
        %v863 = vpack.c.b16 %v833, %v831
        %v864 = vpack.c.b16 %v836, %v834
        %v865 = vpack.c.b16 %v837, %v835
        %v866 = vpack.c.b16 %v840, %v838
        %v867 = vpack.c.b16 %v841, %v839
        %v868 = vpack.c.b16 %v844, %v842
        %v869 = vpack.c.b16 %v845, %v843
        %v870 = vpack.c.b16 %v848, %v846
        %v871 = vpack.c.b16 %v849, %v847
        %v872 = vpack.c.b16 %v852, %v850
        %v873 = vpack.c.b16 %v853, %v851
        %v874 = vpack.c.b16 %v856, %v854
        %v875 = vpack.c.b16 %v857, %v855
        %v876 = vpack.c.b16 %v860, %v858
        %v877 = vpack.c.b16 %v861, %v859
        %894 = vmatpush.bf16.msra.mxu0 %v876
        %895 = vmatpush.bf16.msra.mxu0 %v874
        %896 = vmatpush.bf16.msra.mxu0 %v872
        %897 = vmatpush.bf16.msra.mxu0 %v870
        %898 = vmatpush.bf16.msra.mxu0 %v868
        %899 = vmatpush.bf16.msra.mxu0 %v866
        %900 = vmatpush.bf16.msra.mxu0 %v864
        %901 = vmatpush.bf16.msra.mxu0 %v862
        %902 = vmatmul.bf16.gmra.mxu0 %v646
        %v903 = vpop.f32.mrf.mxu0
        %v904 = vadd.f32 0.0, %v903
        %v905 = vpop.f32.mrf.mxu0
        %v906 = vadd.f32 0.0, %v905
        %907 = vdwg.mxu0
        %908 = vmatpush.bf16.msra.mxu0 %v877
        %909 = vmatpush.bf16.msra.mxu0 %v875
        %910 = vmatpush.bf16.msra.mxu0 %v873
        %911 = vmatpush.bf16.msra.mxu0 %v871
        %912 = vmatpush.bf16.msra.mxu0 %v869
        %913 = vmatpush.bf16.msra.mxu0 %v867
        %914 = vmatpush.bf16.msra.mxu0 %v865
        %915 = vmatpush.bf16.msra.mxu0 %v863
        %916 = vmatmul.bf16.gmra.mxu0 %v646
        %v917 = vpop.f32.mrf.mxu0
        %v918 = vadd.f32 0.0, %v917
        %v919 = vpop.f32.mrf.mxu0
        %v920 = vadd.f32 0.0, %v919
        %921 = vdwg.mxu0
        %v922 = vld [vmem:[#allocation2 + $0x2] sm:$0x3]
        %v923 = vmax.f32 %v904, %v906
        %v924 = vrot.slane %v923, 4
        %v925 = vmax.f32 %v923, %v924
        %v926 = vrot.slane %v925, 2
        %v927 = vmax.f32 %v925, %v926
        %v928 = vrot.slane %v927, 1
        %v929 = vmax.f32 %v927, %v928
        %v930 = vmax.f32 %v918, %v920
        %v931 = vrot.slane %v930, 4
        %v932 = vmax.f32 %v930, %v931
        %v933 = vrot.slane %v932, 2
        %v934 = vmax.f32 %v932, %v933
        %v935 = vrot.slane %v934, 1
        %v936 = vmax.f32 %v934, %v935
        %v939 = vrot.slane %v936, 7
        %v940 = vsel %vm789, %v929, %v939
        %v942 = vmax.f32 %v922, %v940
        %943 = vst.msk [vmem:[#allocation2 + $0x2] sm:$0x3] %vm796, %v942
        %v944 = vld [vmem:[#allocation3 + $0x10] sm:$0xff]
        %v945 = vld [vmem:[#allocation3 + $0x30] sm:$0xff]
        %v946 = vld [vmem:[#allocation3 + $0x50] sm:$0xff]
        %v947 = vld [vmem:[#allocation3 + $0x70] sm:$0xff]
        %v948 = vld [vmem:[#allocation3 + $0x90] sm:$0xff]
        %v949 = vld [vmem:[#allocation3 + $0xb0] sm:$0xff]
        %v950 = vld [vmem:[#allocation3 + $0xd0] sm:$0xff]
        %v951 = vld [vmem:[#allocation3 + $0xf0] sm:$0xff]
        %v952 = vld [vmem:[#allocation3 + $0x110] sm:$0xff]
        %v953 = vld [vmem:[#allocation3 + $0x130] sm:$0xff]
        %v954 = vld [vmem:[#allocation3 + $0x150] sm:$0xff]
        %v955 = vld [vmem:[#allocation3 + $0x170] sm:$0xff]
        %v956 = vld [vmem:[#allocation3 + $0x190] sm:$0xff]
        %v957 = vld [vmem:[#allocation3 + $0x1b0] sm:$0xff]
        %v958 = vld [vmem:[#allocation3 + $0x1d0] sm:$0xff]
        %v959 = vld [vmem:[#allocation3 + $0x1f0] sm:$0xff]
        %v976 = vunpack.c.l.b16 %v944
        %v977 = vunpack.c.h.b16 %v944
        %v978 = vunpack.c.l.b16 %v945
        %v979 = vunpack.c.h.b16 %v945
        %v980 = vunpack.c.l.b16 %v946
        %v981 = vunpack.c.h.b16 %v946
        %v982 = vunpack.c.l.b16 %v947
        %v983 = vunpack.c.h.b16 %v947
        %v984 = vunpack.c.l.b16 %v948
        %v985 = vunpack.c.h.b16 %v948
        %v986 = vunpack.c.l.b16 %v949
        %v987 = vunpack.c.h.b16 %v949
        %v988 = vunpack.c.l.b16 %v950
        %v989 = vunpack.c.h.b16 %v950
        %v990 = vunpack.c.l.b16 %v951
        %v991 = vunpack.c.h.b16 %v951
        %v992 = vunpack.c.l.b16 %v952
        %v993 = vunpack.c.h.b16 %v952
        %v994 = vunpack.c.l.b16 %v953
        %v995 = vunpack.c.h.b16 %v953
        %v996 = vunpack.c.l.b16 %v954
        %v997 = vunpack.c.h.b16 %v954
        %v998 = vunpack.c.l.b16 %v955
        %v999 = vunpack.c.h.b16 %v955
        %v1000 = vunpack.c.l.b16 %v956
        %v1001 = vunpack.c.h.b16 %v956
        %v1002 = vunpack.c.l.b16 %v957
        %v1003 = vunpack.c.h.b16 %v957
        %v1004 = vunpack.c.l.b16 %v958
        %v1005 = vunpack.c.h.b16 %v958
        %v1006 = vunpack.c.l.b16 %v959
        %v1007 = vunpack.c.h.b16 %v959
        %v1008 = vpack.c.b16 %v978, %v976
        %v1009 = vpack.c.b16 %v979, %v977
        %v1010 = vpack.c.b16 %v982, %v980
        %v1011 = vpack.c.b16 %v983, %v981
        %v1012 = vpack.c.b16 %v986, %v984
        %v1013 = vpack.c.b16 %v987, %v985
        %v1014 = vpack.c.b16 %v990, %v988
        %v1015 = vpack.c.b16 %v991, %v989
        %v1016 = vpack.c.b16 %v994, %v992
        %v1017 = vpack.c.b16 %v995, %v993
        %v1018 = vpack.c.b16 %v998, %v996
        %v1019 = vpack.c.b16 %v999, %v997
        %v1020 = vpack.c.b16 %v1002, %v1000
        %v1021 = vpack.c.b16 %v1003, %v1001
        %v1022 = vpack.c.b16 %v1006, %v1004
        %v1023 = vpack.c.b16 %v1007, %v1005
        %1040 = vmatpush.bf16.msra.mxu0 %v1022
        %1041 = vmatpush.bf16.msra.mxu0 %v1020
        %1042 = vmatpush.bf16.msra.mxu0 %v1018
        %1043 = vmatpush.bf16.msra.mxu0 %v1016
        %1044 = vmatpush.bf16.msra.mxu0 %v1014
        %1045 = vmatpush.bf16.msra.mxu0 %v1012
        %1046 = vmatpush.bf16.msra.mxu0 %v1010
        %1047 = vmatpush.bf16.msra.mxu0 %v1008
        %1048 = vmatmul.bf16.gmra.mxu0 %v646
        %v1049 = vpop.f32.mrf.mxu0
        %v1050 = vadd.f32 0.0, %v1049
        %v1051 = vpop.f32.mrf.mxu0
        %v1052 = vadd.f32 0.0, %v1051
        %1053 = vdwg.mxu0
        %1054 = vmatpush.bf16.msra.mxu0 %v1023
        %1055 = vmatpush.bf16.msra.mxu0 %v1021
        %1056 = vmatpush.bf16.msra.mxu0 %v1019
        %1057 = vmatpush.bf16.msra.mxu0 %v1017
        %1058 = vmatpush.bf16.msra.mxu0 %v1015
        %1059 = vmatpush.bf16.msra.mxu0 %v1013
        %1060 = vmatpush.bf16.msra.mxu0 %v1011
        %1061 = vmatpush.bf16.msra.mxu0 %v1009
        %1062 = vmatmul.bf16.gmra.mxu0 %v646
        %v1063 = vpop.f32.mrf.mxu0
        %v1064 = vadd.f32 0.0, %v1063
        %v1065 = vpop.f32.mrf.mxu0
        %v1066 = vadd.f32 0.0, %v1065
        %1067 = vdwg.mxu0
        %v1068 = vld [vmem:[#allocation2 + $0x4] sm:$0x3]
        %v1069 = vmax.f32 %v1050, %v1052
        %v1070 = vrot.slane %v1069, 4
        %v1071 = vmax.f32 %v1069, %v1070
        %v1072 = vrot.slane %v1071, 2
        %v1073 = vmax.f32 %v1071, %v1072
        %v1074 = vrot.slane %v1073, 1
        %v1075 = vmax.f32 %v1073, %v1074
        %v1076 = vmax.f32 %v1064, %v1066
        %v1077 = vrot.slane %v1076, 4
        %v1078 = vmax.f32 %v1076, %v1077
        %v1079 = vrot.slane %v1078, 2
        %v1080 = vmax.f32 %v1078, %v1079
        %v1081 = vrot.slane %v1080, 1
        %v1082 = vmax.f32 %v1080, %v1081
        %v1085 = vrot.slane %v1082, 7
        %v1086 = vsel %vm789, %v1075, %v1085
        %v1088 = vmax.f32 %v1068, %v1086
        %1089 = vst.msk [vmem:[#allocation2 + $0x4] sm:$0x3] %vm796, %v1088
        %v1090 = vld [vmem:[#allocation3 + $0x18] sm:$0xff]
        %v1091 = vld [vmem:[#allocation3 + $0x38] sm:$0xff]
        %v1092 = vld [vmem:[#allocation3 + $0x58] sm:$0xff]
        %v1093 = vld [vmem:[#allocation3 + $0x78] sm:$0xff]
        %v1094 = vld [vmem:[#allocation3 + $0x98] sm:$0xff]
        %v1095 = vld [vmem:[#allocation3 + $0xb8] sm:$0xff]
        %v1096 = vld [vmem:[#allocation3 + $0xd8] sm:$0xff]
        %v1097 = vld [vmem:[#allocation3 + $0xf8] sm:$0xff]
        %v1098 = vld [vmem:[#allocation3 + $0x118] sm:$0xff]
        %v1099 = vld [vmem:[#allocation3 + $0x138] sm:$0xff]
        %v1100 = vld [vmem:[#allocation3 + $0x158] sm:$0xff]
        %v1101 = vld [vmem:[#allocation3 + $0x178] sm:$0xff]
        %v1102 = vld [vmem:[#allocation3 + $0x198] sm:$0xff]
        %v1103 = vld [vmem:[#allocation3 + $0x1b8] sm:$0xff]
        %v1104 = vld [vmem:[#allocation3 + $0x1d8] sm:$0xff]
        %v1105 = vld [vmem:[#allocation3 + $0x1f8] sm:$0xff]
        %v1122 = vunpack.c.l.b16 %v1090
        %v1123 = vunpack.c.h.b16 %v1090
        %v1124 = vunpack.c.l.b16 %v1091
        %v1125 = vunpack.c.h.b16 %v1091
        %v1126 = vunpack.c.l.b16 %v1092
        %v1127 = vunpack.c.h.b16 %v1092
        %v1128 = vunpack.c.l.b16 %v1093
        %v1129 = vunpack.c.h.b16 %v1093
        %v1130 = vunpack.c.l.b16 %v1094
        %v1131 = vunpack.c.h.b16 %v1094
        %v1132 = vunpack.c.l.b16 %v1095
        %v1133 = vunpack.c.h.b16 %v1095
        %v1134 = vunpack.c.l.b16 %v1096
        %v1135 = vunpack.c.h.b16 %v1096
        %v1136 = vunpack.c.l.b16 %v1097
        %v1137 = vunpack.c.h.b16 %v1097
        %v1138 = vunpack.c.l.b16 %v1098
        %v1139 = vunpack.c.h.b16 %v1098
        %v1140 = vunpack.c.l.b16 %v1099
        %v1141 = vunpack.c.h.b16 %v1099
        %v1142 = vunpack.c.l.b16 %v1100
        %v1143 = vunpack.c.h.b16 %v1100
        %v1144 = vunpack.c.l.b16 %v1101
        %v1145 = vunpack.c.h.b16 %v1101
        %v1146 = vunpack.c.l.b16 %v1102
        %v1147 = vunpack.c.h.b16 %v1102
        %v1148 = vunpack.c.l.b16 %v1103
        %v1149 = vunpack.c.h.b16 %v1103
        %v1150 = vunpack.c.l.b16 %v1104
        %v1151 = vunpack.c.h.b16 %v1104
        %v1152 = vunpack.c.l.b16 %v1105
        %v1153 = vunpack.c.h.b16 %v1105
        %v1154 = vpack.c.b16 %v1124, %v1122
        %v1155 = vpack.c.b16 %v1125, %v1123
        %v1156 = vpack.c.b16 %v1128, %v1126
        %v1157 = vpack.c.b16 %v1129, %v1127
        %v1158 = vpack.c.b16 %v1132, %v1130
        %v1159 = vpack.c.b16 %v1133, %v1131
        %v1160 = vpack.c.b16 %v1136, %v1134
        %v1161 = vpack.c.b16 %v1137, %v1135
        %v1162 = vpack.c.b16 %v1140, %v1138
        %v1163 = vpack.c.b16 %v1141, %v1139
        %v1164 = vpack.c.b16 %v1144, %v1142
        %v1165 = vpack.c.b16 %v1145, %v1143
        %v1166 = vpack.c.b16 %v1148, %v1146
        %v1167 = vpack.c.b16 %v1149, %v1147
        %v1168 = vpack.c.b16 %v1152, %v1150
        %v1169 = vpack.c.b16 %v1153, %v1151
        %1186 = vmatpush.bf16.msra.mxu0 %v1168
        %1187 = vmatpush.bf16.msra.mxu0 %v1166
        %1188 = vmatpush.bf16.msra.mxu0 %v1164
        %1189 = vmatpush.bf16.msra.mxu0 %v1162
        %1190 = vmatpush.bf16.msra.mxu0 %v1160
        %1191 = vmatpush.bf16.msra.mxu0 %v1158
        %1192 = vmatpush.bf16.msra.mxu0 %v1156
        %1193 = vmatpush.bf16.msra.mxu0 %v1154
        %1194 = vmatmul.bf16.gmra.mxu0 %v646
        %v1195 = vpop.f32.mrf.mxu0
        %v1196 = vadd.f32 0.0, %v1195
        %v1197 = vpop.f32.mrf.mxu0
        %v1198 = vadd.f32 0.0, %v1197
        %1199 = vdwg.mxu0
        %1200 = vmatpush.bf16.msra.mxu0 %v1169
        %1201 = vmatpush.bf16.msra.mxu0 %v1167
        %1202 = vmatpush.bf16.msra.mxu0 %v1165
        %1203 = vmatpush.bf16.msra.mxu0 %v1163
        %1204 = vmatpush.bf16.msra.mxu0 %v1161
        %1205 = vmatpush.bf16.msra.mxu0 %v1159
        %1206 = vmatpush.bf16.msra.mxu0 %v1157
        %1207 = vmatpush.bf16.msra.mxu0 %v1155
        %1208 = vmatmul.bf16.gmra.mxu0 %v646
        %v1209 = vpop.f32.mrf.mxu0
        %v1210 = vadd.f32 0.0, %v1209
        %v1211 = vpop.f32.mrf.mxu0
        %v1212 = vadd.f32 0.0, %v1211
        %1213 = vdwg.mxu0
        %v1214 = vld [vmem:[#allocation2 + $0x6] sm:$0x3]
        %v1215 = vmax.f32 %v1196, %v1198
        %v1216 = vrot.slane %v1215, 4
        %v1217 = vmax.f32 %v1215, %v1216
        %v1218 = vrot.slane %v1217, 2
        %v1219 = vmax.f32 %v1217, %v1218
        %v1220 = vrot.slane %v1219, 1
        %v1221 = vmax.f32 %v1219, %v1220
        %v1222 = vmax.f32 %v1210, %v1212
        %v1223 = vrot.slane %v1222, 4
        %v1224 = vmax.f32 %v1222, %v1223
        %v1225 = vrot.slane %v1224, 2
        %v1226 = vmax.f32 %v1224, %v1225
        %v1227 = vrot.slane %v1226, 1
        %v1228 = vmax.f32 %v1226, %v1227
        %v1231 = vrot.slane %v1228, 7
        %v1232 = vsel %vm789, %v1221, %v1231
        %v1234 = vmax.f32 %v1214, %v1232
        %1235 = vst.msk [vmem:[#allocation2 + $0x6] sm:$0x3] %vm796, %v1234
        // Predicated region
        $region89: #{tnet_forward.1} parent=71 // pred_check
          %p1236 = pneg %p516
        $region90: #{tnet_forward.1} parent=71 // pred_check_branch
          %1238 = sbr.rel (%p1236) target = $region92
        $region91: #{tnet_forward.1} parent=71 // pred_region
          %v1239 = vld [vmem:[#allocation2] sm:$0xff]
          %v1240 = vld [vmem:[%s6] sm:$0xff]
          %v1241 = vadd.f32 %v1239, %v1240
          %v1243 = vperm.slane %v1241, 0
          %v1244 = vperm.slane %v1241, 1
          %v1245 = vperm.slane %v1241, 2
          %v1246 = vperm.slane %v1241, 3
          %v1247 = vperm.slane %v1241, 4
          %v1248 = vperm.slane %v1241, 5
          %v1249 = vperm.slane %v1241, 6
          %v1250 = vperm.slane %v1241, 7
          %v1259 = vpack.c.bf16 %v1243, %v1243
          %v1260 = vpack.c.bf16 %v1244, %v1244
          %v1261 = vpack.c.bf16 %v1245, %v1245
          %v1262 = vpack.c.bf16 %v1246, %v1246
          %v1263 = vpack.c.bf16 %v1247, %v1247
          %v1264 = vpack.c.bf16 %v1248, %v1248
          %v1265 = vpack.c.bf16 %v1249, %v1249
          %v1266 = vpack.c.bf16 %v1250, %v1250
          %v1267 = vld [vmem:[#allocation5] sm:$0xff]
          %v1268 = vld [vmem:[#allocation5 + $0x8] sm:$0xff]
          %v1269 = vld [vmem:[#allocation5 + $0x10] sm:$0xff]
          %v1270 = vld [vmem:[#allocation5 + $0x18] sm:$0xff]
          %v1271 = vld [vmem:[#allocation5 + $0x20] sm:$0xff]
          %v1272 = vld [vmem:[#allocation5 + $0x28] sm:$0xff]
          %v1273 = vld [vmem:[#allocation5 + $0x30] sm:$0xff]
          %v1274 = vld [vmem:[#allocation5 + $0x38] sm:$0xff]
          %v1275 = vld [vmem:[#allocation5 + $0x40] sm:$0xff]
          %v1276 = vld [vmem:[#allocation5 + $0x48] sm:$0xff]
          %v1277 = vld [vmem:[#allocation5 + $0x50] sm:$0xff]
          %v1278 = vld [vmem:[#allocation5 + $0x58] sm:$0xff]
          %v1279 = vld [vmem:[#allocation5 + $0x60] sm:$0xff]
          %v1280 = vld [vmem:[#allocation5 + $0x68] sm:$0xff]
          %v1281 = vld [vmem:[#allocation5 + $0x70] sm:$0xff]
          %v1282 = vld [vmem:[#allocation5 + $0x78] sm:$0xff]
          %v1283 = vld [vmem:[#allocation5 + $0x80] sm:$0xff]
          %v1284 = vld [vmem:[#allocation5 + $0x88] sm:$0xff]
          %v1285 = vld [vmem:[#allocation5 + $0x90] sm:$0xff]
          %v1286 = vld [vmem:[#allocation5 + $0x98] sm:$0xff]
          %v1287 = vld [vmem:[#allocation5 + $0xa0] sm:$0xff]
          %v1288 = vld [vmem:[#allocation5 + $0xa8] sm:$0xff]
          %v1289 = vld [vmem:[#allocation5 + $0xb0] sm:$0xff]
          %v1290 = vld [vmem:[#allocation5 + $0xb8] sm:$0xff]
          %v1291 = vld [vmem:[#allocation5 + $0xc0] sm:$0xff]
          %v1292 = vld [vmem:[#allocation5 + $0xc8] sm:$0xff]
          %v1293 = vld [vmem:[#allocation5 + $0xd0] sm:$0xff]
          %v1294 = vld [vmem:[#allocation5 + $0xd8] sm:$0xff]
          %v1295 = vld [vmem:[#allocation5 + $0xe0] sm:$0xff]
          %v1296 = vld [vmem:[#allocation5 + $0xe8] sm:$0xff]
          %v1297 = vld [vmem:[#allocation5 + $0xf0] sm:$0xff]
          %v1298 = vld [vmem:[#allocation5 + $0xf8] sm:$0xff]
          %v1299 = vld [vmem:[#allocation5 + $0x100] sm:$0xff]
          %v1300 = vld [vmem:[#allocation5 + $0x108] sm:$0xff]
          %v1301 = vld [vmem:[#allocation5 + $0x110] sm:$0xff]
          %v1302 = vld [vmem:[#allocation5 + $0x118] sm:$0xff]
          %v1303 = vld [vmem:[#allocation5 + $0x120] sm:$0xff]
          %v1304 = vld [vmem:[#allocation5 + $0x128] sm:$0xff]
          %v1305 = vld [vmem:[#allocation5 + $0x130] sm:$0xff]
          %v1306 = vld [vmem:[#allocation5 + $0x138] sm:$0xff]
          %v1307 = vld [vmem:[#allocation5 + $0x140] sm:$0xff]
          %v1308 = vld [vmem:[#allocation5 + $0x148] sm:$0xff]
          %v1309 = vld [vmem:[#allocation5 + $0x150] sm:$0xff]
          %v1310 = vld [vmem:[#allocation5 + $0x158] sm:$0xff]
          %v1311 = vld [vmem:[#allocation5 + $0x160] sm:$0xff]
          %v1312 = vld [vmem:[#allocation5 + $0x168] sm:$0xff]
          %v1313 = vld [vmem:[#allocation5 + $0x170] sm:$0xff]
          %v1314 = vld [vmem:[#allocation5 + $0x178] sm:$0xff]
          %v1315 = vld [vmem:[#allocation5 + $0x180] sm:$0xff]
          %v1316 = vld [vmem:[#allocation5 + $0x188] sm:$0xff]
          %v1317 = vld [vmem:[#allocation5 + $0x190] sm:$0xff]
          %v1318 = vld [vmem:[#allocation5 + $0x198] sm:$0xff]
          %v1319 = vld [vmem:[#allocation5 + $0x1a0] sm:$0xff]
          %v1320 = vld [vmem:[#allocation5 + $0x1a8] sm:$0xff]
          %v1321 = vld [vmem:[#allocation5 + $0x1b0] sm:$0xff]
          %v1322 = vld [vmem:[#allocation5 + $0x1b8] sm:$0xff]
          %v1323 = vld [vmem:[#allocation5 + $0x1c0] sm:$0xff]
          %v1324 = vld [vmem:[#allocation5 + $0x1c8] sm:$0xff]
          %v1325 = vld [vmem:[#allocation5 + $0x1d0] sm:$0xff]
          %v1326 = vld [vmem:[#allocation5 + $0x1d8] sm:$0xff]
          %v1327 = vld [vmem:[#allocation5 + $0x1e0] sm:$0xff]
          %v1328 = vld [vmem:[#allocation5 + $0x1e8] sm:$0xff]
          %v1329 = vld [vmem:[#allocation5 + $0x1f0] sm:$0xff]
          %v1330 = vld [vmem:[#allocation5 + $0x1f8] sm:$0xff]
          %v1331 = vld [vmem:[#allocation5 + $0x200] sm:$0xff]
          %v1332 = vld [vmem:[#allocation5 + $0x208] sm:$0xff]
          %v1333 = vld [vmem:[#allocation5 + $0x210] sm:$0xff]
          %v1334 = vld [vmem:[#allocation5 + $0x218] sm:$0xff]
          %v1335 = vld [vmem:[#allocation5 + $0x220] sm:$0xff]
          %v1336 = vld [vmem:[#allocation5 + $0x228] sm:$0xff]
          %v1337 = vld [vmem:[#allocation5 + $0x230] sm:$0xff]
          %v1338 = vld [vmem:[#allocation5 + $0x238] sm:$0xff]
          %v1339 = vld [vmem:[#allocation5 + $0x240] sm:$0xff]
          %v1340 = vld [vmem:[#allocation5 + $0x248] sm:$0xff]
          %v1341 = vld [vmem:[#allocation5 + $0x250] sm:$0xff]
          %v1342 = vld [vmem:[#allocation5 + $0x258] sm:$0xff]
          %v1343 = vld [vmem:[#allocation5 + $0x260] sm:$0xff]
          %v1344 = vld [vmem:[#allocation5 + $0x268] sm:$0xff]
          %v1345 = vld [vmem:[#allocation5 + $0x270] sm:$0xff]
          %v1346 = vld [vmem:[#allocation5 + $0x278] sm:$0xff]
          %v1347 = vld [vmem:[#allocation5 + $0x280] sm:$0xff]
          %v1348 = vld [vmem:[#allocation5 + $0x288] sm:$0xff]
          %v1349 = vld [vmem:[#allocation5 + $0x290] sm:$0xff]
          %v1350 = vld [vmem:[#allocation5 + $0x298] sm:$0xff]
          %v1351 = vld [vmem:[#allocation5 + $0x2a0] sm:$0xff]
          %v1352 = vld [vmem:[#allocation5 + $0x2a8] sm:$0xff]
          %v1353 = vld [vmem:[#allocation5 + $0x2b0] sm:$0xff]
          %v1354 = vld [vmem:[#allocation5 + $0x2b8] sm:$0xff]
          %v1355 = vld [vmem:[#allocation5 + $0x2c0] sm:$0xff]
          %v1356 = vld [vmem:[#allocation5 + $0x2c8] sm:$0xff]
          %v1357 = vld [vmem:[#allocation5 + $0x2d0] sm:$0xff]
          %v1358 = vld [vmem:[#allocation5 + $0x2d8] sm:$0xff]
          %v1359 = vld [vmem:[#allocation5 + $0x2e0] sm:$0xff]
          %v1360 = vld [vmem:[#allocation5 + $0x2e8] sm:$0xff]
          %v1361 = vld [vmem:[#allocation5 + $0x2f0] sm:$0xff]
          %v1362 = vld [vmem:[#allocation5 + $0x2f8] sm:$0xff]
          %v1363 = vld [vmem:[#allocation5 + $0x300] sm:$0xff]
          %v1364 = vld [vmem:[#allocation5 + $0x308] sm:$0xff]
          %v1365 = vld [vmem:[#allocation5 + $0x310] sm:$0xff]
          %v1366 = vld [vmem:[#allocation5 + $0x318] sm:$0xff]
          %v1367 = vld [vmem:[#allocation5 + $0x320] sm:$0xff]
          %v1368 = vld [vmem:[#allocation5 + $0x328] sm:$0xff]
          %v1369 = vld [vmem:[#allocation5 + $0x330] sm:$0xff]
          %v1370 = vld [vmem:[#allocation5 + $0x338] sm:$0xff]
          %v1371 = vld [vmem:[#allocation5 + $0x340] sm:$0xff]
          %v1372 = vld [vmem:[#allocation5 + $0x348] sm:$0xff]
          %v1373 = vld [vmem:[#allocation5 + $0x350] sm:$0xff]
          %v1374 = vld [vmem:[#allocation5 + $0x358] sm:$0xff]
          %v1375 = vld [vmem:[#allocation5 + $0x360] sm:$0xff]
          %v1376 = vld [vmem:[#allocation5 + $0x368] sm:$0xff]
          %v1377 = vld [vmem:[#allocation5 + $0x370] sm:$0xff]
          %v1378 = vld [vmem:[#allocation5 + $0x378] sm:$0xff]
          %v1379 = vld [vmem:[#allocation5 + $0x380] sm:$0xff]
          %v1380 = vld [vmem:[#allocation5 + $0x388] sm:$0xff]
          %v1381 = vld [vmem:[#allocation5 + $0x390] sm:$0xff]
          %v1382 = vld [vmem:[#allocation5 + $0x398] sm:$0xff]
          %v1383 = vld [vmem:[#allocation5 + $0x3a0] sm:$0xff]
          %v1384 = vld [vmem:[#allocation5 + $0x3a8] sm:$0xff]
          %v1385 = vld [vmem:[#allocation5 + $0x3b0] sm:$0xff]
          %v1386 = vld [vmem:[#allocation5 + $0x3b8] sm:$0xff]
          %v1387 = vld [vmem:[#allocation5 + $0x3c0] sm:$0xff]
          %v1388 = vld [vmem:[#allocation5 + $0x3c8] sm:$0xff]
          %v1389 = vld [vmem:[#allocation5 + $0x3d0] sm:$0xff]
          %v1390 = vld [vmem:[#allocation5 + $0x3d8] sm:$0xff]
          %v1391 = vld [vmem:[#allocation5 + $0x3e0] sm:$0xff]
          %v1392 = vld [vmem:[#allocation5 + $0x3e8] sm:$0xff]
          %v1393 = vld [vmem:[#allocation5 + $0x3f0] sm:$0xff]
          %v1394 = vld [vmem:[#allocation5 + $0x3f8] sm:$0xff]
          %v1395 = vld [vmem:[#allocation5 + $0x400] sm:$0xff]
          %v1396 = vld [vmem:[#allocation5 + $0x408] sm:$0xff]
          %v1397 = vld [vmem:[#allocation5 + $0x410] sm:$0xff]
          %v1398 = vld [vmem:[#allocation5 + $0x418] sm:$0xff]
          %v1399 = vld [vmem:[#allocation5 + $0x420] sm:$0xff]
          %v1400 = vld [vmem:[#allocation5 + $0x428] sm:$0xff]
          %v1401 = vld [vmem:[#allocation5 + $0x430] sm:$0xff]
          %v1402 = vld [vmem:[#allocation5 + $0x438] sm:$0xff]
          %v1403 = vld [vmem:[#allocation5 + $0x440] sm:$0xff]
          %v1404 = vld [vmem:[#allocation5 + $0x448] sm:$0xff]
          %v1405 = vld [vmem:[#allocation5 + $0x450] sm:$0xff]
          %v1406 = vld [vmem:[#allocation5 + $0x458] sm:$0xff]
          %v1407 = vld [vmem:[#allocation5 + $0x460] sm:$0xff]
          %v1408 = vld [vmem:[#allocation5 + $0x468] sm:$0xff]
          %v1409 = vld [vmem:[#allocation5 + $0x470] sm:$0xff]
          %v1410 = vld [vmem:[#allocation5 + $0x478] sm:$0xff]
          %v1411 = vld [vmem:[#allocation5 + $0x480] sm:$0xff]
          %v1412 = vld [vmem:[#allocation5 + $0x488] sm:$0xff]
          %v1413 = vld [vmem:[#allocation5 + $0x490] sm:$0xff]
          %v1414 = vld [vmem:[#allocation5 + $0x498] sm:$0xff]
          %v1415 = vld [vmem:[#allocation5 + $0x4a0] sm:$0xff]
          %v1416 = vld [vmem:[#allocation5 + $0x4a8] sm:$0xff]
          %v1417 = vld [vmem:[#allocation5 + $0x4b0] sm:$0xff]
          %v1418 = vld [vmem:[#allocation5 + $0x4b8] sm:$0xff]
          %v1419 = vld [vmem:[#allocation5 + $0x4c0] sm:$0xff]
          %v1420 = vld [vmem:[#allocation5 + $0x4c8] sm:$0xff]
          %v1421 = vld [vmem:[#allocation5 + $0x4d0] sm:$0xff]
          %v1422 = vld [vmem:[#allocation5 + $0x4d8] sm:$0xff]
          %v1423 = vld [vmem:[#allocation5 + $0x4e0] sm:$0xff]
          %v1424 = vld [vmem:[#allocation5 + $0x4e8] sm:$0xff]
          %v1425 = vld [vmem:[#allocation5 + $0x4f0] sm:$0xff]
          %v1426 = vld [vmem:[#allocation5 + $0x4f8] sm:$0xff]
          %v1427 = vld [vmem:[#allocation5 + $0x500] sm:$0xff]
          %v1428 = vld [vmem:[#allocation5 + $0x508] sm:$0xff]
          %v1429 = vld [vmem:[#allocation5 + $0x510] sm:$0xff]
          %v1430 = vld [vmem:[#allocation5 + $0x518] sm:$0xff]
          %v1431 = vld [vmem:[#allocation5 + $0x520] sm:$0xff]
          %v1432 = vld [vmem:[#allocation5 + $0x528] sm:$0xff]
          %v1433 = vld [vmem:[#allocation5 + $0x530] sm:$0xff]
          %v1434 = vld [vmem:[#allocation5 + $0x538] sm:$0xff]
          %v1435 = vld [vmem:[#allocation5 + $0x540] sm:$0xff]
          %v1436 = vld [vmem:[#allocation5 + $0x548] sm:$0xff]
          %v1437 = vld [vmem:[#allocation5 + $0x550] sm:$0xff]
          %v1438 = vld [vmem:[#allocation5 + $0x558] sm:$0xff]
          %v1439 = vld [vmem:[#allocation5 + $0x560] sm:$0xff]
          %v1440 = vld [vmem:[#allocation5 + $0x568] sm:$0xff]
          %v1441 = vld [vmem:[#allocation5 + $0x570] sm:$0xff]
          %v1442 = vld [vmem:[#allocation5 + $0x578] sm:$0xff]
          %v1443 = vld [vmem:[#allocation5 + $0x580] sm:$0xff]
          %v1444 = vld [vmem:[#allocation5 + $0x588] sm:$0xff]
          %v1445 = vld [vmem:[#allocation5 + $0x590] sm:$0xff]
          %v1446 = vld [vmem:[#allocation5 + $0x598] sm:$0xff]
          %v1447 = vld [vmem:[#allocation5 + $0x5a0] sm:$0xff]
          %v1448 = vld [vmem:[#allocation5 + $0x5a8] sm:$0xff]
          %v1449 = vld [vmem:[#allocation5 + $0x5b0] sm:$0xff]
          %v1450 = vld [vmem:[#allocation5 + $0x5b8] sm:$0xff]
          %v1451 = vld [vmem:[#allocation5 + $0x5c0] sm:$0xff]
          %v1452 = vld [vmem:[#allocation5 + $0x5c8] sm:$0xff]
          %v1453 = vld [vmem:[#allocation5 + $0x5d0] sm:$0xff]
          %v1454 = vld [vmem:[#allocation5 + $0x5d8] sm:$0xff]
          %v1455 = vld [vmem:[#allocation5 + $0x5e0] sm:$0xff]
          %v1456 = vld [vmem:[#allocation5 + $0x5e8] sm:$0xff]
          %v1457 = vld [vmem:[#allocation5 + $0x5f0] sm:$0xff]
          %v1458 = vld [vmem:[#allocation5 + $0x5f8] sm:$0xff]
          %v1459 = vld [vmem:[#allocation5 + $0x600] sm:$0xff]
          %v1460 = vld [vmem:[#allocation5 + $0x608] sm:$0xff]
          %v1461 = vld [vmem:[#allocation5 + $0x610] sm:$0xff]
          %v1462 = vld [vmem:[#allocation5 + $0x618] sm:$0xff]
          %v1463 = vld [vmem:[#allocation5 + $0x620] sm:$0xff]
          %v1464 = vld [vmem:[#allocation5 + $0x628] sm:$0xff]
          %v1465 = vld [vmem:[#allocation5 + $0x630] sm:$0xff]
          %v1466 = vld [vmem:[#allocation5 + $0x638] sm:$0xff]
          %v1467 = vld [vmem:[#allocation5 + $0x640] sm:$0xff]
          %v1468 = vld [vmem:[#allocation5 + $0x648] sm:$0xff]
          %v1469 = vld [vmem:[#allocation5 + $0x650] sm:$0xff]
          %v1470 = vld [vmem:[#allocation5 + $0x658] sm:$0xff]
          %v1471 = vld [vmem:[#allocation5 + $0x660] sm:$0xff]
          %v1472 = vld [vmem:[#allocation5 + $0x668] sm:$0xff]
          %v1473 = vld [vmem:[#allocation5 + $0x670] sm:$0xff]
          %v1474 = vld [vmem:[#allocation5 + $0x678] sm:$0xff]
          %v1475 = vld [vmem:[#allocation5 + $0x680] sm:$0xff]
          %v1476 = vld [vmem:[#allocation5 + $0x688] sm:$0xff]
          %v1477 = vld [vmem:[#allocation5 + $0x690] sm:$0xff]
          %v1478 = vld [vmem:[#allocation5 + $0x698] sm:$0xff]
          %v1479 = vld [vmem:[#allocation5 + $0x6a0] sm:$0xff]
          %v1480 = vld [vmem:[#allocation5 + $0x6a8] sm:$0xff]
          %v1481 = vld [vmem:[#allocation5 + $0x6b0] sm:$0xff]
          %v1482 = vld [vmem:[#allocation5 + $0x6b8] sm:$0xff]
          %v1483 = vld [vmem:[#allocation5 + $0x6c0] sm:$0xff]
          %v1484 = vld [vmem:[#allocation5 + $0x6c8] sm:$0xff]
          %v1485 = vld [vmem:[#allocation5 + $0x6d0] sm:$0xff]
          %v1486 = vld [vmem:[#allocation5 + $0x6d8] sm:$0xff]
          %v1487 = vld [vmem:[#allocation5 + $0x6e0] sm:$0xff]
          %v1488 = vld [vmem:[#allocation5 + $0x6e8] sm:$0xff]
          %v1489 = vld [vmem:[#allocation5 + $0x6f0] sm:$0xff]
          %v1490 = vld [vmem:[#allocation5 + $0x6f8] sm:$0xff]
          %v1491 = vld [vmem:[#allocation5 + $0x700] sm:$0xff]
          %v1492 = vld [vmem:[#allocation5 + $0x708] sm:$0xff]
          %v1493 = vld [vmem:[#allocation5 + $0x710] sm:$0xff]
          %v1494 = vld [vmem:[#allocation5 + $0x718] sm:$0xff]
          %v1495 = vld [vmem:[#allocation5 + $0x720] sm:$0xff]
          %v1496 = vld [vmem:[#allocation5 + $0x728] sm:$0xff]
          %v1497 = vld [vmem:[#allocation5 + $0x730] sm:$0xff]
          %v1498 = vld [vmem:[#allocation5 + $0x738] sm:$0xff]
          %v1499 = vld [vmem:[#allocation5 + $0x740] sm:$0xff]
          %v1500 = vld [vmem:[#allocation5 + $0x748] sm:$0xff]
          %v1501 = vld [vmem:[#allocation5 + $0x750] sm:$0xff]
          %v1502 = vld [vmem:[#allocation5 + $0x758] sm:$0xff]
          %v1503 = vld [vmem:[#allocation5 + $0x760] sm:$0xff]
          %v1504 = vld [vmem:[#allocation5 + $0x768] sm:$0xff]
          %v1505 = vld [vmem:[#allocation5 + $0x770] sm:$0xff]
          %v1506 = vld [vmem:[#allocation5 + $0x778] sm:$0xff]
          %v1507 = vld [vmem:[#allocation5 + $0x780] sm:$0xff]
          %v1508 = vld [vmem:[#allocation5 + $0x788] sm:$0xff]
          %v1509 = vld [vmem:[#allocation5 + $0x790] sm:$0xff]
          %v1510 = vld [vmem:[#allocation5 + $0x798] sm:$0xff]
          %v1511 = vld [vmem:[#allocation5 + $0x7a0] sm:$0xff]
          %v1512 = vld [vmem:[#allocation5 + $0x7a8] sm:$0xff]
          %v1513 = vld [vmem:[#allocation5 + $0x7b0] sm:$0xff]
          %v1514 = vld [vmem:[#allocation5 + $0x7b8] sm:$0xff]
          %v1515 = vld [vmem:[#allocation5 + $0x7c0] sm:$0xff]
          %v1516 = vld [vmem:[#allocation5 + $0x7c8] sm:$0xff]
          %v1517 = vld [vmem:[#allocation5 + $0x7d0] sm:$0xff]
          %v1518 = vld [vmem:[#allocation5 + $0x7d8] sm:$0xff]
          %v1519 = vld [vmem:[#allocation5 + $0x7e0] sm:$0xff]
          %v1520 = vld [vmem:[#allocation5 + $0x7e8] sm:$0xff]
          %v1521 = vld [vmem:[#allocation5 + $0x7f0] sm:$0xff]
          %v1522 = vld [vmem:[#allocation5 + $0x7f8] sm:$0xff]
          %v1523 = vld [vmem:[%s8] sm:$0xf]
          %v1780 = vunpack.c.l.b16 %v1267
          %v1781 = vunpack.c.h.b16 %v1267
          %v1782 = vunpack.c.l.b16 %v1268
          %v1783 = vunpack.c.h.b16 %v1268
          %v1784 = vunpack.c.l.b16 %v1269
          %v1785 = vunpack.c.h.b16 %v1269
          %v1786 = vunpack.c.l.b16 %v1270
          %v1787 = vunpack.c.h.b16 %v1270
          %v1788 = vunpack.c.l.b16 %v1271
          %v1789 = vunpack.c.h.b16 %v1271
          %v1790 = vunpack.c.l.b16 %v1272
          %v1791 = vunpack.c.h.b16 %v1272
          %v1792 = vunpack.c.l.b16 %v1273
          %v1793 = vunpack.c.h.b16 %v1273
          %v1794 = vunpack.c.l.b16 %v1274
          %v1795 = vunpack.c.h.b16 %v1274
          %v1796 = vunpack.c.l.b16 %v1275
          %v1797 = vunpack.c.h.b16 %v1275
          %v1798 = vunpack.c.l.b16 %v1276
          %v1799 = vunpack.c.h.b16 %v1276
          %v1800 = vunpack.c.l.b16 %v1277
          %v1801 = vunpack.c.h.b16 %v1277
          %v1802 = vunpack.c.l.b16 %v1278
          %v1803 = vunpack.c.h.b16 %v1278
          %v1804 = vunpack.c.l.b16 %v1279
          %v1805 = vunpack.c.h.b16 %v1279
          %v1806 = vunpack.c.l.b16 %v1280
          %v1807 = vunpack.c.h.b16 %v1280
          %v1808 = vunpack.c.l.b16 %v1281
          %v1809 = vunpack.c.h.b16 %v1281
          %v1810 = vunpack.c.l.b16 %v1282
          %v1811 = vunpack.c.h.b16 %v1282
          %v1812 = vunpack.c.l.b16 %v1283
          %v1813 = vunpack.c.h.b16 %v1283
          %v1814 = vunpack.c.l.b16 %v1284
          %v1815 = vunpack.c.h.b16 %v1284
          %v1816 = vunpack.c.l.b16 %v1285
          %v1817 = vunpack.c.h.b16 %v1285
          %v1818 = vunpack.c.l.b16 %v1286
          %v1819 = vunpack.c.h.b16 %v1286
          %v1820 = vunpack.c.l.b16 %v1287
          %v1821 = vunpack.c.h.b16 %v1287
          %v1822 = vunpack.c.l.b16 %v1288
          %v1823 = vunpack.c.h.b16 %v1288
          %v1824 = vunpack.c.l.b16 %v1289
          %v1825 = vunpack.c.h.b16 %v1289
          %v1826 = vunpack.c.l.b16 %v1290
          %v1827 = vunpack.c.h.b16 %v1290
          %v1828 = vunpack.c.l.b16 %v1291
          %v1829 = vunpack.c.h.b16 %v1291
          %v1830 = vunpack.c.l.b16 %v1292
          %v1831 = vunpack.c.h.b16 %v1292
          %v1832 = vunpack.c.l.b16 %v1293
          %v1833 = vunpack.c.h.b16 %v1293
          %v1834 = vunpack.c.l.b16 %v1294
          %v1835 = vunpack.c.h.b16 %v1294
          %v1836 = vunpack.c.l.b16 %v1295
          %v1837 = vunpack.c.h.b16 %v1295
          %v1838 = vunpack.c.l.b16 %v1296
          %v1839 = vunpack.c.h.b16 %v1296
          %v1840 = vunpack.c.l.b16 %v1297
          %v1841 = vunpack.c.h.b16 %v1297
          %v1842 = vunpack.c.l.b16 %v1298
          %v1843 = vunpack.c.h.b16 %v1298
          %v1844 = vunpack.c.l.b16 %v1299
          %v1845 = vunpack.c.h.b16 %v1299
          %v1846 = vunpack.c.l.b16 %v1300
          %v1847 = vunpack.c.h.b16 %v1300
          %v1848 = vunpack.c.l.b16 %v1301
          %v1849 = vunpack.c.h.b16 %v1301
          %v1850 = vunpack.c.l.b16 %v1302
          %v1851 = vunpack.c.h.b16 %v1302
          %v1852 = vunpack.c.l.b16 %v1303
          %v1853 = vunpack.c.h.b16 %v1303
          %v1854 = vunpack.c.l.b16 %v1304
          %v1855 = vunpack.c.h.b16 %v1304
          %v1856 = vunpack.c.l.b16 %v1305
          %v1857 = vunpack.c.h.b16 %v1305
          %v1858 = vunpack.c.l.b16 %v1306
          %v1859 = vunpack.c.h.b16 %v1306
          %v1860 = vunpack.c.l.b16 %v1307
          %v1861 = vunpack.c.h.b16 %v1307
          %v1862 = vunpack.c.l.b16 %v1308
          %v1863 = vunpack.c.h.b16 %v1308
          %v1864 = vunpack.c.l.b16 %v1309
          %v1865 = vunpack.c.h.b16 %v1309
          %v1866 = vunpack.c.l.b16 %v1310
          %v1867 = vunpack.c.h.b16 %v1310
          %v1868 = vunpack.c.l.b16 %v1311
          %v1869 = vunpack.c.h.b16 %v1311
          %v1870 = vunpack.c.l.b16 %v1312
          %v1871 = vunpack.c.h.b16 %v1312
          %v1872 = vunpack.c.l.b16 %v1313
          %v1873 = vunpack.c.h.b16 %v1313
          %v1874 = vunpack.c.l.b16 %v1314
          %v1875 = vunpack.c.h.b16 %v1314
          %v1876 = vunpack.c.l.b16 %v1315
          %v1877 = vunpack.c.h.b16 %v1315
          %v1878 = vunpack.c.l.b16 %v1316
          %v1879 = vunpack.c.h.b16 %v1316
          %v1880 = vunpack.c.l.b16 %v1317
          %v1881 = vunpack.c.h.b16 %v1317
          %v1882 = vunpack.c.l.b16 %v1318
          %v1883 = vunpack.c.h.b16 %v1318
          %v1884 = vunpack.c.l.b16 %v1319
          %v1885 = vunpack.c.h.b16 %v1319
          %v1886 = vunpack.c.l.b16 %v1320
          %v1887 = vunpack.c.h.b16 %v1320
          %v1888 = vunpack.c.l.b16 %v1321
          %v1889 = vunpack.c.h.b16 %v1321
          %v1890 = vunpack.c.l.b16 %v1322
          %v1891 = vunpack.c.h.b16 %v1322
          %v1892 = vunpack.c.l.b16 %v1323
          %v1893 = vunpack.c.h.b16 %v1323
          %v1894 = vunpack.c.l.b16 %v1324
          %v1895 = vunpack.c.h.b16 %v1324
          %v1896 = vunpack.c.l.b16 %v1325
          %v1897 = vunpack.c.h.b16 %v1325
          %v1898 = vunpack.c.l.b16 %v1326
          %v1899 = vunpack.c.h.b16 %v1326
          %v1900 = vunpack.c.l.b16 %v1327
          %v1901 = vunpack.c.h.b16 %v1327
          %v1902 = vunpack.c.l.b16 %v1328
          %v1903 = vunpack.c.h.b16 %v1328
          %v1904 = vunpack.c.l.b16 %v1329
          %v1905 = vunpack.c.h.b16 %v1329
          %v1906 = vunpack.c.l.b16 %v1330
          %v1907 = vunpack.c.h.b16 %v1330
          %v1908 = vunpack.c.l.b16 %v1331
          %v1909 = vunpack.c.h.b16 %v1331
          %v1910 = vunpack.c.l.b16 %v1332
          %v1911 = vunpack.c.h.b16 %v1332
          %v1912 = vunpack.c.l.b16 %v1333
          %v1913 = vunpack.c.h.b16 %v1333
          %v1914 = vunpack.c.l.b16 %v1334
          %v1915 = vunpack.c.h.b16 %v1334
          %v1916 = vunpack.c.l.b16 %v1335
          %v1917 = vunpack.c.h.b16 %v1335
          %v1918 = vunpack.c.l.b16 %v1336
          %v1919 = vunpack.c.h.b16 %v1336
          %v1920 = vunpack.c.l.b16 %v1337
          %v1921 = vunpack.c.h.b16 %v1337
          %v1922 = vunpack.c.l.b16 %v1338
          %v1923 = vunpack.c.h.b16 %v1338
          %v1924 = vunpack.c.l.b16 %v1339
          %v1925 = vunpack.c.h.b16 %v1339
          %v1926 = vunpack.c.l.b16 %v1340
          %v1927 = vunpack.c.h.b16 %v1340
          %v1928 = vunpack.c.l.b16 %v1341
          %v1929 = vunpack.c.h.b16 %v1341
          %v1930 = vunpack.c.l.b16 %v1342
          %v1931 = vunpack.c.h.b16 %v1342
          %v1932 = vunpack.c.l.b16 %v1343
          %v1933 = vunpack.c.h.b16 %v1343
          %v1934 = vunpack.c.l.b16 %v1344
          %v1935 = vunpack.c.h.b16 %v1344
          %v1936 = vunpack.c.l.b16 %v1345
          %v1937 = vunpack.c.h.b16 %v1345
          %v1938 = vunpack.c.l.b16 %v1346
          %v1939 = vunpack.c.h.b16 %v1346
          %v1940 = vunpack.c.l.b16 %v1347
          %v1941 = vunpack.c.h.b16 %v1347
          %v1942 = vunpack.c.l.b16 %v1348
          %v1943 = vunpack.c.h.b16 %v1348
          %v1944 = vunpack.c.l.b16 %v1349
          %v1945 = vunpack.c.h.b16 %v1349
          %v1946 = vunpack.c.l.b16 %v1350
          %v1947 = vunpack.c.h.b16 %v1350
          %v1948 = vunpack.c.l.b16 %v1351
          %v1949 = vunpack.c.h.b16 %v1351
          %v1950 = vunpack.c.l.b16 %v1352
          %v1951 = vunpack.c.h.b16 %v1352
          %v1952 = vunpack.c.l.b16 %v1353
          %v1953 = vunpack.c.h.b16 %v1353
          %v1954 = vunpack.c.l.b16 %v1354
          %v1955 = vunpack.c.h.b16 %v1354
          %v1956 = vunpack.c.l.b16 %v1355
          %v1957 = vunpack.c.h.b16 %v1355
          %v1958 = vunpack.c.l.b16 %v1356
          %v1959 = vunpack.c.h.b16 %v1356
          %v1960 = vunpack.c.l.b16 %v1357
          %v1961 = vunpack.c.h.b16 %v1357
          %v1962 = vunpack.c.l.b16 %v1358
          %v1963 = vunpack.c.h.b16 %v1358
          %v1964 = vunpack.c.l.b16 %v1359
          %v1965 = vunpack.c.h.b16 %v1359
          %v1966 = vunpack.c.l.b16 %v1360
          %v1967 = vunpack.c.h.b16 %v1360
          %v1968 = vunpack.c.l.b16 %v1361
          %v1969 = vunpack.c.h.b16 %v1361
          %v1970 = vunpack.c.l.b16 %v1362
          %v1971 = vunpack.c.h.b16 %v1362
          %v1972 = vunpack.c.l.b16 %v1363
          %v1973 = vunpack.c.h.b16 %v1363
          %v1974 = vunpack.c.l.b16 %v1364
          %v1975 = vunpack.c.h.b16 %v1364
          %v1976 = vunpack.c.l.b16 %v1365
          %v1977 = vunpack.c.h.b16 %v1365
          %v1978 = vunpack.c.l.b16 %v1366
          %v1979 = vunpack.c.h.b16 %v1366
          %v1980 = vunpack.c.l.b16 %v1367
          %v1981 = vunpack.c.h.b16 %v1367
          %v1982 = vunpack.c.l.b16 %v1368
          %v1983 = vunpack.c.h.b16 %v1368
          %v1984 = vunpack.c.l.b16 %v1369
          %v1985 = vunpack.c.h.b16 %v1369
          %v1986 = vunpack.c.l.b16 %v1370
          %v1987 = vunpack.c.h.b16 %v1370
          %v1988 = vunpack.c.l.b16 %v1371
          %v1989 = vunpack.c.h.b16 %v1371
          %v1990 = vunpack.c.l.b16 %v1372
          %v1991 = vunpack.c.h.b16 %v1372
          %v1992 = vunpack.c.l.b16 %v1373
          %v1993 = vunpack.c.h.b16 %v1373
          %v1994 = vunpack.c.l.b16 %v1374
          %v1995 = vunpack.c.h.b16 %v1374
          %v1996 = vunpack.c.l.b16 %v1375
          %v1997 = vunpack.c.h.b16 %v1375
          %v1998 = vunpack.c.l.b16 %v1376
          %v1999 = vunpack.c.h.b16 %v1376
          %v2000 = vunpack.c.l.b16 %v1377
          %v2001 = vunpack.c.h.b16 %v1377
          %v2002 = vunpack.c.l.b16 %v1378
          %v2003 = vunpack.c.h.b16 %v1378
          %v2004 = vunpack.c.l.b16 %v1379
          %v2005 = vunpack.c.h.b16 %v1379
          %v2006 = vunpack.c.l.b16 %v1380
          %v2007 = vunpack.c.h.b16 %v1380
          %v2008 = vunpack.c.l.b16 %v1381
          %v2009 = vunpack.c.h.b16 %v1381
          %v2010 = vunpack.c.l.b16 %v1382
          %v2011 = vunpack.c.h.b16 %v1382
          %v2012 = vunpack.c.l.b16 %v1383
          %v2013 = vunpack.c.h.b16 %v1383
          %v2014 = vunpack.c.l.b16 %v1384
          %v2015 = vunpack.c.h.b16 %v1384
          %v2016 = vunpack.c.l.b16 %v1385
          %v2017 = vunpack.c.h.b16 %v1385
          %v2018 = vunpack.c.l.b16 %v1386
          %v2019 = vunpack.c.h.b16 %v1386
          %v2020 = vunpack.c.l.b16 %v1387
          %v2021 = vunpack.c.h.b16 %v1387
          %v2022 = vunpack.c.l.b16 %v1388
          %v2023 = vunpack.c.h.b16 %v1388
          %v2024 = vunpack.c.l.b16 %v1389
          %v2025 = vunpack.c.h.b16 %v1389
          %v2026 = vunpack.c.l.b16 %v1390
          %v2027 = vunpack.c.h.b16 %v1390
          %v2028 = vunpack.c.l.b16 %v1391
          %v2029 = vunpack.c.h.b16 %v1391
          %v2030 = vunpack.c.l.b16 %v1392
          %v2031 = vunpack.c.h.b16 %v1392
          %v2032 = vunpack.c.l.b16 %v1393
          %v2033 = vunpack.c.h.b16 %v1393
          %v2034 = vunpack.c.l.b16 %v1394
          %v2035 = vunpack.c.h.b16 %v1394
          %v2036 = vunpack.c.l.b16 %v1395
          %v2037 = vunpack.c.h.b16 %v1395
          %v2038 = vunpack.c.l.b16 %v1396
          %v2039 = vunpack.c.h.b16 %v1396
          %v2040 = vunpack.c.l.b16 %v1397
          %v2041 = vunpack.c.h.b16 %v1397
          %v2042 = vunpack.c.l.b16 %v1398
          %v2043 = vunpack.c.h.b16 %v1398
          %v2044 = vunpack.c.l.b16 %v1399
          %v2045 = vunpack.c.h.b16 %v1399
          %v2046 = vunpack.c.l.b16 %v1400
          %v2047 = vunpack.c.h.b16 %v1400
          %v2048 = vunpack.c.l.b16 %v1401
          %v2049 = vunpack.c.h.b16 %v1401
          %v2050 = vunpack.c.l.b16 %v1402
          %v2051 = vunpack.c.h.b16 %v1402
          %v2052 = vunpack.c.l.b16 %v1403
          %v2053 = vunpack.c.h.b16 %v1403
          %v2054 = vunpack.c.l.b16 %v1404
          %v2055 = vunpack.c.h.b16 %v1404
          %v2056 = vunpack.c.l.b16 %v1405
          %v2057 = vunpack.c.h.b16 %v1405
          %v2058 = vunpack.c.l.b16 %v1406
          %v2059 = vunpack.c.h.b16 %v1406
          %v2060 = vunpack.c.l.b16 %v1407
          %v2061 = vunpack.c.h.b16 %v1407
          %v2062 = vunpack.c.l.b16 %v1408
          %v2063 = vunpack.c.h.b16 %v1408
          %v2064 = vunpack.c.l.b16 %v1409
          %v2065 = vunpack.c.h.b16 %v1409
          %v2066 = vunpack.c.l.b16 %v1410
          %v2067 = vunpack.c.h.b16 %v1410
          %v2068 = vunpack.c.l.b16 %v1411
          %v2069 = vunpack.c.h.b16 %v1411
          %v2070 = vunpack.c.l.b16 %v1412
          %v2071 = vunpack.c.h.b16 %v1412
          %v2072 = vunpack.c.l.b16 %v1413
          %v2073 = vunpack.c.h.b16 %v1413
          %v2074 = vunpack.c.l.b16 %v1414
          %v2075 = vunpack.c.h.b16 %v1414
          %v2076 = vunpack.c.l.b16 %v1415
          %v2077 = vunpack.c.h.b16 %v1415
          %v2078 = vunpack.c.l.b16 %v1416
          %v2079 = vunpack.c.h.b16 %v1416
          %v2080 = vunpack.c.l.b16 %v1417
          %v2081 = vunpack.c.h.b16 %v1417
          %v2082 = vunpack.c.l.b16 %v1418
          %v2083 = vunpack.c.h.b16 %v1418
          %v2084 = vunpack.c.l.b16 %v1419
          %v2085 = vunpack.c.h.b16 %v1419
          %v2086 = vunpack.c.l.b16 %v1420
          %v2087 = vunpack.c.h.b16 %v1420
          %v2088 = vunpack.c.l.b16 %v1421
          %v2089 = vunpack.c.h.b16 %v1421
          %v2090 = vunpack.c.l.b16 %v1422
          %v2091 = vunpack.c.h.b16 %v1422
          %v2092 = vunpack.c.l.b16 %v1423
          %v2093 = vunpack.c.h.b16 %v1423
          %v2094 = vunpack.c.l.b16 %v1424
          %v2095 = vunpack.c.h.b16 %v1424
          %v2096 = vunpack.c.l.b16 %v1425
          %v2097 = vunpack.c.h.b16 %v1425
          %v2098 = vunpack.c.l.b16 %v1426
          %v2099 = vunpack.c.h.b16 %v1426
          %v2100 = vunpack.c.l.b16 %v1427
          %v2101 = vunpack.c.h.b16 %v1427
          %v2102 = vunpack.c.l.b16 %v1428
          %v2103 = vunpack.c.h.b16 %v1428
          %v2104 = vunpack.c.l.b16 %v1429
          %v2105 = vunpack.c.h.b16 %v1429
          %v2106 = vunpack.c.l.b16 %v1430
          %v2107 = vunpack.c.h.b16 %v1430
          %v2108 = vunpack.c.l.b16 %v1431
          %v2109 = vunpack.c.h.b16 %v1431
          %v2110 = vunpack.c.l.b16 %v1432
          %v2111 = vunpack.c.h.b16 %v1432
          %v2112 = vunpack.c.l.b16 %v1433
          %v2113 = vunpack.c.h.b16 %v1433
          %v2114 = vunpack.c.l.b16 %v1434
          %v2115 = vunpack.c.h.b16 %v1434
          %v2116 = vunpack.c.l.b16 %v1435
          %v2117 = vunpack.c.h.b16 %v1435
          %v2118 = vunpack.c.l.b16 %v1436
          %v2119 = vunpack.c.h.b16 %v1436
          %v2120 = vunpack.c.l.b16 %v1437
          %v2121 = vunpack.c.h.b16 %v1437
          %v2122 = vunpack.c.l.b16 %v1438
          %v2123 = vunpack.c.h.b16 %v1438
          %v2124 = vunpack.c.l.b16 %v1439
          %v2125 = vunpack.c.h.b16 %v1439
          %v2126 = vunpack.c.l.b16 %v1440
          %v2127 = vunpack.c.h.b16 %v1440
          %v2128 = vunpack.c.l.b16 %v1441
          %v2129 = vunpack.c.h.b16 %v1441
          %v2130 = vunpack.c.l.b16 %v1442
          %v2131 = vunpack.c.h.b16 %v1442
          %v2132 = vunpack.c.l.b16 %v1443
          %v2133 = vunpack.c.h.b16 %v1443
          %v2134 = vunpack.c.l.b16 %v1444
          %v2135 = vunpack.c.h.b16 %v1444
          %v2136 = vunpack.c.l.b16 %v1445
          %v2137 = vunpack.c.h.b16 %v1445
          %v2138 = vunpack.c.l.b16 %v1446
          %v2139 = vunpack.c.h.b16 %v1446
          %v2140 = vunpack.c.l.b16 %v1447
          %v2141 = vunpack.c.h.b16 %v1447
          %v2142 = vunpack.c.l.b16 %v1448
          %v2143 = vunpack.c.h.b16 %v1448
          %v2144 = vunpack.c.l.b16 %v1449
          %v2145 = vunpack.c.h.b16 %v1449
          %v2146 = vunpack.c.l.b16 %v1450
          %v2147 = vunpack.c.h.b16 %v1450
          %v2148 = vunpack.c.l.b16 %v1451
          %v2149 = vunpack.c.h.b16 %v1451
          %v2150 = vunpack.c.l.b16 %v1452
          %v2151 = vunpack.c.h.b16 %v1452
          %v2152 = vunpack.c.l.b16 %v1453
          %v2153 = vunpack.c.h.b16 %v1453
          %v2154 = vunpack.c.l.b16 %v1454
          %v2155 = vunpack.c.h.b16 %v1454
          %v2156 = vunpack.c.l.b16 %v1455
          %v2157 = vunpack.c.h.b16 %v1455
          %v2158 = vunpack.c.l.b16 %v1456
          %v2159 = vunpack.c.h.b16 %v1456
          %v2160 = vunpack.c.l.b16 %v1457
          %v2161 = vunpack.c.h.b16 %v1457
          %v2162 = vunpack.c.l.b16 %v1458
          %v2163 = vunpack.c.h.b16 %v1458
          %v2164 = vunpack.c.l.b16 %v1459
          %v2165 = vunpack.c.h.b16 %v1459
          %v2166 = vunpack.c.l.b16 %v1460
          %v2167 = vunpack.c.h.b16 %v1460
          %v2168 = vunpack.c.l.b16 %v1461
          %v2169 = vunpack.c.h.b16 %v1461
          %v2170 = vunpack.c.l.b16 %v1462
          %v2171 = vunpack.c.h.b16 %v1462
          %v2172 = vunpack.c.l.b16 %v1463
          %v2173 = vunpack.c.h.b16 %v1463
          %v2174 = vunpack.c.l.b16 %v1464
          %v2175 = vunpack.c.h.b16 %v1464
          %v2176 = vunpack.c.l.b16 %v1465
          %v2177 = vunpack.c.h.b16 %v1465
          %v2178 = vunpack.c.l.b16 %v1466
          %v2179 = vunpack.c.h.b16 %v1466
          %v2180 = vunpack.c.l.b16 %v1467
          %v2181 = vunpack.c.h.b16 %v1467
          %v2182 = vunpack.c.l.b16 %v1468
          %v2183 = vunpack.c.h.b16 %v1468
          %v2184 = vunpack.c.l.b16 %v1469
          %v2185 = vunpack.c.h.b16 %v1469
          %v2186 = vunpack.c.l.b16 %v1470
          %v2187 = vunpack.c.h.b16 %v1470
          %v2188 = vunpack.c.l.b16 %v1471
          %v2189 = vunpack.c.h.b16 %v1471
          %v2190 = vunpack.c.l.b16 %v1472
          %v2191 = vunpack.c.h.b16 %v1472
          %v2192 = vunpack.c.l.b16 %v1473
          %v2193 = vunpack.c.h.b16 %v1473
          %v2194 = vunpack.c.l.b16 %v1474
          %v2195 = vunpack.c.h.b16 %v1474
          %v2196 = vunpack.c.l.b16 %v1475
          %v2197 = vunpack.c.h.b16 %v1475
          %v2198 = vunpack.c.l.b16 %v1476
          %v2199 = vunpack.c.h.b16 %v1476
          %v2200 = vunpack.c.l.b16 %v1477
          %v2201 = vunpack.c.h.b16 %v1477
          %v2202 = vunpack.c.l.b16 %v1478
          %v2203 = vunpack.c.h.b16 %v1478
          %v2204 = vunpack.c.l.b16 %v1479
          %v2205 = vunpack.c.h.b16 %v1479
          %v2206 = vunpack.c.l.b16 %v1480
          %v2207 = vunpack.c.h.b16 %v1480
          %v2208 = vunpack.c.l.b16 %v1481
          %v2209 = vunpack.c.h.b16 %v1481
          %v2210 = vunpack.c.l.b16 %v1482
          %v2211 = vunpack.c.h.b16 %v1482
          %v2212 = vunpack.c.l.b16 %v1483
          %v2213 = vunpack.c.h.b16 %v1483
          %v2214 = vunpack.c.l.b16 %v1484
          %v2215 = vunpack.c.h.b16 %v1484
          %v2216 = vunpack.c.l.b16 %v1485
          %v2217 = vunpack.c.h.b16 %v1485
          %v2218 = vunpack.c.l.b16 %v1486
          %v2219 = vunpack.c.h.b16 %v1486
          %v2220 = vunpack.c.l.b16 %v1487
          %v2221 = vunpack.c.h.b16 %v1487
          %v2222 = vunpack.c.l.b16 %v1488
          %v2223 = vunpack.c.h.b16 %v1488
          %v2224 = vunpack.c.l.b16 %v1489
          %v2225 = vunpack.c.h.b16 %v1489
          %v2226 = vunpack.c.l.b16 %v1490
          %v2227 = vunpack.c.h.b16 %v1490
          %v2228 = vunpack.c.l.b16 %v1491
          %v2229 = vunpack.c.h.b16 %v1491
          %v2230 = vunpack.c.l.b16 %v1492
          %v2231 = vunpack.c.h.b16 %v1492
          %v2232 = vunpack.c.l.b16 %v1493
          %v2233 = vunpack.c.h.b16 %v1493
          %v2234 = vunpack.c.l.b16 %v1494
          %v2235 = vunpack.c.h.b16 %v1494
          %v2236 = vunpack.c.l.b16 %v1495
          %v2237 = vunpack.c.h.b16 %v1495
          %v2238 = vunpack.c.l.b16 %v1496
          %v2239 = vunpack.c.h.b16 %v1496
          %v2240 = vunpack.c.l.b16 %v1497
          %v2241 = vunpack.c.h.b16 %v1497
          %v2242 = vunpack.c.l.b16 %v1498
          %v2243 = vunpack.c.h.b16 %v1498
          %v2244 = vunpack.c.l.b16 %v1499
          %v2245 = vunpack.c.h.b16 %v1499
          %v2246 = vunpack.c.l.b16 %v1500
          %v2247 = vunpack.c.h.b16 %v1500
          %v2248 = vunpack.c.l.b16 %v1501
          %v2249 = vunpack.c.h.b16 %v1501
          %v2250 = vunpack.c.l.b16 %v1502
          %v2251 = vunpack.c.h.b16 %v1502
          %v2252 = vunpack.c.l.b16 %v1503
          %v2253 = vunpack.c.h.b16 %v1503
          %v2254 = vunpack.c.l.b16 %v1504
          %v2255 = vunpack.c.h.b16 %v1504
          %v2256 = vunpack.c.l.b16 %v1505
          %v2257 = vunpack.c.h.b16 %v1505
          %v2258 = vunpack.c.l.b16 %v1506
          %v2259 = vunpack.c.h.b16 %v1506
          %v2260 = vunpack.c.l.b16 %v1507
          %v2261 = vunpack.c.h.b16 %v1507
          %v2262 = vunpack.c.l.b16 %v1508
          %v2263 = vunpack.c.h.b16 %v1508
          %v2264 = vunpack.c.l.b16 %v1509
          %v2265 = vunpack.c.h.b16 %v1509
          %v2266 = vunpack.c.l.b16 %v1510
          %v2267 = vunpack.c.h.b16 %v1510
          %v2268 = vunpack.c.l.b16 %v1511
          %v2269 = vunpack.c.h.b16 %v1511
          %v2270 = vunpack.c.l.b16 %v1512
          %v2271 = vunpack.c.h.b16 %v1512
          %v2272 = vunpack.c.l.b16 %v1513
          %v2273 = vunpack.c.h.b16 %v1513
          %v2274 = vunpack.c.l.b16 %v1514
          %v2275 = vunpack.c.h.b16 %v1514
          %v2276 = vunpack.c.l.b16 %v1515
          %v2277 = vunpack.c.h.b16 %v1515
          %v2278 = vunpack.c.l.b16 %v1516
          %v2279 = vunpack.c.h.b16 %v1516
          %v2280 = vunpack.c.l.b16 %v1517
          %v2281 = vunpack.c.h.b16 %v1517
          %v2282 = vunpack.c.l.b16 %v1518
          %v2283 = vunpack.c.h.b16 %v1518
          %v2284 = vunpack.c.l.b16 %v1519
          %v2285 = vunpack.c.h.b16 %v1519
          %v2286 = vunpack.c.l.b16 %v1520
          %v2287 = vunpack.c.h.b16 %v1520
          %v2288 = vunpack.c.l.b16 %v1521
          %v2289 = vunpack.c.h.b16 %v1521
          %v2290 = vunpack.c.l.b16 %v1522
          %v2291 = vunpack.c.h.b16 %v1522
          %v2292 = vpack.c.b16 %v1784, %v1780
          %v2293 = vpack.c.b16 %v1785, %v1781
          %v2294 = vpack.c.b16 %v1786, %v1782
          %v2295 = vpack.c.b16 %v1787, %v1783
          %v2296 = vpack.c.b16 %v1792, %v1788
          %v2297 = vpack.c.b16 %v1793, %v1789
          %v2298 = vpack.c.b16 %v1794, %v1790
          %v2299 = vpack.c.b16 %v1795, %v1791
          %v2300 = vpack.c.b16 %v1800, %v1796
          %v2301 = vpack.c.b16 %v1801, %v1797
          %v2302 = vpack.c.b16 %v1802, %v1798
          %v2303 = vpack.c.b16 %v1803, %v1799
          %v2304 = vpack.c.b16 %v1808, %v1804
          %v2305 = vpack.c.b16 %v1809, %v1805
          %v2306 = vpack.c.b16 %v1810, %v1806
          %v2307 = vpack.c.b16 %v1811, %v1807
          %v2308 = vpack.c.b16 %v1816, %v1812
          %v2309 = vpack.c.b16 %v1817, %v1813
          %v2310 = vpack.c.b16 %v1818, %v1814
          %v2311 = vpack.c.b16 %v1819, %v1815
          %v2312 = vpack.c.b16 %v1824, %v1820
          %v2313 = vpack.c.b16 %v1825, %v1821
          %v2314 = vpack.c.b16 %v1826, %v1822
          %v2315 = vpack.c.b16 %v1827, %v1823
          %v2316 = vpack.c.b16 %v1832, %v1828
          %v2317 = vpack.c.b16 %v1833, %v1829
          %v2318 = vpack.c.b16 %v1834, %v1830
          %v2319 = vpack.c.b16 %v1835, %v1831
          %v2320 = vpack.c.b16 %v1840, %v1836
          %v2321 = vpack.c.b16 %v1841, %v1837
          %v2322 = vpack.c.b16 %v1842, %v1838
          %v2323 = vpack.c.b16 %v1843, %v1839
          %v2324 = vpack.c.b16 %v1848, %v1844
          %v2325 = vpack.c.b16 %v1849, %v1845
          %v2326 = vpack.c.b16 %v1850, %v1846
          %v2327 = vpack.c.b16 %v1851, %v1847
          %v2328 = vpack.c.b16 %v1856, %v1852
          %v2329 = vpack.c.b16 %v1857, %v1853
          %v2330 = vpack.c.b16 %v1858, %v1854
          %v2331 = vpack.c.b16 %v1859, %v1855
          %v2332 = vpack.c.b16 %v1864, %v1860
          %v2333 = vpack.c.b16 %v1865, %v1861
          %v2334 = vpack.c.b16 %v1866, %v1862
          %v2335 = vpack.c.b16 %v1867, %v1863
          %v2336 = vpack.c.b16 %v1872, %v1868
          %v2337 = vpack.c.b16 %v1873, %v1869
          %v2338 = vpack.c.b16 %v1874, %v1870
          %v2339 = vpack.c.b16 %v1875, %v1871
          %v2340 = vpack.c.b16 %v1880, %v1876
          %v2341 = vpack.c.b16 %v1881, %v1877
          %v2342 = vpack.c.b16 %v1882, %v1878
          %v2343 = vpack.c.b16 %v1883, %v1879
          %v2344 = vpack.c.b16 %v1888, %v1884
          %v2345 = vpack.c.b16 %v1889, %v1885
          %v2346 = vpack.c.b16 %v1890, %v1886
          %v2347 = vpack.c.b16 %v1891, %v1887
          %v2348 = vpack.c.b16 %v1896, %v1892
          %v2349 = vpack.c.b16 %v1897, %v1893
          %v2350 = vpack.c.b16 %v1898, %v1894
          %v2351 = vpack.c.b16 %v1899, %v1895
          %v2352 = vpack.c.b16 %v1904, %v1900
          %v2353 = vpack.c.b16 %v1905, %v1901
          %v2354 = vpack.c.b16 %v1906, %v1902
          %v2355 = vpack.c.b16 %v1907, %v1903
          %v2356 = vpack.c.b16 %v1912, %v1908
          %v2357 = vpack.c.b16 %v1913, %v1909
          %v2358 = vpack.c.b16 %v1914, %v1910
          %v2359 = vpack.c.b16 %v1915, %v1911
          %v2360 = vpack.c.b16 %v1920, %v1916
          %v2361 = vpack.c.b16 %v1921, %v1917
          %v2362 = vpack.c.b16 %v1922, %v1918
          %v2363 = vpack.c.b16 %v1923, %v1919
          %v2364 = vpack.c.b16 %v1928, %v1924
          %v2365 = vpack.c.b16 %v1929, %v1925
          %v2366 = vpack.c.b16 %v1930, %v1926
          %v2367 = vpack.c.b16 %v1931, %v1927
          %v2368 = vpack.c.b16 %v1936, %v1932
          %v2369 = vpack.c.b16 %v1937, %v1933
          %v2370 = vpack.c.b16 %v1938, %v1934
          %v2371 = vpack.c.b16 %v1939, %v1935
          %v2372 = vpack.c.b16 %v1944, %v1940
          %v2373 = vpack.c.b16 %v1945, %v1941
          %v2374 = vpack.c.b16 %v1946, %v1942
          %v2375 = vpack.c.b16 %v1947, %v1943
          %v2376 = vpack.c.b16 %v1952, %v1948
          %v2377 = vpack.c.b16 %v1953, %v1949
          %v2378 = vpack.c.b16 %v1954, %v1950
          %v2379 = vpack.c.b16 %v1955, %v1951
          %v2380 = vpack.c.b16 %v1960, %v1956
          %v2381 = vpack.c.b16 %v1961, %v1957
          %v2382 = vpack.c.b16 %v1962, %v1958
          %v2383 = vpack.c.b16 %v1963, %v1959
          %v2384 = vpack.c.b16 %v1968, %v1964
          %v2385 = vpack.c.b16 %v1969, %v1965
          %v2386 = vpack.c.b16 %v1970, %v1966
          %v2387 = vpack.c.b16 %v1971, %v1967
          %v2388 = vpack.c.b16 %v1976, %v1972
          %v2389 = vpack.c.b16 %v1977, %v1973
          %v2390 = vpack.c.b16 %v1978, %v1974
          %v2391 = vpack.c.b16 %v1979, %v1975
          %v2392 = vpack.c.b16 %v1984, %v1980
          %v2393 = vpack.c.b16 %v1985, %v1981
          %v2394 = vpack.c.b16 %v1986, %v1982
          %v2395 = vpack.c.b16 %v1987, %v1983
          %v2396 = vpack.c.b16 %v1992, %v1988
          %v2397 = vpack.c.b16 %v1993, %v1989
          %v2398 = vpack.c.b16 %v1994, %v1990
          %v2399 = vpack.c.b16 %v1995, %v1991
          %v2400 = vpack.c.b16 %v2000, %v1996
          %v2401 = vpack.c.b16 %v2001, %v1997
          %v2402 = vpack.c.b16 %v2002, %v1998
          %v2403 = vpack.c.b16 %v2003, %v1999
          %v2404 = vpack.c.b16 %v2008, %v2004
          %v2405 = vpack.c.b16 %v2009, %v2005
          %v2406 = vpack.c.b16 %v2010, %v2006
          %v2407 = vpack.c.b16 %v2011, %v2007
          %v2408 = vpack.c.b16 %v2016, %v2012
          %v2409 = vpack.c.b16 %v2017, %v2013
          %v2410 = vpack.c.b16 %v2018, %v2014
          %v2411 = vpack.c.b16 %v2019, %v2015
          %v2412 = vpack.c.b16 %v2024, %v2020
          %v2413 = vpack.c.b16 %v2025, %v2021
          %v2414 = vpack.c.b16 %v2026, %v2022
          %v2415 = vpack.c.b16 %v2027, %v2023
          %v2416 = vpack.c.b16 %v2032, %v2028
          %v2417 = vpack.c.b16 %v2033, %v2029
          %v2418 = vpack.c.b16 %v2034, %v2030
          %v2419 = vpack.c.b16 %v2035, %v2031
          %v2420 = vpack.c.b16 %v2040, %v2036
          %v2421 = vpack.c.b16 %v2041, %v2037
          %v2422 = vpack.c.b16 %v2042, %v2038
          %v2423 = vpack.c.b16 %v2043, %v2039
          %v2424 = vpack.c.b16 %v2048, %v2044
          %v2425 = vpack.c.b16 %v2049, %v2045
          %v2426 = vpack.c.b16 %v2050, %v2046
          %v2427 = vpack.c.b16 %v2051, %v2047
          %v2428 = vpack.c.b16 %v2056, %v2052
          %v2429 = vpack.c.b16 %v2057, %v2053
          %v2430 = vpack.c.b16 %v2058, %v2054
          %v2431 = vpack.c.b16 %v2059, %v2055
          %v2432 = vpack.c.b16 %v2064, %v2060
          %v2433 = vpack.c.b16 %v2065, %v2061
          %v2434 = vpack.c.b16 %v2066, %v2062
          %v2435 = vpack.c.b16 %v2067, %v2063
          %v2436 = vpack.c.b16 %v2072, %v2068
          %v2437 = vpack.c.b16 %v2073, %v2069
          %v2438 = vpack.c.b16 %v2074, %v2070
          %v2439 = vpack.c.b16 %v2075, %v2071
          %v2440 = vpack.c.b16 %v2080, %v2076
          %v2441 = vpack.c.b16 %v2081, %v2077
          %v2442 = vpack.c.b16 %v2082, %v2078
          %v2443 = vpack.c.b16 %v2083, %v2079
          %v2444 = vpack.c.b16 %v2088, %v2084
          %v2445 = vpack.c.b16 %v2089, %v2085
          %v2446 = vpack.c.b16 %v2090, %v2086
          %v2447 = vpack.c.b16 %v2091, %v2087
          %v2448 = vpack.c.b16 %v2096, %v2092
          %v2449 = vpack.c.b16 %v2097, %v2093
          %v2450 = vpack.c.b16 %v2098, %v2094
          %v2451 = vpack.c.b16 %v2099, %v2095
          %v2452 = vpack.c.b16 %v2104, %v2100
          %v2453 = vpack.c.b16 %v2105, %v2101
          %v2454 = vpack.c.b16 %v2106, %v2102
          %v2455 = vpack.c.b16 %v2107, %v2103
          %v2456 = vpack.c.b16 %v2112, %v2108
          %v2457 = vpack.c.b16 %v2113, %v2109
          %v2458 = vpack.c.b16 %v2114, %v2110
          %v2459 = vpack.c.b16 %v2115, %v2111
          %v2460 = vpack.c.b16 %v2120, %v2116
          %v2461 = vpack.c.b16 %v2121, %v2117
          %v2462 = vpack.c.b16 %v2122, %v2118
          %v2463 = vpack.c.b16 %v2123, %v2119
          %v2464 = vpack.c.b16 %v2128, %v2124
          %v2465 = vpack.c.b16 %v2129, %v2125
          %v2466 = vpack.c.b16 %v2130, %v2126
          %v2467 = vpack.c.b16 %v2131, %v2127
          %v2468 = vpack.c.b16 %v2136, %v2132
          %v2469 = vpack.c.b16 %v2137, %v2133
          %v2470 = vpack.c.b16 %v2138, %v2134
          %v2471 = vpack.c.b16 %v2139, %v2135
          %v2472 = vpack.c.b16 %v2144, %v2140
          %v2473 = vpack.c.b16 %v2145, %v2141
          %v2474 = vpack.c.b16 %v2146, %v2142
          %v2475 = vpack.c.b16 %v2147, %v2143
          %v2476 = vpack.c.b16 %v2152, %v2148
          %v2477 = vpack.c.b16 %v2153, %v2149
          %v2478 = vpack.c.b16 %v2154, %v2150
          %v2479 = vpack.c.b16 %v2155, %v2151
          %v2480 = vpack.c.b16 %v2160, %v2156
          %v2481 = vpack.c.b16 %v2161, %v2157
          %v2482 = vpack.c.b16 %v2162, %v2158
          %v2483 = vpack.c.b16 %v2163, %v2159
          %v2484 = vpack.c.b16 %v2168, %v2164
          %v2485 = vpack.c.b16 %v2169, %v2165
          %v2486 = vpack.c.b16 %v2170, %v2166
          %v2487 = vpack.c.b16 %v2171, %v2167
          %v2488 = vpack.c.b16 %v2176, %v2172
          %v2489 = vpack.c.b16 %v2177, %v2173
          %v2490 = vpack.c.b16 %v2178, %v2174
          %v2491 = vpack.c.b16 %v2179, %v2175
          %v2492 = vpack.c.b16 %v2184, %v2180
          %v2493 = vpack.c.b16 %v2185, %v2181
          %v2494 = vpack.c.b16 %v2186, %v2182
          %v2495 = vpack.c.b16 %v2187, %v2183
          %v2496 = vpack.c.b16 %v2192, %v2188
          %v2497 = vpack.c.b16 %v2193, %v2189
          %v2498 = vpack.c.b16 %v2194, %v2190
          %v2499 = vpack.c.b16 %v2195, %v2191
          %v2500 = vpack.c.b16 %v2200, %v2196
          %v2501 = vpack.c.b16 %v2201, %v2197
          %v2502 = vpack.c.b16 %v2202, %v2198
          %v2503 = vpack.c.b16 %v2203, %v2199
          %v2504 = vpack.c.b16 %v2208, %v2204
          %v2505 = vpack.c.b16 %v2209, %v2205
          %v2506 = vpack.c.b16 %v2210, %v2206
          %v2507 = vpack.c.b16 %v2211, %v2207
          %v2508 = vpack.c.b16 %v2216, %v2212
          %v2509 = vpack.c.b16 %v2217, %v2213
          %v2510 = vpack.c.b16 %v2218, %v2214
          %v2511 = vpack.c.b16 %v2219, %v2215
          %v2512 = vpack.c.b16 %v2224, %v2220
          %v2513 = vpack.c.b16 %v2225, %v2221
          %v2514 = vpack.c.b16 %v2226, %v2222
          %v2515 = vpack.c.b16 %v2227, %v2223
          %v2516 = vpack.c.b16 %v2232, %v2228
          %v2517 = vpack.c.b16 %v2233, %v2229
          %v2518 = vpack.c.b16 %v2234, %v2230
          %v2519 = vpack.c.b16 %v2235, %v2231
          %v2520 = vpack.c.b16 %v2240, %v2236
          %v2521 = vpack.c.b16 %v2241, %v2237
          %v2522 = vpack.c.b16 %v2242, %v2238
          %v2523 = vpack.c.b16 %v2243, %v2239
          %v2524 = vpack.c.b16 %v2248, %v2244
          %v2525 = vpack.c.b16 %v2249, %v2245
          %v2526 = vpack.c.b16 %v2250, %v2246
          %v2527 = vpack.c.b16 %v2251, %v2247
          %v2528 = vpack.c.b16 %v2256, %v2252
          %v2529 = vpack.c.b16 %v2257, %v2253
          %v2530 = vpack.c.b16 %v2258, %v2254
          %v2531 = vpack.c.b16 %v2259, %v2255
          %v2532 = vpack.c.b16 %v2264, %v2260
          %v2533 = vpack.c.b16 %v2265, %v2261
          %v2534 = vpack.c.b16 %v2266, %v2262
          %v2535 = vpack.c.b16 %v2267, %v2263
          %v2536 = vpack.c.b16 %v2272, %v2268
          %v2537 = vpack.c.b16 %v2273, %v2269
          %v2538 = vpack.c.b16 %v2274, %v2270
          %v2539 = vpack.c.b16 %v2275, %v2271
          %v2540 = vpack.c.b16 %v2280, %v2276
          %v2541 = vpack.c.b16 %v2281, %v2277
          %v2542 = vpack.c.b16 %v2282, %v2278
          %v2543 = vpack.c.b16 %v2283, %v2279
          %v2544 = vpack.c.b16 %v2288, %v2284
          %v2545 = vpack.c.b16 %v2289, %v2285
          %v2546 = vpack.c.b16 %v2290, %v2286
          %v2547 = vpack.c.b16 %v2291, %v2287
          %v2805 = vperm.slane %v1523, 0
          %v2806 = vperm.slane %v1523, 1
          %v2807 = vperm.slane %v1523, 2
          %v2808 = vperm.slane %v1523, 3
          %2813 = vmatpush.bf16.msra.mxu0 %v2320
          %2814 = vmatpush.bf16.msra.mxu0 %v2316
          %2815 = vmatpush.bf16.msra.mxu0 %v2312
          %2816 = vmatpush.bf16.msra.mxu0 %v2308
          %2817 = vmatpush.bf16.msra.mxu0 %v2304
          %2818 = vmatpush.bf16.msra.mxu0 %v2300
          %2819 = vmatpush.bf16.msra.mxu0 %v2296
          %2820 = vmatpush.bf16.msra.mxu0 %v2292
          %2821 = vmatmul.bf16.gmra.mxu0 %v1259
          %v2822 = vpop.f32.mrf.mxu0
          %v2823 = vadd.f32 %v2805, %v2822
          %v2824 = vpop.f32.mrf.mxu0
          %2825 = vdwg.mxu0
          %2826 = vmatpush.bf16.msra.mxu0 %v2352
          %2827 = vmatpush.bf16.msra.mxu0 %v2348
          %2828 = vmatpush.bf16.msra.mxu0 %v2344
          %2829 = vmatpush.bf16.msra.mxu0 %v2340
          %2830 = vmatpush.bf16.msra.mxu0 %v2336
          %2831 = vmatpush.bf16.msra.mxu0 %v2332
          %2832 = vmatpush.bf16.msra.mxu0 %v2328
          %2833 = vmatpush.bf16.msra.mxu0 %v2324
          %2834 = vmatmul.bf16.gmra.mxu0 %v1260
          %v2835 = vpop.f32.mrf.mxu0
          %v2836 = vadd.f32 %v2823, %v2835
          %v2837 = vpop.f32.mrf.mxu0
          %2838 = vdwg.mxu0
          %2839 = vmatpush.bf16.msra.mxu0 %v2384
          %2840 = vmatpush.bf16.msra.mxu0 %v2380
          %2841 = vmatpush.bf16.msra.mxu0 %v2376
          %2842 = vmatpush.bf16.msra.mxu0 %v2372
          %2843 = vmatpush.bf16.msra.mxu0 %v2368
          %2844 = vmatpush.bf16.msra.mxu0 %v2364
          %2845 = vmatpush.bf16.msra.mxu0 %v2360
          %2846 = vmatpush.bf16.msra.mxu0 %v2356
          %2847 = vmatmul.bf16.gmra.mxu0 %v1261
          %v2848 = vpop.f32.mrf.mxu0
          %v2849 = vadd.f32 %v2836, %v2848
          %v2850 = vpop.f32.mrf.mxu0
          %2851 = vdwg.mxu0
          %2852 = vmatpush.bf16.msra.mxu0 %v2416
          %2853 = vmatpush.bf16.msra.mxu0 %v2412
          %2854 = vmatpush.bf16.msra.mxu0 %v2408
          %2855 = vmatpush.bf16.msra.mxu0 %v2404
          %2856 = vmatpush.bf16.msra.mxu0 %v2400
          %2857 = vmatpush.bf16.msra.mxu0 %v2396
          %2858 = vmatpush.bf16.msra.mxu0 %v2392
          %2859 = vmatpush.bf16.msra.mxu0 %v2388
          %2860 = vmatmul.bf16.gmra.mxu0 %v1262
          %v2861 = vpop.f32.mrf.mxu0
          %v2862 = vadd.f32 %v2849, %v2861
          %v2863 = vpop.f32.mrf.mxu0
          %2864 = vdwg.mxu0
          %2865 = vmatpush.bf16.msra.mxu0 %v2448
          %2866 = vmatpush.bf16.msra.mxu0 %v2444
          %2867 = vmatpush.bf16.msra.mxu0 %v2440
          %2868 = vmatpush.bf16.msra.mxu0 %v2436
          %2869 = vmatpush.bf16.msra.mxu0 %v2432
          %2870 = vmatpush.bf16.msra.mxu0 %v2428
          %2871 = vmatpush.bf16.msra.mxu0 %v2424
          %2872 = vmatpush.bf16.msra.mxu0 %v2420
          %2873 = vmatmul.bf16.gmra.mxu0 %v1263
          %v2874 = vpop.f32.mrf.mxu0
          %v2875 = vadd.f32 %v2862, %v2874
          %v2876 = vpop.f32.mrf.mxu0
          %2877 = vdwg.mxu0
          %2878 = vmatpush.bf16.msra.mxu0 %v2480
          %2879 = vmatpush.bf16.msra.mxu0 %v2476
          %2880 = vmatpush.bf16.msra.mxu0 %v2472
          %2881 = vmatpush.bf16.msra.mxu0 %v2468
          %2882 = vmatpush.bf16.msra.mxu0 %v2464
          %2883 = vmatpush.bf16.msra.mxu0 %v2460
          %2884 = vmatpush.bf16.msra.mxu0 %v2456
          %2885 = vmatpush.bf16.msra.mxu0 %v2452
          %2886 = vmatmul.bf16.gmra.mxu0 %v1264
          %v2887 = vpop.f32.mrf.mxu0
          %v2888 = vadd.f32 %v2875, %v2887
          %v2889 = vpop.f32.mrf.mxu0
          %2890 = vdwg.mxu0
          %2891 = vmatpush.bf16.msra.mxu0 %v2512
          %2892 = vmatpush.bf16.msra.mxu0 %v2508
          %2893 = vmatpush.bf16.msra.mxu0 %v2504
          %2894 = vmatpush.bf16.msra.mxu0 %v2500
          %2895 = vmatpush.bf16.msra.mxu0 %v2496
          %2896 = vmatpush.bf16.msra.mxu0 %v2492
          %2897 = vmatpush.bf16.msra.mxu0 %v2488
          %2898 = vmatpush.bf16.msra.mxu0 %v2484
          %2899 = vmatmul.bf16.gmra.mxu0 %v1265
          %v2900 = vpop.f32.mrf.mxu0
          %v2901 = vadd.f32 %v2888, %v2900
          %v2902 = vpop.f32.mrf.mxu0
          %2903 = vdwg.mxu0
          %2904 = vmatpush.bf16.msra.mxu0 %v2544
          %2905 = vmatpush.bf16.msra.mxu0 %v2540
          %2906 = vmatpush.bf16.msra.mxu0 %v2536
          %2907 = vmatpush.bf16.msra.mxu0 %v2532
          %2908 = vmatpush.bf16.msra.mxu0 %v2528
          %2909 = vmatpush.bf16.msra.mxu0 %v2524
          %2910 = vmatpush.bf16.msra.mxu0 %v2520
          %2911 = vmatpush.bf16.msra.mxu0 %v2516
          %2912 = vmatmul.bf16.gmra.mxu0 %v1266
          %v2913 = vpop.f32.mrf.mxu0
          %v2914 = vadd.f32 %v2901, %v2913
          %v2915 = vpop.f32.mrf.mxu0
          %2916 = vdwg.mxu0
          %2917 = vmatpush.bf16.msra.mxu0 %v2321
          %2918 = vmatpush.bf16.msra.mxu0 %v2317
          %2919 = vmatpush.bf16.msra.mxu0 %v2313
          %2920 = vmatpush.bf16.msra.mxu0 %v2309
          %2921 = vmatpush.bf16.msra.mxu0 %v2305
          %2922 = vmatpush.bf16.msra.mxu0 %v2301
          %2923 = vmatpush.bf16.msra.mxu0 %v2297
          %2924 = vmatpush.bf16.msra.mxu0 %v2293
          %2925 = vmatmul.bf16.gmra.mxu0 %v1259
          %v2926 = vpop.f32.mrf.mxu0
          %v2927 = vadd.f32 %v2806, %v2926
          %v2928 = vpop.f32.mrf.mxu0
          %2929 = vdwg.mxu0
          %2930 = vmatpush.bf16.msra.mxu0 %v2353
          %2931 = vmatpush.bf16.msra.mxu0 %v2349
          %2932 = vmatpush.bf16.msra.mxu0 %v2345
          %2933 = vmatpush.bf16.msra.mxu0 %v2341
          %2934 = vmatpush.bf16.msra.mxu0 %v2337
          %2935 = vmatpush.bf16.msra.mxu0 %v2333
          %2936 = vmatpush.bf16.msra.mxu0 %v2329
          %2937 = vmatpush.bf16.msra.mxu0 %v2325
          %2938 = vmatmul.bf16.gmra.mxu0 %v1260
          %v2939 = vpop.f32.mrf.mxu0
          %v2940 = vadd.f32 %v2927, %v2939
          %v2941 = vpop.f32.mrf.mxu0
          %2942 = vdwg.mxu0
          %2943 = vmatpush.bf16.msra.mxu0 %v2385
          %2944 = vmatpush.bf16.msra.mxu0 %v2381
          %2945 = vmatpush.bf16.msra.mxu0 %v2377
          %2946 = vmatpush.bf16.msra.mxu0 %v2373
          %2947 = vmatpush.bf16.msra.mxu0 %v2369
          %2948 = vmatpush.bf16.msra.mxu0 %v2365
          %2949 = vmatpush.bf16.msra.mxu0 %v2361
          %2950 = vmatpush.bf16.msra.mxu0 %v2357
          %2951 = vmatmul.bf16.gmra.mxu0 %v1261
          %v2952 = vpop.f32.mrf.mxu0
          %v2953 = vadd.f32 %v2940, %v2952
          %v2954 = vpop.f32.mrf.mxu0
          %2955 = vdwg.mxu0
          %2956 = vmatpush.bf16.msra.mxu0 %v2417
          %2957 = vmatpush.bf16.msra.mxu0 %v2413
          %2958 = vmatpush.bf16.msra.mxu0 %v2409
          %2959 = vmatpush.bf16.msra.mxu0 %v2405
          %2960 = vmatpush.bf16.msra.mxu0 %v2401
          %2961 = vmatpush.bf16.msra.mxu0 %v2397
          %2962 = vmatpush.bf16.msra.mxu0 %v2393
          %2963 = vmatpush.bf16.msra.mxu0 %v2389
          %2964 = vmatmul.bf16.gmra.mxu0 %v1262
          %v2965 = vpop.f32.mrf.mxu0
          %v2966 = vadd.f32 %v2953, %v2965
          %v2967 = vpop.f32.mrf.mxu0
          %2968 = vdwg.mxu0
          %2969 = vmatpush.bf16.msra.mxu0 %v2449
          %2970 = vmatpush.bf16.msra.mxu0 %v2445
          %2971 = vmatpush.bf16.msra.mxu0 %v2441
          %2972 = vmatpush.bf16.msra.mxu0 %v2437
          %2973 = vmatpush.bf16.msra.mxu0 %v2433
          %2974 = vmatpush.bf16.msra.mxu0 %v2429
          %2975 = vmatpush.bf16.msra.mxu0 %v2425
          %2976 = vmatpush.bf16.msra.mxu0 %v2421
          %2977 = vmatmul.bf16.gmra.mxu0 %v1263
          %v2978 = vpop.f32.mrf.mxu0
          %v2979 = vadd.f32 %v2966, %v2978
          %v2980 = vpop.f32.mrf.mxu0
          %2981 = vdwg.mxu0
          %2982 = vmatpush.bf16.msra.mxu0 %v2481
          %2983 = vmatpush.bf16.msra.mxu0 %v2477
          %2984 = vmatpush.bf16.msra.mxu0 %v2473
          %2985 = vmatpush.bf16.msra.mxu0 %v2469
          %2986 = vmatpush.bf16.msra.mxu0 %v2465
          %2987 = vmatpush.bf16.msra.mxu0 %v2461
          %2988 = vmatpush.bf16.msra.mxu0 %v2457
          %2989 = vmatpush.bf16.msra.mxu0 %v2453
          %2990 = vmatmul.bf16.gmra.mxu0 %v1264
          %v2991 = vpop.f32.mrf.mxu0
          %v2992 = vadd.f32 %v2979, %v2991
          %v2993 = vpop.f32.mrf.mxu0
          %2994 = vdwg.mxu0
          %2995 = vmatpush.bf16.msra.mxu0 %v2513
          %2996 = vmatpush.bf16.msra.mxu0 %v2509
          %2997 = vmatpush.bf16.msra.mxu0 %v2505
          %2998 = vmatpush.bf16.msra.mxu0 %v2501
          %2999 = vmatpush.bf16.msra.mxu0 %v2497
          %3000 = vmatpush.bf16.msra.mxu0 %v2493
          %3001 = vmatpush.bf16.msra.mxu0 %v2489
          %3002 = vmatpush.bf16.msra.mxu0 %v2485
          %3003 = vmatmul.bf16.gmra.mxu0 %v1265
          %v3004 = vpop.f32.mrf.mxu0
          %v3005 = vadd.f32 %v2992, %v3004
          %v3006 = vpop.f32.mrf.mxu0
          %3007 = vdwg.mxu0
          %3008 = vmatpush.bf16.msra.mxu0 %v2545
          %3009 = vmatpush.bf16.msra.mxu0 %v2541
          %3010 = vmatpush.bf16.msra.mxu0 %v2537
          %3011 = vmatpush.bf16.msra.mxu0 %v2533
          %3012 = vmatpush.bf16.msra.mxu0 %v2529
          %3013 = vmatpush.bf16.msra.mxu0 %v2525
          %3014 = vmatpush.bf16.msra.mxu0 %v2521
          %3015 = vmatpush.bf16.msra.mxu0 %v2517
          %3016 = vmatmul.bf16.gmra.mxu0 %v1266
          %v3017 = vpop.f32.mrf.mxu0
          %v3018 = vadd.f32 %v3005, %v3017
          %v3019 = vpop.f32.mrf.mxu0
          %3020 = vdwg.mxu0
          %3021 = vmatpush.bf16.msra.mxu0 %v2322
          %3022 = vmatpush.bf16.msra.mxu0 %v2318
          %3023 = vmatpush.bf16.msra.mxu0 %v2314
          %3024 = vmatpush.bf16.msra.mxu0 %v2310
          %3025 = vmatpush.bf16.msra.mxu0 %v2306
          %3026 = vmatpush.bf16.msra.mxu0 %v2302
          %3027 = vmatpush.bf16.msra.mxu0 %v2298
          %3028 = vmatpush.bf16.msra.mxu0 %v2294
          %3029 = vmatmul.bf16.gmra.mxu0 %v1259
          %v3030 = vpop.f32.mrf.mxu0
          %v3031 = vadd.f32 %v2807, %v3030
          %v3032 = vpop.f32.mrf.mxu0
          %3033 = vdwg.mxu0
          %3034 = vmatpush.bf16.msra.mxu0 %v2354
          %3035 = vmatpush.bf16.msra.mxu0 %v2350
          %3036 = vmatpush.bf16.msra.mxu0 %v2346
          %3037 = vmatpush.bf16.msra.mxu0 %v2342
          %3038 = vmatpush.bf16.msra.mxu0 %v2338
          %3039 = vmatpush.bf16.msra.mxu0 %v2334
          %3040 = vmatpush.bf16.msra.mxu0 %v2330
          %3041 = vmatpush.bf16.msra.mxu0 %v2326
          %3042 = vmatmul.bf16.gmra.mxu0 %v1260
          %v3043 = vpop.f32.mrf.mxu0
          %v3044 = vadd.f32 %v3031, %v3043
          %v3045 = vpop.f32.mrf.mxu0
          %3046 = vdwg.mxu0
          %3047 = vmatpush.bf16.msra.mxu0 %v2386
          %3048 = vmatpush.bf16.msra.mxu0 %v2382
          %3049 = vmatpush.bf16.msra.mxu0 %v2378
          %3050 = vmatpush.bf16.msra.mxu0 %v2374
          %3051 = vmatpush.bf16.msra.mxu0 %v2370
          %3052 = vmatpush.bf16.msra.mxu0 %v2366
          %3053 = vmatpush.bf16.msra.mxu0 %v2362
          %3054 = vmatpush.bf16.msra.mxu0 %v2358
          %3055 = vmatmul.bf16.gmra.mxu0 %v1261
          %v3056 = vpop.f32.mrf.mxu0
          %v3057 = vadd.f32 %v3044, %v3056
          %v3058 = vpop.f32.mrf.mxu0
          %3059 = vdwg.mxu0
          %3060 = vmatpush.bf16.msra.mxu0 %v2418
          %3061 = vmatpush.bf16.msra.mxu0 %v2414
          %3062 = vmatpush.bf16.msra.mxu0 %v2410
          %3063 = vmatpush.bf16.msra.mxu0 %v2406
          %3064 = vmatpush.bf16.msra.mxu0 %v2402
          %3065 = vmatpush.bf16.msra.mxu0 %v2398
          %3066 = vmatpush.bf16.msra.mxu0 %v2394
          %3067 = vmatpush.bf16.msra.mxu0 %v2390
          %3068 = vmatmul.bf16.gmra.mxu0 %v1262
          %v3069 = vpop.f32.mrf.mxu0
          %v3070 = vadd.f32 %v3057, %v3069
          %v3071 = vpop.f32.mrf.mxu0
          %3072 = vdwg.mxu0
          %3073 = vmatpush.bf16.msra.mxu0 %v2450
          %3074 = vmatpush.bf16.msra.mxu0 %v2446
          %3075 = vmatpush.bf16.msra.mxu0 %v2442
          %3076 = vmatpush.bf16.msra.mxu0 %v2438
          %3077 = vmatpush.bf16.msra.mxu0 %v2434
          %3078 = vmatpush.bf16.msra.mxu0 %v2430
          %3079 = vmatpush.bf16.msra.mxu0 %v2426
          %3080 = vmatpush.bf16.msra.mxu0 %v2422
          %3081 = vmatmul.bf16.gmra.mxu0 %v1263
          %v3082 = vpop.f32.mrf.mxu0
          %v3083 = vadd.f32 %v3070, %v3082
          %v3084 = vpop.f32.mrf.mxu0
          %3085 = vdwg.mxu0
          %3086 = vmatpush.bf16.msra.mxu0 %v2482
          %3087 = vmatpush.bf16.msra.mxu0 %v2478
          %3088 = vmatpush.bf16.msra.mxu0 %v2474
          %3089 = vmatpush.bf16.msra.mxu0 %v2470
          %3090 = vmatpush.bf16.msra.mxu0 %v2466
          %3091 = vmatpush.bf16.msra.mxu0 %v2462
          %3092 = vmatpush.bf16.msra.mxu0 %v2458
          %3093 = vmatpush.bf16.msra.mxu0 %v2454
          %3094 = vmatmul.bf16.gmra.mxu0 %v1264
          %v3095 = vpop.f32.mrf.mxu0
          %v3096 = vadd.f32 %v3083, %v3095
          %v3097 = vpop.f32.mrf.mxu0
          %3098 = vdwg.mxu0
          %3099 = vmatpush.bf16.msra.mxu0 %v2514
          %3100 = vmatpush.bf16.msra.mxu0 %v2510
          %3101 = vmatpush.bf16.msra.mxu0 %v2506
          %3102 = vmatpush.bf16.msra.mxu0 %v2502
          %3103 = vmatpush.bf16.msra.mxu0 %v2498
          %3104 = vmatpush.bf16.msra.mxu0 %v2494
          %3105 = vmatpush.bf16.msra.mxu0 %v2490
          %3106 = vmatpush.bf16.msra.mxu0 %v2486
          %3107 = vmatmul.bf16.gmra.mxu0 %v1265
          %v3108 = vpop.f32.mrf.mxu0
          %v3109 = vadd.f32 %v3096, %v3108
          %v3110 = vpop.f32.mrf.mxu0
          %3111 = vdwg.mxu0
          %3112 = vmatpush.bf16.msra.mxu0 %v2546
          %3113 = vmatpush.bf16.msra.mxu0 %v2542
          %3114 = vmatpush.bf16.msra.mxu0 %v2538
          %3115 = vmatpush.bf16.msra.mxu0 %v2534
          %3116 = vmatpush.bf16.msra.mxu0 %v2530
          %3117 = vmatpush.bf16.msra.mxu0 %v2526
          %3118 = vmatpush.bf16.msra.mxu0 %v2522
          %3119 = vmatpush.bf16.msra.mxu0 %v2518
          %3120 = vmatmul.bf16.gmra.mxu0 %v1266
          %v3121 = vpop.f32.mrf.mxu0
          %v3122 = vadd.f32 %v3109, %v3121
          %v3123 = vpop.f32.mrf.mxu0
          %3124 = vdwg.mxu0
          %3125 = vmatpush.bf16.msra.mxu0 %v2323
          %3126 = vmatpush.bf16.msra.mxu0 %v2319
          %3127 = vmatpush.bf16.msra.mxu0 %v2315
          %3128 = vmatpush.bf16.msra.mxu0 %v2311
          %3129 = vmatpush.bf16.msra.mxu0 %v2307
          %3130 = vmatpush.bf16.msra.mxu0 %v2303
          %3131 = vmatpush.bf16.msra.mxu0 %v2299
          %3132 = vmatpush.bf16.msra.mxu0 %v2295
          %3133 = vmatmul.bf16.gmra.mxu0 %v1259
          %v3134 = vpop.f32.mrf.mxu0
          %v3135 = vadd.f32 %v2808, %v3134
          %v3136 = vpop.f32.mrf.mxu0
          %3137 = vdwg.mxu0
          %3138 = vmatpush.bf16.msra.mxu0 %v2355
          %3139 = vmatpush.bf16.msra.mxu0 %v2351
          %3140 = vmatpush.bf16.msra.mxu0 %v2347
          %3141 = vmatpush.bf16.msra.mxu0 %v2343
          %3142 = vmatpush.bf16.msra.mxu0 %v2339
          %3143 = vmatpush.bf16.msra.mxu0 %v2335
          %3144 = vmatpush.bf16.msra.mxu0 %v2331
          %3145 = vmatpush.bf16.msra.mxu0 %v2327
          %3146 = vmatmul.bf16.gmra.mxu0 %v1260
          %v3147 = vpop.f32.mrf.mxu0
          %v3148 = vadd.f32 %v3135, %v3147
          %v3149 = vpop.f32.mrf.mxu0
          %3150 = vdwg.mxu0
          %3151 = vmatpush.bf16.msra.mxu0 %v2387
          %3152 = vmatpush.bf16.msra.mxu0 %v2383
          %3153 = vmatpush.bf16.msra.mxu0 %v2379
          %3154 = vmatpush.bf16.msra.mxu0 %v2375
          %3155 = vmatpush.bf16.msra.mxu0 %v2371
          %3156 = vmatpush.bf16.msra.mxu0 %v2367
          %3157 = vmatpush.bf16.msra.mxu0 %v2363
          %3158 = vmatpush.bf16.msra.mxu0 %v2359
          %3159 = vmatmul.bf16.gmra.mxu0 %v1261
          %v3160 = vpop.f32.mrf.mxu0
          %v3161 = vadd.f32 %v3148, %v3160
          %v3162 = vpop.f32.mrf.mxu0
          %3163 = vdwg.mxu0
          %3164 = vmatpush.bf16.msra.mxu0 %v2419
          %3165 = vmatpush.bf16.msra.mxu0 %v2415
          %3166 = vmatpush.bf16.msra.mxu0 %v2411
          %3167 = vmatpush.bf16.msra.mxu0 %v2407
          %3168 = vmatpush.bf16.msra.mxu0 %v2403
          %3169 = vmatpush.bf16.msra.mxu0 %v2399
          %3170 = vmatpush.bf16.msra.mxu0 %v2395
          %3171 = vmatpush.bf16.msra.mxu0 %v2391
          %3172 = vmatmul.bf16.gmra.mxu0 %v1262
          %v3173 = vpop.f32.mrf.mxu0
          %v3174 = vadd.f32 %v3161, %v3173
          %v3175 = vpop.f32.mrf.mxu0
          %3176 = vdwg.mxu0
          %3177 = vmatpush.bf16.msra.mxu0 %v2451
          %3178 = vmatpush.bf16.msra.mxu0 %v2447
          %3179 = vmatpush.bf16.msra.mxu0 %v2443
          %3180 = vmatpush.bf16.msra.mxu0 %v2439
          %3181 = vmatpush.bf16.msra.mxu0 %v2435
          %3182 = vmatpush.bf16.msra.mxu0 %v2431
          %3183 = vmatpush.bf16.msra.mxu0 %v2427
          %3184 = vmatpush.bf16.msra.mxu0 %v2423
          %3185 = vmatmul.bf16.gmra.mxu0 %v1263
          %v3186 = vpop.f32.mrf.mxu0
          %v3187 = vadd.f32 %v3174, %v3186
          %v3188 = vpop.f32.mrf.mxu0
          %3189 = vdwg.mxu0
          %3190 = vmatpush.bf16.msra.mxu0 %v2483
          %3191 = vmatpush.bf16.msra.mxu0 %v2479
          %3192 = vmatpush.bf16.msra.mxu0 %v2475
          %3193 = vmatpush.bf16.msra.mxu0 %v2471
          %3194 = vmatpush.bf16.msra.mxu0 %v2467
          %3195 = vmatpush.bf16.msra.mxu0 %v2463
          %3196 = vmatpush.bf16.msra.mxu0 %v2459
          %3197 = vmatpush.bf16.msra.mxu0 %v2455
          %3198 = vmatmul.bf16.gmra.mxu0 %v1264
          %v3199 = vpop.f32.mrf.mxu0
          %v3200 = vadd.f32 %v3187, %v3199
          %v3201 = vpop.f32.mrf.mxu0
          %3202 = vdwg.mxu0
          %3203 = vmatpush.bf16.msra.mxu0 %v2515
          %3204 = vmatpush.bf16.msra.mxu0 %v2511
          %3205 = vmatpush.bf16.msra.mxu0 %v2507
          %3206 = vmatpush.bf16.msra.mxu0 %v2503
          %3207 = vmatpush.bf16.msra.mxu0 %v2499
          %3208 = vmatpush.bf16.msra.mxu0 %v2495
          %3209 = vmatpush.bf16.msra.mxu0 %v2491
          %3210 = vmatpush.bf16.msra.mxu0 %v2487
          %3211 = vmatmul.bf16.gmra.mxu0 %v1265
          %v3212 = vpop.f32.mrf.mxu0
          %v3213 = vadd.f32 %v3200, %v3212
          %v3214 = vpop.f32.mrf.mxu0
          %3215 = vdwg.mxu0
          %3216 = vmatpush.bf16.msra.mxu0 %v2547
          %3217 = vmatpush.bf16.msra.mxu0 %v2543
          %3218 = vmatpush.bf16.msra.mxu0 %v2539
          %3219 = vmatpush.bf16.msra.mxu0 %v2535
          %3220 = vmatpush.bf16.msra.mxu0 %v2531
          %3221 = vmatpush.bf16.msra.mxu0 %v2527
          %3222 = vmatpush.bf16.msra.mxu0 %v2523
          %3223 = vmatpush.bf16.msra.mxu0 %v2519
          %3224 = vmatmul.bf16.gmra.mxu0 %v1266
          %v3225 = vpop.f32.mrf.mxu0
          %v3226 = vadd.f32 %v3213, %v3225
          %v3227 = vpop.f32.mrf.mxu0
          %3228 = vdwg.mxu0
          %v3229 = vmax.f32 %v2914, 0.0
          %v3230 = vmax.f32 %v3018, 0.0
          %v3231 = vmax.f32 %v3122, 0.0
          %v3232 = vmax.f32 %v3226, 0.0
          %v3233 = vpack.c.bf16 %v3229, %v3229
          %v3234 = vpack.c.bf16 %v3230, %v3230
          %v3235 = vpack.c.bf16 %v3231, %v3231
          %v3236 = vpack.c.bf16 %v3232, %v3232
          %v3237 = vld [vmem:[#allocation7] sm:$0xff]
          %v3238 = vld [vmem:[#allocation7 + $0x8] sm:$0xff]
          %v3239 = vld [vmem:[#allocation7 + $0x10] sm:$0xff]
          %v3240 = vld [vmem:[#allocation7 + $0x18] sm:$0xff]
          %v3241 = vld [vmem:[#allocation7 + $0x20] sm:$0xff]
          %v3242 = vld [vmem:[#allocation7 + $0x28] sm:$0xff]
          %v3243 = vld [vmem:[#allocation7 + $0x30] sm:$0xff]
          %v3244 = vld [vmem:[#allocation7 + $0x38] sm:$0xff]
          %v3245 = vld [vmem:[#allocation7 + $0x40] sm:$0xff]
          %v3246 = vld [vmem:[#allocation7 + $0x48] sm:$0xff]
          %v3247 = vld [vmem:[#allocation7 + $0x50] sm:$0xff]
          %v3248 = vld [vmem:[#allocation7 + $0x58] sm:$0xff]
          %v3249 = vld [vmem:[#allocation7 + $0x60] sm:$0xff]
          %v3250 = vld [vmem:[#allocation7 + $0x68] sm:$0xff]
          %v3251 = vld [vmem:[#allocation7 + $0x70] sm:$0xff]
          %v3252 = vld [vmem:[#allocation7 + $0x78] sm:$0xff]
          %v3253 = vld [vmem:[#allocation7 + $0x80] sm:$0xff]
          %v3254 = vld [vmem:[#allocation7 + $0x88] sm:$0xff]
          %v3255 = vld [vmem:[#allocation7 + $0x90] sm:$0xff]
          %v3256 = vld [vmem:[#allocation7 + $0x98] sm:$0xff]
          %v3257 = vld [vmem:[#allocation7 + $0xa0] sm:$0xff]
          %v3258 = vld [vmem:[#allocation7 + $0xa8] sm:$0xff]
          %v3259 = vld [vmem:[#allocation7 + $0xb0] sm:$0xff]
          %v3260 = vld [vmem:[#allocation7 + $0xb8] sm:$0xff]
          %v3261 = vld [vmem:[#allocation7 + $0xc0] sm:$0xff]
          %v3262 = vld [vmem:[#allocation7 + $0xc8] sm:$0xff]
          %v3263 = vld [vmem:[#allocation7 + $0xd0] sm:$0xff]
          %v3264 = vld [vmem:[#allocation7 + $0xd8] sm:$0xff]
          %v3265 = vld [vmem:[#allocation7 + $0xe0] sm:$0xff]
          %v3266 = vld [vmem:[#allocation7 + $0xe8] sm:$0xff]
          %v3267 = vld [vmem:[#allocation7 + $0xf0] sm:$0xff]
          %v3268 = vld [vmem:[#allocation7 + $0xf8] sm:$0xff]
          %v3269 = vld [vmem:[#allocation7 + $0x100] sm:$0xff]
          %v3270 = vld [vmem:[#allocation7 + $0x108] sm:$0xff]
          %v3271 = vld [vmem:[#allocation7 + $0x110] sm:$0xff]
          %v3272 = vld [vmem:[#allocation7 + $0x118] sm:$0xff]
          %v3273 = vld [vmem:[#allocation7 + $0x120] sm:$0xff]
          %v3274 = vld [vmem:[#allocation7 + $0x128] sm:$0xff]
          %v3275 = vld [vmem:[#allocation7 + $0x130] sm:$0xff]
          %v3276 = vld [vmem:[#allocation7 + $0x138] sm:$0xff]
          %v3277 = vld [vmem:[#allocation7 + $0x140] sm:$0xff]
          %v3278 = vld [vmem:[#allocation7 + $0x148] sm:$0xff]
          %v3279 = vld [vmem:[#allocation7 + $0x150] sm:$0xff]
          %v3280 = vld [vmem:[#allocation7 + $0x158] sm:$0xff]
          %v3281 = vld [vmem:[#allocation7 + $0x160] sm:$0xff]
          %v3282 = vld [vmem:[#allocation7 + $0x168] sm:$0xff]
          %v3283 = vld [vmem:[#allocation7 + $0x170] sm:$0xff]
          %v3284 = vld [vmem:[#allocation7 + $0x178] sm:$0xff]
          %v3285 = vld [vmem:[#allocation7 + $0x180] sm:$0xff]
          %v3286 = vld [vmem:[#allocation7 + $0x188] sm:$0xff]
          %v3287 = vld [vmem:[#allocation7 + $0x190] sm:$0xff]
          %v3288 = vld [vmem:[#allocation7 + $0x198] sm:$0xff]
          %v3289 = vld [vmem:[#allocation7 + $0x1a0] sm:$0xff]
          %v3290 = vld [vmem:[#allocation7 + $0x1a8] sm:$0xff]
          %v3291 = vld [vmem:[#allocation7 + $0x1b0] sm:$0xff]
          %v3292 = vld [vmem:[#allocation7 + $0x1b8] sm:$0xff]
          %v3293 = vld [vmem:[#allocation7 + $0x1c0] sm:$0xff]
          %v3294 = vld [vmem:[#allocation7 + $0x1c8] sm:$0xff]
          %v3295 = vld [vmem:[#allocation7 + $0x1d0] sm:$0xff]
          %v3296 = vld [vmem:[#allocation7 + $0x1d8] sm:$0xff]
          %v3297 = vld [vmem:[#allocation7 + $0x1e0] sm:$0xff]
          %v3298 = vld [vmem:[#allocation7 + $0x1e8] sm:$0xff]
          %v3299 = vld [vmem:[#allocation7 + $0x1f0] sm:$0xff]
          %v3300 = vld [vmem:[#allocation7 + $0x1f8] sm:$0xff]
          %v3301 = vld [vmem:[%s10] sm:$0x3]
          %v3366 = vunpack.c.l.b16 %v3237
          %v3367 = vunpack.c.h.b16 %v3237
          %v3368 = vunpack.c.l.b16 %v3238
          %v3369 = vunpack.c.h.b16 %v3238
          %v3370 = vunpack.c.l.b16 %v3239
          %v3371 = vunpack.c.h.b16 %v3239
          %v3372 = vunpack.c.l.b16 %v3240
          %v3373 = vunpack.c.h.b16 %v3240
          %v3374 = vunpack.c.l.b16 %v3241
          %v3375 = vunpack.c.h.b16 %v3241
          %v3376 = vunpack.c.l.b16 %v3242
          %v3377 = vunpack.c.h.b16 %v3242
          %v3378 = vunpack.c.l.b16 %v3243
          %v3379 = vunpack.c.h.b16 %v3243
          %v3380 = vunpack.c.l.b16 %v3244
          %v3381 = vunpack.c.h.b16 %v3244
          %v3382 = vunpack.c.l.b16 %v3245
          %v3383 = vunpack.c.h.b16 %v3245
          %v3384 = vunpack.c.l.b16 %v3246
          %v3385 = vunpack.c.h.b16 %v3246
          %v3386 = vunpack.c.l.b16 %v3247
          %v3387 = vunpack.c.h.b16 %v3247
          %v3388 = vunpack.c.l.b16 %v3248
          %v3389 = vunpack.c.h.b16 %v3248
          %v3390 = vunpack.c.l.b16 %v3249
          %v3391 = vunpack.c.h.b16 %v3249
          %v3392 = vunpack.c.l.b16 %v3250
          %v3393 = vunpack.c.h.b16 %v3250
          %v3394 = vunpack.c.l.b16 %v3251
          %v3395 = vunpack.c.h.b16 %v3251
          %v3396 = vunpack.c.l.b16 %v3252
          %v3397 = vunpack.c.h.b16 %v3252
          %v3398 = vunpack.c.l.b16 %v3253
          %v3399 = vunpack.c.h.b16 %v3253
          %v3400 = vunpack.c.l.b16 %v3254
          %v3401 = vunpack.c.h.b16 %v3254
          %v3402 = vunpack.c.l.b16 %v3255
          %v3403 = vunpack.c.h.b16 %v3255
          %v3404 = vunpack.c.l.b16 %v3256
          %v3405 = vunpack.c.h.b16 %v3256
          %v3406 = vunpack.c.l.b16 %v3257
          %v3407 = vunpack.c.h.b16 %v3257
          %v3408 = vunpack.c.l.b16 %v3258
          %v3409 = vunpack.c.h.b16 %v3258
          %v3410 = vunpack.c.l.b16 %v3259
          %v3411 = vunpack.c.h.b16 %v3259
          %v3412 = vunpack.c.l.b16 %v3260
          %v3413 = vunpack.c.h.b16 %v3260
          %v3414 = vunpack.c.l.b16 %v3261
          %v3415 = vunpack.c.h.b16 %v3261
          %v3416 = vunpack.c.l.b16 %v3262
          %v3417 = vunpack.c.h.b16 %v3262
          %v3418 = vunpack.c.l.b16 %v3263
          %v3419 = vunpack.c.h.b16 %v3263
          %v3420 = vunpack.c.l.b16 %v3264
          %v3421 = vunpack.c.h.b16 %v3264
          %v3422 = vunpack.c.l.b16 %v3265
          %v3423 = vunpack.c.h.b16 %v3265
          %v3424 = vunpack.c.l.b16 %v3266
          %v3425 = vunpack.c.h.b16 %v3266
          %v3426 = vunpack.c.l.b16 %v3267
          %v3427 = vunpack.c.h.b16 %v3267
          %v3428 = vunpack.c.l.b16 %v3268
          %v3429 = vunpack.c.h.b16 %v3268
          %v3430 = vunpack.c.l.b16 %v3269
          %v3431 = vunpack.c.h.b16 %v3269
          %v3432 = vunpack.c.l.b16 %v3270
          %v3433 = vunpack.c.h.b16 %v3270
          %v3434 = vunpack.c.l.b16 %v3271
          %v3435 = vunpack.c.h.b16 %v3271
          %v3436 = vunpack.c.l.b16 %v3272
          %v3437 = vunpack.c.h.b16 %v3272
          %v3438 = vunpack.c.l.b16 %v3273
          %v3439 = vunpack.c.h.b16 %v3273
          %v3440 = vunpack.c.l.b16 %v3274
          %v3441 = vunpack.c.h.b16 %v3274
          %v3442 = vunpack.c.l.b16 %v3275
          %v3443 = vunpack.c.h.b16 %v3275
          %v3444 = vunpack.c.l.b16 %v3276
          %v3445 = vunpack.c.h.b16 %v3276
          %v3446 = vunpack.c.l.b16 %v3277
          %v3447 = vunpack.c.h.b16 %v3277
          %v3448 = vunpack.c.l.b16 %v3278
          %v3449 = vunpack.c.h.b16 %v3278
          %v3450 = vunpack.c.l.b16 %v3279
          %v3451 = vunpack.c.h.b16 %v3279
          %v3452 = vunpack.c.l.b16 %v3280
          %v3453 = vunpack.c.h.b16 %v3280
          %v3454 = vunpack.c.l.b16 %v3281
          %v3455 = vunpack.c.h.b16 %v3281
          %v3456 = vunpack.c.l.b16 %v3282
          %v3457 = vunpack.c.h.b16 %v3282
          %v3458 = vunpack.c.l.b16 %v3283
          %v3459 = vunpack.c.h.b16 %v3283
          %v3460 = vunpack.c.l.b16 %v3284
          %v3461 = vunpack.c.h.b16 %v3284
          %v3462 = vunpack.c.l.b16 %v3285
          %v3463 = vunpack.c.h.b16 %v3285
          %v3464 = vunpack.c.l.b16 %v3286
          %v3465 = vunpack.c.h.b16 %v3286
          %v3466 = vunpack.c.l.b16 %v3287
          %v3467 = vunpack.c.h.b16 %v3287
          %v3468 = vunpack.c.l.b16 %v3288
          %v3469 = vunpack.c.h.b16 %v3288
          %v3470 = vunpack.c.l.b16 %v3289
          %v3471 = vunpack.c.h.b16 %v3289
          %v3472 = vunpack.c.l.b16 %v3290
          %v3473 = vunpack.c.h.b16 %v3290
          %v3474 = vunpack.c.l.b16 %v3291
          %v3475 = vunpack.c.h.b16 %v3291
          %v3476 = vunpack.c.l.b16 %v3292
          %v3477 = vunpack.c.h.b16 %v3292
          %v3478 = vunpack.c.l.b16 %v3293
          %v3479 = vunpack.c.h.b16 %v3293
          %v3480 = vunpack.c.l.b16 %v3294
          %v3481 = vunpack.c.h.b16 %v3294
          %v3482 = vunpack.c.l.b16 %v3295
          %v3483 = vunpack.c.h.b16 %v3295
          %v3484 = vunpack.c.l.b16 %v3296
          %v3485 = vunpack.c.h.b16 %v3296
          %v3486 = vunpack.c.l.b16 %v3297
          %v3487 = vunpack.c.h.b16 %v3297
          %v3488 = vunpack.c.l.b16 %v3298
          %v3489 = vunpack.c.h.b16 %v3298
          %v3490 = vunpack.c.l.b16 %v3299
          %v3491 = vunpack.c.h.b16 %v3299
          %v3492 = vunpack.c.l.b16 %v3300
          %v3493 = vunpack.c.h.b16 %v3300
          %v3494 = vpack.c.b16 %v3368, %v3366
          %v3495 = vpack.c.b16 %v3369, %v3367
          %v3496 = vpack.c.b16 %v3372, %v3370
          %v3497 = vpack.c.b16 %v3373, %v3371
          %v3498 = vpack.c.b16 %v3376, %v3374
          %v3499 = vpack.c.b16 %v3377, %v3375
          %v3500 = vpack.c.b16 %v3380, %v3378
          %v3501 = vpack.c.b16 %v3381, %v3379
          %v3502 = vpack.c.b16 %v3384, %v3382
          %v3503 = vpack.c.b16 %v3385, %v3383
          %v3504 = vpack.c.b16 %v3388, %v3386
          %v3505 = vpack.c.b16 %v3389, %v3387
          %v3506 = vpack.c.b16 %v3392, %v3390
          %v3507 = vpack.c.b16 %v3393, %v3391
          %v3508 = vpack.c.b16 %v3396, %v3394
          %v3509 = vpack.c.b16 %v3397, %v3395
          %v3510 = vpack.c.b16 %v3400, %v3398
          %v3511 = vpack.c.b16 %v3401, %v3399
          %v3512 = vpack.c.b16 %v3404, %v3402
          %v3513 = vpack.c.b16 %v3405, %v3403
          %v3514 = vpack.c.b16 %v3408, %v3406
          %v3515 = vpack.c.b16 %v3409, %v3407
          %v3516 = vpack.c.b16 %v3412, %v3410
          %v3517 = vpack.c.b16 %v3413, %v3411
          %v3518 = vpack.c.b16 %v3416, %v3414
          %v3519 = vpack.c.b16 %v3417, %v3415
          %v3520 = vpack.c.b16 %v3420, %v3418
          %v3521 = vpack.c.b16 %v3421, %v3419
          %v3522 = vpack.c.b16 %v3424, %v3422
          %v3523 = vpack.c.b16 %v3425, %v3423
          %v3524 = vpack.c.b16 %v3428, %v3426
          %v3525 = vpack.c.b16 %v3429, %v3427
          %v3526 = vpack.c.b16 %v3432, %v3430
          %v3527 = vpack.c.b16 %v3433, %v3431
          %v3528 = vpack.c.b16 %v3436, %v3434
          %v3529 = vpack.c.b16 %v3437, %v3435
          %v3530 = vpack.c.b16 %v3440, %v3438
          %v3531 = vpack.c.b16 %v3441, %v3439
          %v3532 = vpack.c.b16 %v3444, %v3442
          %v3533 = vpack.c.b16 %v3445, %v3443
          %v3534 = vpack.c.b16 %v3448, %v3446
          %v3535 = vpack.c.b16 %v3449, %v3447
          %v3536 = vpack.c.b16 %v3452, %v3450
          %v3537 = vpack.c.b16 %v3453, %v3451
          %v3538 = vpack.c.b16 %v3456, %v3454
          %v3539 = vpack.c.b16 %v3457, %v3455
          %v3540 = vpack.c.b16 %v3460, %v3458
          %v3541 = vpack.c.b16 %v3461, %v3459
          %v3542 = vpack.c.b16 %v3464, %v3462
          %v3543 = vpack.c.b16 %v3465, %v3463
          %v3544 = vpack.c.b16 %v3468, %v3466
          %v3545 = vpack.c.b16 %v3469, %v3467
          %v3546 = vpack.c.b16 %v3472, %v3470
          %v3547 = vpack.c.b16 %v3473, %v3471
          %v3548 = vpack.c.b16 %v3476, %v3474
          %v3549 = vpack.c.b16 %v3477, %v3475
          %v3550 = vpack.c.b16 %v3480, %v3478
          %v3551 = vpack.c.b16 %v3481, %v3479
          %v3552 = vpack.c.b16 %v3484, %v3482
          %v3553 = vpack.c.b16 %v3485, %v3483
          %v3554 = vpack.c.b16 %v3488, %v3486
          %v3555 = vpack.c.b16 %v3489, %v3487
          %v3556 = vpack.c.b16 %v3492, %v3490
          %v3557 = vpack.c.b16 %v3493, %v3491
          %v3623 = vperm.slane %v3301, 0
          %v3624 = vperm.slane %v3301, 1
          %3627 = vmatpush.bf16.msra.mxu0 %v3508
          %3628 = vmatpush.bf16.msra.mxu0 %v3506
          %3629 = vmatpush.bf16.msra.mxu0 %v3504
          %3630 = vmatpush.bf16.msra.mxu0 %v3502
          %3631 = vmatpush.bf16.msra.mxu0 %v3500
          %3632 = vmatpush.bf16.msra.mxu0 %v3498
          %3633 = vmatpush.bf16.msra.mxu0 %v3496
          %3634 = vmatpush.bf16.msra.mxu0 %v3494
          %3635 = vmatmul.bf16.gmra.mxu0 %v3233
          %v3636 = vpop.f32.mrf.mxu0
          %v3637 = vadd.f32 %v3623, %v3636
          %v3638 = vpop.f32.mrf.mxu0
          %3639 = vdwg.mxu0
          %3640 = vmatpush.bf16.msra.mxu0 %v3524
          %3641 = vmatpush.bf16.msra.mxu0 %v3522
          %3642 = vmatpush.bf16.msra.mxu0 %v3520
          %3643 = vmatpush.bf16.msra.mxu0 %v3518
          %3644 = vmatpush.bf16.msra.mxu0 %v3516
          %3645 = vmatpush.bf16.msra.mxu0 %v3514
          %3646 = vmatpush.bf16.msra.mxu0 %v3512
          %3647 = vmatpush.bf16.msra.mxu0 %v3510
          %3648 = vmatmul.bf16.gmra.mxu0 %v3234
          %v3649 = vpop.f32.mrf.mxu0
          %v3650 = vadd.f32 %v3637, %v3649
          %v3651 = vpop.f32.mrf.mxu0
          %3652 = vdwg.mxu0
          %3653 = vmatpush.bf16.msra.mxu0 %v3540
          %3654 = vmatpush.bf16.msra.mxu0 %v3538
          %3655 = vmatpush.bf16.msra.mxu0 %v3536
          %3656 = vmatpush.bf16.msra.mxu0 %v3534
          %3657 = vmatpush.bf16.msra.mxu0 %v3532
          %3658 = vmatpush.bf16.msra.mxu0 %v3530
          %3659 = vmatpush.bf16.msra.mxu0 %v3528
          %3660 = vmatpush.bf16.msra.mxu0 %v3526
          %3661 = vmatmul.bf16.gmra.mxu0 %v3235
          %v3662 = vpop.f32.mrf.mxu0
          %v3663 = vadd.f32 %v3650, %v3662
          %v3664 = vpop.f32.mrf.mxu0
          %3665 = vdwg.mxu0
          %3666 = vmatpush.bf16.msra.mxu0 %v3556
          %3667 = vmatpush.bf16.msra.mxu0 %v3554
          %3668 = vmatpush.bf16.msra.mxu0 %v3552
          %3669 = vmatpush.bf16.msra.mxu0 %v3550
          %3670 = vmatpush.bf16.msra.mxu0 %v3548
          %3671 = vmatpush.bf16.msra.mxu0 %v3546
          %3672 = vmatpush.bf16.msra.mxu0 %v3544
          %3673 = vmatpush.bf16.msra.mxu0 %v3542
          %3674 = vmatmul.bf16.gmra.mxu0 %v3236
          %v3675 = vpop.f32.mrf.mxu0
          %v3676 = vadd.f32 %v3663, %v3675
          %v3677 = vpop.f32.mrf.mxu0
          %3678 = vdwg.mxu0
          %3679 = vmatpush.bf16.msra.mxu0 %v3509
          %3680 = vmatpush.bf16.msra.mxu0 %v3507
          %3681 = vmatpush.bf16.msra.mxu0 %v3505
          %3682 = vmatpush.bf16.msra.mxu0 %v3503
          %3683 = vmatpush.bf16.msra.mxu0 %v3501
          %3684 = vmatpush.bf16.msra.mxu0 %v3499
          %3685 = vmatpush.bf16.msra.mxu0 %v3497
          %3686 = vmatpush.bf16.msra.mxu0 %v3495
          %3687 = vmatmul.bf16.gmra.mxu0 %v3233
          %v3688 = vpop.f32.mrf.mxu0
          %v3689 = vadd.f32 %v3624, %v3688
          %v3690 = vpop.f32.mrf.mxu0
          %3691 = vdwg.mxu0
          %3692 = vmatpush.bf16.msra.mxu0 %v3525
          %3693 = vmatpush.bf16.msra.mxu0 %v3523
          %3694 = vmatpush.bf16.msra.mxu0 %v3521
          %3695 = vmatpush.bf16.msra.mxu0 %v3519
          %3696 = vmatpush.bf16.msra.mxu0 %v3517
          %3697 = vmatpush.bf16.msra.mxu0 %v3515
          %3698 = vmatpush.bf16.msra.mxu0 %v3513
          %3699 = vmatpush.bf16.msra.mxu0 %v3511
          %3700 = vmatmul.bf16.gmra.mxu0 %v3234
          %v3701 = vpop.f32.mrf.mxu0
          %v3702 = vadd.f32 %v3689, %v3701
          %v3703 = vpop.f32.mrf.mxu0
          %3704 = vdwg.mxu0
          %3705 = vmatpush.bf16.msra.mxu0 %v3541
          %3706 = vmatpush.bf16.msra.mxu0 %v3539
          %3707 = vmatpush.bf16.msra.mxu0 %v3537
          %3708 = vmatpush.bf16.msra.mxu0 %v3535
          %3709 = vmatpush.bf16.msra.mxu0 %v3533
          %3710 = vmatpush.bf16.msra.mxu0 %v3531
          %3711 = vmatpush.bf16.msra.mxu0 %v3529
          %3712 = vmatpush.bf16.msra.mxu0 %v3527
          %3713 = vmatmul.bf16.gmra.mxu0 %v3235
          %v3714 = vpop.f32.mrf.mxu0
          %v3715 = vadd.f32 %v3702, %v3714
          %v3716 = vpop.f32.mrf.mxu0
          %3717 = vdwg.mxu0
          %3718 = vmatpush.bf16.msra.mxu0 %v3557
          %3719 = vmatpush.bf16.msra.mxu0 %v3555
          %3720 = vmatpush.bf16.msra.mxu0 %v3553
          %3721 = vmatpush.bf16.msra.mxu0 %v3551
          %3722 = vmatpush.bf16.msra.mxu0 %v3549
          %3723 = vmatpush.bf16.msra.mxu0 %v3547
          %3724 = vmatpush.bf16.msra.mxu0 %v3545
          %3725 = vmatpush.bf16.msra.mxu0 %v3543
          %3726 = vmatmul.bf16.gmra.mxu0 %v3236
          %v3727 = vpop.f32.mrf.mxu0
          %v3728 = vadd.f32 %v3715, %v3727
          %v3729 = vpop.f32.mrf.mxu0
          %3730 = vdwg.mxu0
          %v3731 = vmax.f32 %v3676, 0.0
          %v3732 = vmax.f32 %v3728, 0.0
          %v3733 = vpack.c.bf16 %v3731, %v3731
          %v3734 = vpack.c.bf16 %v3732, %v3732
          %v3735 = vld [vmem:[%s11] sm:$0xf]
          %v3736 = vld [vmem:[%s11 + $0x4] sm:$0xf]
          %v3737 = vld [vmem:[%s11 + $0x8] sm:$0xf]
          %v3738 = vld [vmem:[%s11 + $0xc] sm:$0xf]
          %v3739 = vld [vmem:[%s11 + $0x10] sm:$0xf]
          %v3740 = vld [vmem:[%s11 + $0x14] sm:$0xf]
          %v3741 = vld [vmem:[%s11 + $0x18] sm:$0xf]
          %v3742 = vld [vmem:[%s11 + $0x1c] sm:$0xf]
          %v3743 = vld [vmem:[%s11 + $0x20] sm:$0xf]
          %v3744 = vld [vmem:[%s11 + $0x24] sm:$0xf]
          %v3745 = vld [vmem:[%s11 + $0x28] sm:$0xf]
          %v3746 = vld [vmem:[%s11 + $0x2c] sm:$0xf]
          %v3747 = vld [vmem:[%s11 + $0x30] sm:$0xf]
          %v3748 = vld [vmem:[%s11 + $0x34] sm:$0xf]
          %v3749 = vld [vmem:[%s11 + $0x38] sm:$0xf]
          %v3750 = vld [vmem:[%s11 + $0x3c] sm:$0xf]
          %v3751 = vld [vmem:[%s11 + $0x40] sm:$0xf]
          %v3752 = vld [vmem:[%s11 + $0x44] sm:$0xf]
          %v3753 = vld [vmem:[%s11 + $0x48] sm:$0xf]
          %v3754 = vld [vmem:[%s11 + $0x4c] sm:$0xf]
          %v3755 = vld [vmem:[%s11 + $0x50] sm:$0xf]
          %v3756 = vld [vmem:[%s11 + $0x54] sm:$0xf]
          %v3757 = vld [vmem:[%s11 + $0x58] sm:$0xf]
          %v3758 = vld [vmem:[%s11 + $0x5c] sm:$0xf]
          %v3759 = vld [vmem:[%s11 + $0x60] sm:$0xf]
          %v3760 = vld [vmem:[%s11 + $0x64] sm:$0xf]
          %v3761 = vld [vmem:[%s11 + $0x68] sm:$0xf]
          %v3762 = vld [vmem:[%s11 + $0x6c] sm:$0xf]
          %v3763 = vld [vmem:[%s11 + $0x70] sm:$0xf]
          %v3764 = vld [vmem:[%s11 + $0x74] sm:$0xf]
          %v3765 = vld [vmem:[%s11 + $0x78] sm:$0xf]
          %v3766 = vld [vmem:[%s11 + $0x7c] sm:$0xf]
          %v3767 = vld [vmem:[%s12] sm:$0x1]
          %v3800 = vunpack.c.l.b16 %v3735
          %v3801 = vunpack.c.l.b16 %v3736
          %v3802 = vunpack.c.l.b16 %v3737
          %v3803 = vunpack.c.l.b16 %v3738
          %v3804 = vunpack.c.l.b16 %v3739
          %v3805 = vunpack.c.l.b16 %v3740
          %v3806 = vunpack.c.l.b16 %v3741
          %v3807 = vunpack.c.l.b16 %v3742
          %v3808 = vunpack.c.l.b16 %v3743
          %v3809 = vunpack.c.l.b16 %v3744
          %v3810 = vunpack.c.l.b16 %v3745
          %v3811 = vunpack.c.l.b16 %v3746
          %v3812 = vunpack.c.l.b16 %v3747
          %v3813 = vunpack.c.l.b16 %v3748
          %v3814 = vunpack.c.l.b16 %v3749
          %v3815 = vunpack.c.l.b16 %v3750
          %v3816 = vunpack.c.l.b16 %v3751
          %v3817 = vunpack.c.l.b16 %v3752
          %v3818 = vunpack.c.l.b16 %v3753
          %v3819 = vunpack.c.l.b16 %v3754
          %v3820 = vunpack.c.l.b16 %v3755
          %v3821 = vunpack.c.l.b16 %v3756
          %v3822 = vunpack.c.l.b16 %v3757
          %v3823 = vunpack.c.l.b16 %v3758
          %v3824 = vunpack.c.l.b16 %v3759
          %v3825 = vunpack.c.l.b16 %v3760
          %v3826 = vunpack.c.l.b16 %v3761
          %v3827 = vunpack.c.l.b16 %v3762
          %v3828 = vunpack.c.l.b16 %v3763
          %v3829 = vunpack.c.l.b16 %v3764
          %v3830 = vunpack.c.l.b16 %v3765
          %v3831 = vunpack.c.l.b16 %v3766
          %v3832 = vpack.c.b16 %v3801, %v3800
          %v3833 = vpack.c.b16 %v3803, %v3802
          %v3834 = vpack.c.b16 %v3805, %v3804
          %v3835 = vpack.c.b16 %v3807, %v3806
          %v3836 = vpack.c.b16 %v3809, %v3808
          %v3837 = vpack.c.b16 %v3811, %v3810
          %v3838 = vpack.c.b16 %v3813, %v3812
          %v3839 = vpack.c.b16 %v3815, %v3814
          %v3840 = vpack.c.b16 %v3817, %v3816
          %v3841 = vpack.c.b16 %v3819, %v3818
          %v3842 = vpack.c.b16 %v3821, %v3820
          %v3843 = vpack.c.b16 %v3823, %v3822
          %v3844 = vpack.c.b16 %v3825, %v3824
          %v3845 = vpack.c.b16 %v3827, %v3826
          %v3846 = vpack.c.b16 %v3829, %v3828
          %v3847 = vpack.c.b16 %v3831, %v3830
          %3864 = vmatpush.bf16.msra.mxu0 %v3839
          %3865 = vmatpush.bf16.msra.mxu0 %v3838
          %3866 = vmatpush.bf16.msra.mxu0 %v3837
          %3867 = vmatpush.bf16.msra.mxu0 %v3836
          %3868 = vmatpush.bf16.msra.mxu0 %v3835
          %3869 = vmatpush.bf16.msra.mxu0 %v3834
          %3870 = vmatpush.bf16.msra.mxu0 %v3833
          %3871 = vmatpush.bf16.msra.mxu0 %v3832
          %3872 = vmatmul.bf16.gmra.mxu0 %v3733
          %v3873 = vpop.f32.mrf.mxu0
          %v3874 = vadd.f32 %v3767, %v3873
          %v3875 = vpop.f32.mrf.mxu0
          %3876 = vdwg.mxu0
          %3877 = vmatpush.bf16.msra.mxu0 %v3847
          %3878 = vmatpush.bf16.msra.mxu0 %v3846
          %3879 = vmatpush.bf16.msra.mxu0 %v3845
          %3880 = vmatpush.bf16.msra.mxu0 %v3844
          %3881 = vmatpush.bf16.msra.mxu0 %v3843
          %3882 = vmatpush.bf16.msra.mxu0 %v3842
          %3883 = vmatpush.bf16.msra.mxu0 %v3841
          %3884 = vmatpush.bf16.msra.mxu0 %v3840
          %3885 = vmatmul.bf16.gmra.mxu0 %v3734
          %v3886 = vpop.f32.mrf.mxu0
          %v3887 = vadd.f32 %v3874, %v3886
          %v3888 = vpop.f32.mrf.mxu0
          %3889 = vdwg.mxu0
          %vm3890 = vcmask 122880
          %3891 = vst.msk [vmem:[%s514] sm:$0x1] %vm3890, %v3887
        $region92: #{tnet_forward.1} parent=71 // pred_fallthru
          _
        %p3892 = scmp.lt.s32.totalorder %s30, 1
        %s3893 = scalar_select %p3892, %s30, 1
        %s3894 = scalar_lea.vmem %s13, %s3893
        // Predicated region
        $region93: #{tnet_forward.1} parent=71 // pred_check
          %p3895 = pneg %p336
        $region94: #{tnet_forward.1} parent=71 // pred_check_branch
          %3897 = sbr.rel (%p3895) target = $region96
        $region95: #{tnet_forward.1} parent=71 // pred_region
          _
        $region96: #{tnet_forward.1} parent=71 // pred_fallthru
          _
      $region72: #{tnet_forward.1} parent=5 // pred_fallthru
        _
      %p3898 = scmp.le.s32.totalorder 2, %s21
      // Predicated region
      $region97: #{tnet_forward.1} parent=5 // pred_check
        %p3899 = pneg %p3898
      $region98: #{tnet_forward.1} parent=5 // pred_check_branch
        %3901 = sbr.rel (%p3899) target = $region100
      $region99: #{tnet_forward.1} parent=5 // pred_region
        %s3902 = ssub.s32 %s21, 2
        // Predicated region
        $region101: #{tnet_forward.1} parent=99 // pred_check
          %p3903 = pneg %p342
        $region102: #{tnet_forward.1} parent=99 // pred_check_branch
          %3905 = sbr.rel (%p3903) target = $region104
        $region103: #{tnet_forward.1} parent=99 // pred_region
          %p3906 = scmp.lt.s32.totalorder %s32, 1
          %s3907 = scalar_select %p3906, %s32, 1
          %s3908 = scalar_lea.vmem %s13, %s3907
        $region104: #{tnet_forward.1} parent=99 // pred_fallthru
          _
      $region100: #{tnet_forward.1} parent=5 // pred_fallthru
        _
    $region6: #{tnet_forward.1} parent=1 // loop_footer
      %s25 = sadd.s32 1, %s21
    $region7: #{tnet_forward.1} parent=1 // loop_footer_branch
      %20 = sbr.rel target = $region3
    $region8: #{tnet_forward.1} parent=1 // loop_exit
      _
    %3909 = vsyncpa [#allocation4], 1
    %s3910 = scalar_lea.sflag [#allocation4], 1
    %3911 = vsyncpa %s3910, 1
    %3912 = vsyncpa [#allocation6], 1

</llo_original>
